<compile_context>
chip_gen: v5e
topology: v5e:2x2
jax: 0.10.0
libtpu: 0.0.40
codegen_flags: <defaults>
</compile_context>

<pallas_src>
import jax
import jax.numpy as jnp
from jax.experimental import pallas as pl
from jax.experimental.pallas import tpu as pltpu

LANES = 128


def _round_up(x, m):
    return (x + m - 1) // m * m


def _tiles(M, max_tile):
    """Pick (tile, m_pad): tile is a multiple of 8, m_pad = tile * n_tiles,
    minimizing padded-row waste for row count M."""
    m8 = _round_up(M, 8)
    if m8 <= max_tile:
        return m8, m8
    n = -(-M // max_tile)                    # number of tiles
    tile = _round_up(-(-M // n), 8)          # smallest 8-aligned tile covering M in n tiles
    return tile, tile * n


# ---------------------------------------------------------------------------
# Pallas kernels
# ---------------------------------------------------------------------------
def _conv_pool_kernel(a_ref, b_ref, c_ref, d_ref, w_ref, bias_ref, o_ref):
    """Fused conv (as matmul) + bias + ReLU + 2x2 maxpool for one M-tile.

    a/b/c/d: im2col matrices for the four 2x2-window corner positions.
    """
    w = w_ref[...]
    ya = jnp.dot(a_ref[...], w, preferred_element_type=jnp.float32)
    yb = jnp.dot(b_ref[...], w, preferred_element_type=jnp.float32)
    yc = jnp.dot(c_ref[...], w, preferred_element_type=jnp.float32)
    yd = jnp.dot(d_ref[...], w, preferred_element_type=jnp.float32)
    m = jnp.maximum(jnp.maximum(ya, yb), jnp.maximum(yc, yd)) + bias_ref[...]
    o_ref[...] = jnp.maximum(m, 0.0).astype(o_ref.dtype)


def _fc_fused_kernel(x_ref, w1_ref, b1_ref, w2_ref, b2_ref, w3_ref, b3_ref,
                     o_ref):
    """fc1 + ReLU + fc2 + ReLU + fc3, all weights resident in VMEM."""
    h = jnp.dot(x_ref[...], w1_ref[...],
                preferred_element_type=jnp.float32) + b1_ref[...]
    h = jnp.maximum(h, 0.0)
    h = jnp.dot(h, w2_ref[...],
                preferred_element_type=jnp.float32) + b2_ref[...]
    h = jnp.maximum(h, 0.0)
    h = jnp.dot(h, w3_ref[...],
                preferred_element_type=jnp.float32) + b3_ref[...]
    o_ref[...] = h.astype(o_ref.dtype)


# ---------------------------------------------------------------------------
# Wrappers
# ---------------------------------------------------------------------------
def _pool_corner_cols(x, k, r, s, ohp, owp):
    """im2col for conv output positions (2i+r, 2j+s), x:(N,H,W,C) NHWC.

    Returns (N*ohp*owp, k*k*C) with patch columns ordered (kh, kw, c),
    rows ordered (n, i, j).
    """
    N, H, W, C = x.shape
    slabs = []
    for kh in range(k):
        for kw in range(k):
            h0 = r + kh
            w0 = s + kw
            win = x[:, h0:h0 + 2 * ohp - 1:2, w0:w0 + 2 * owp - 1:2, :]
            slabs.append(win)                      # (N, ohp, owp, C)
    cols = jnp.stack(slabs, axis=3)                # (N, ohp, owp, k*k, C)
    return cols.reshape(N * ohp * owp, k * k * C)


def conv_relu_pool(x_nhwc, wmat, bias, *, k, tile_m=256):
    """Valid conv (stride 1) + bias + ReLU + 2x2/2 maxpool, fused.

    x_nhwc: (N,H,W,C); wmat: (K_pad, 128) pre-padded (kh,kw,c)-ordered weight;
    bias: (1, 128).  Returns (N, OHp, OWp, 128) with padded lanes == 0.
    """
    N, H, W, C = x_nhwc.shape
    oh, ow = H - k + 1, W - k + 1
    ohp, owp = oh // 2, ow // 2
    K = k * k * C
    K_pad = wmat.shape[0]
    M = N * ohp * owp

    corners = [_pool_corner_cols(x_nhwc, k, r, s, ohp, owp)
               for (r, s) in ((0, 0), (0, 1), (1, 0), (1, 1))]

    tile, m_pad = _tiles(M, tile_m)
    corners = [jnp.pad(c, ((0, m_pad - M), (0, K_pad - K))) for c in corners]

    out = pl.pallas_call(
        _conv_pool_kernel,
        out_shape=jax.ShapeDtypeStruct((m_pad, LANES), jnp.float32),
        grid=(m_pad // tile,),
        in_specs=[pl.BlockSpec((tile, K_pad), lambda i: (i, 0))] * 4 + [
            pl.BlockSpec((K_pad, LANES), lambda i: (0, 0)),
            pl.BlockSpec((1, LANES), lambda i: (0, 0)),
        ],
        out_specs=pl.BlockSpec((tile, LANES), lambda i: (i, 0)),
        compiler_params=pltpu.CompilerParams(
            dimension_semantics=("parallel",)),
    )(*corners, wmat, bias)
    return out[:M].reshape(N, ohp, owp, LANES)


def fc_fused(x, w1, b1, w2, b2, w3, b3, *, n_out=10, tile_m=256):
    """x:(M,K) -> fc1+ReLU+fc2+ReLU+fc3 in one kernel. Returns (M, n_out)."""
    M, K = x.shape
    tile, m_pad = _tiles(M, tile_m)
    xp = jnp.pad(x, ((0, m_pad - M), (0, 0)))

    out = pl.pallas_call(
        _fc_fused_kernel,
        out_shape=jax.ShapeDtypeStruct((m_pad, LANES), jnp.float32),
        grid=(m_pad // tile,),
        in_specs=[
            pl.BlockSpec((tile, K), lambda i: (i, 0)),
            pl.BlockSpec((K, LANES), lambda i: (0, 0)),
            pl.BlockSpec((1, LANES), lambda i: (0, 0)),
            pl.BlockSpec((LANES, LANES), lambda i: (0, 0)),
            pl.BlockSpec((1, LANES), lambda i: (0, 0)),
            pl.BlockSpec((LANES, LANES), lambda i: (0, 0)),
            pl.BlockSpec((1, LANES), lambda i: (0, 0)),
        ],
        out_specs=pl.BlockSpec((tile, LANES), lambda i: (i, 0)),
        compiler_params=pltpu.CompilerParams(
            dimension_semantics=("parallel",)),
    )(xp, w1, b1, w2, b2, w3, b3)
    return out[:M, :n_out]


# ---------------------------------------------------------------------------
# Parameter init (PyTorch-style) and one-time re-layout (outside jit)
# ---------------------------------------------------------------------------
def init_params(key):
    def uni(k, shape, fan_in):
        bound = 1.0 / jnp.sqrt(jnp.float32(fan_in))
        return jax.random.uniform(k, shape, jnp.float32, -bound, bound)

    ks = jax.random.split(key, 10)
    return {
        "conv1_w": uni(ks[0], (16, 3, 5, 5), 3 * 5 * 5),
        "conv1_b": uni(ks[1], (16,), 3 * 5 * 5),
        "conv2_w": uni(ks[2], (32, 16, 5, 5), 16 * 5 * 5),
        "conv2_b": uni(ks[3], (32,), 16 * 5 * 5),
        "fc1_w": uni(ks[4], (120, 32 * 5 * 5), 32 * 5 * 5),
        "fc1_b": uni(ks[5], (120,), 32 * 5 * 5),
        "fc2_w": uni(ks[6], (84, 120), 120),
        "fc2_b": uni(ks[7], (84,), 120),
        "fc3_w": uni(ks[8], (10, 84), 84),
        "fc3_b": uni(ks[9], (10,), 84),
    }


def prepare_params(p):
    """Transpose / re-order / pad weights once, outside jit, to lane-dense
    kernel layouts.  Padded rows/cols are zero so results are unchanged."""
    def pad2(m, rows, cols):
        return jnp.pad(m, ((0, rows - m.shape[0]), (0, cols - m.shape[1])))

    # conv weights: (OutC, InC, kh, kw) -> (kh, kw, InC, OutC) -> (K, OutC)
    c1 = p["conv1_w"].transpose(2, 3, 1, 0).reshape(75, 16)
    c2 = p["conv2_w"].transpose(2, 3, 1, 0).reshape(400, 32)

    # fc1: PyTorch flattens pooled (C=32,H=5,W=5) channel-major; our activation
    # is (H, W, C_pad=128)-major, so permute + scatter the weight rows to match
    # and pad the channel axis to 128 lanes.
    f1 = p["fc1_w"].reshape(120, 32, 5, 5).transpose(2, 3, 1, 0)  # (5,5,32,120)
    f1 = jnp.pad(f1, ((0, 0), (0, 0), (0, LANES - 32), (0, LANES - 120)))
    f1 = f1.reshape(5 * 5 * LANES, LANES)                          # (3200,128)

    return {
        "c1w": pad2(c1, 128, LANES),
        "c1b": pad2(p["conv1_b"].reshape(1, 16), 1, LANES),
        "c2w": pad2(c2, 512, LANES),
        "c2b": pad2(p["conv2_b"].reshape(1, 32), 1, LANES),
        "f1w": f1,
        "f1b": pad2(p["fc1_b"].reshape(1, 120), 1, LANES),
        "f2w": pad2(p["fc2_w"].T, LANES, LANES),
        "f2b": pad2(p["fc2_b"].reshape(1, 84), 1, LANES),
        "f3w": pad2(p["fc3_w"].T, LANES, LANES),
        "f3b": pad2(p["fc3_b"].reshape(1, 10), 1, LANES),
    }


# ---------------------------------------------------------------------------
# Full forward pass (matches LeNet.forward semantics)
# ---------------------------------------------------------------------------
def lenet_forward(w, x_nchw):
    x = jnp.transpose(x_nchw, (0, 2, 3, 1))                      # NHWC
    y1 = conv_relu_pool(x, w["c1w"], w["c1b"], k=5)              # (N,14,14,128)
    y1 = y1[..., :16]                                            # valid channels
    y2 = conv_relu_pool(y1, w["c2w"], w["c2b"], k=5)             # (N,5,5,128)
    n = x.shape[0]
    feat = y2.reshape(n, 5 * 5 * LANES)   # (N,3200); padded lanes are zero
    return fc_fused(feat, w["f1w"], w["f1b"], w["f2w"], w["f2b"],
                    w["f3w"], w["f3b"], n_out=10)                # (N,10)


# ---------------------------------------------------------------------------
# Pure-JAX reference (PyTorch semantics) for a correctness check
# ---------------------------------------------------------------------------
def ref_forward(p, x):
    dn = ("NCHW", "OIHW", "NCHW")
    hp = jax.lax.Precision.HIGHEST
    y = jax.lax.conv_general_dilated(x, p["conv1_w"], (1, 1), "VALID",
                                     dimension_numbers=dn, precision=hp)
    y = jnp.maximum(y + p["conv1_b"][None, :, None, None], 0.0)
    y = jax.lax.reduce_window(y, -jnp.inf, jax.lax.max,
                              (1, 1, 2, 2), (1, 1, 2, 2), "VALID")
    y = jax.lax.conv_general_dilated(y, p["conv2_w"], (1, 1), "VALID",
                                     dimension_numbers=dn, precision=hp)
    y = jnp.maximum(y + p["conv2_b"][None, :, None, None], 0.0)
    y = jax.lax.reduce_window(y, -jnp.inf, jax.lax.max,
                              (1, 1, 2, 2), (1, 1, 2, 2), "VALID")
    f = y.reshape(y.shape[0], -1)
    f = jnp.maximum(jnp.dot(f, p["fc1_w"].T, precision=hp) + p["fc1_b"], 0.0)
    f = jnp.maximum(jnp.dot(f, p["fc2_w"].T, precision=hp) + p["fc2_b"], 0.0)
    return jnp.dot(f, p["fc3_w"].T, precision=hp) + p["fc3_b"]


if __name__ == "__main__":
    key = jax.random.PRNGKey(0)
    pkey, xkey = jax.random.split(key)
    params = init_params(pkey)
    prepped = prepare_params(params)          # one-time re-layout, outside jit

    # Architecture (fc1 expects 32*5*5) implies 3x32x32 inputs; batch=2.
    x = jax.random.normal(xkey, (2, 3, 32, 32), jnp.float32)

    out = jax.jit(lenet_forward)(prepped, x)
    out = jax.block_until_ready(out)
    assert out.shape == (2, 10) and out.dtype == jnp.float32

    ref = jax.block_until_ready(jax.jit(ref_forward)(params, x))
    max_err = float(jnp.max(jnp.abs(out - ref)))
    assert max_err < 5e-2, f"mismatch vs reference: max |err| = {max_err}"

    print("KERNEL_OK")
</pallas_src>

<mosaic_0001>
module attributes {stable_mosaic.version = 11 : i64} {
  func.func @_conv_pool_kernel(%arg0: i32, %arg1: memref<200x128xf32, #tpu.memory_space<vmem>>, %arg2: memref<200x128xf32, #tpu.memory_space<vmem>>, %arg3: memref<200x128xf32, #tpu.memory_space<vmem>>, %arg4: memref<200x128xf32, #tpu.memory_space<vmem>>, %arg5: memref<128x128xf32, #tpu.memory_space<vmem>>, %arg6: memref<1x128xf32, #tpu.memory_space<vmem>>, %arg7: memref<200x128xf32, #tpu.memory_space<vmem>>) attributes {dimension_semantics = [#tpu.dimension_semantics<parallel>], iteration_bounds = array<i64: 2>, scalar_prefetch = 0 : i64, scratch_operands = 0 : i64, tpu.core_type = #tpu.core_type<tc>, window_params = [{transform_indices = @transform_0, window_bounds = array<i64: 200, 128>}, {transform_indices = @transform_1, window_bounds = array<i64: 200, 128>}, {transform_indices = @transform_2, window_bounds = array<i64: 200, 128>}, {transform_indices = @transform_3, window_bounds = array<i64: 200, 128>}, {pipeline_mode = #tpu.pipeline_mode<synchronous>, transform_indices = @transform_4, window_bounds = array<i64: 128, 128>}, {pipeline_mode = #tpu.pipeline_mode<synchronous>, transform_indices = @transform_5, window_bounds = array<i64: 1, 128>}, {transform_indices = @transform_6, window_bounds = array<i64: 200, 128>}]} {
    %c0 = arith.constant 0 : index
    %c0_0 = arith.constant 0 : index
    %0 = vector.load %arg5[%c0, %c0_0] : memref<128x128xf32, #tpu.memory_space<vmem>>, vector<128x128xf32>
    %c0_1 = arith.constant 0 : index
    %c0_2 = arith.constant 0 : index
    %1 = vector.load %arg1[%c0_1, %c0_2] : memref<200x128xf32, #tpu.memory_space<vmem>>, vector<200x128xf32>
    %cst = arith.constant dense<0.000000e+00> : vector<200x128xf32>
    %2 = tpu.matmul %1, %0, %cst {dimension_numbers = #tpu.dot_dimension_numbers<[1], [0], [0], [1], [0, 0, 1, 1], [], []>} : vector<200x128xf32>, vector<128x128xf32>, vector<200x128xf32> -> vector<200x128xf32>
    %c0_3 = arith.constant 0 : index
    %c0_4 = arith.constant 0 : index
    %3 = vector.load %arg2[%c0_3, %c0_4] : memref<200x128xf32, #tpu.memory_space<vmem>>, vector<200x128xf32>
    %cst_5 = arith.constant dense<0.000000e+00> : vector<200x128xf32>
    %4 = tpu.matmul %3, %0, %cst_5 {dimension_numbers = #tpu.dot_dimension_numbers<[1], [0], [0], [1], [0, 0, 1, 1], [], []>} : vector<200x128xf32>, vector<128x128xf32>, vector<200x128xf32> -> vector<200x128xf32>
    %c0_6 = arith.constant 0 : index
    %c0_7 = arith.constant 0 : index
    %5 = vector.load %arg3[%c0_6, %c0_7] : memref<200x128xf32, #tpu.memory_space<vmem>>, vector<200x128xf32>
    %cst_8 = arith.constant dense<0.000000e+00> : vector<200x128xf32>
    %6 = tpu.matmul %5, %0, %cst_8 {dimension_numbers = #tpu.dot_dimension_numbers<[1], [0], [0], [1], [0, 0, 1, 1], [], []>} : vector<200x128xf32>, vector<128x128xf32>, vector<200x128xf32> -> vector<200x128xf32>
    %c0_9 = arith.constant 0 : index
    %c0_10 = arith.constant 0 : index
    %7 = vector.load %arg4[%c0_9, %c0_10] : memref<200x128xf32, #tpu.memory_space<vmem>>, vector<200x128xf32>
    %cst_11 = arith.constant dense<0.000000e+00> : vector<200x128xf32>
    %8 = tpu.matmul %7, %0, %cst_11 {dimension_numbers = #tpu.dot_dimension_numbers<[1], [0], [0], [1], [0, 0, 1, 1], [], []>} : vector<200x128xf32>, vector<128x128xf32>, vector<200x128xf32> -> vector<200x128xf32>
    %9 = arith.maximumf %2, %4 : vector<200x128xf32>
    %10 = arith.maximumf %6, %8 : vector<200x128xf32>
    %11 = arith.maximumf %9, %10 : vector<200x128xf32>
    %c0_12 = arith.constant 0 : index
    %c0_13 = arith.constant 0 : index
    %12 = vector.load %arg6[%c0_12, %c0_13] : memref<1x128xf32, #tpu.memory_space<vmem>>, vector<1x128xf32>
    %13 = vector.broadcast %12 : vector<1x128xf32> to vector<200x128xf32>
    %14 = arith.addf %11, %13 : vector<200x128xf32>
    %cst_14 = arith.constant 0.000000e+00 : f32
    %15 = vector.broadcast %cst_14 : f32 to vector<200x128xf32>
    %16 = arith.maximumf %14, %15 : vector<200x128xf32>
    %c0_15 = arith.constant 0 : index
    %c0_16 = arith.constant 0 : index
    %17 = vector.load %arg7[%c0_15, %c0_16] : memref<200x128xf32, #tpu.memory_space<vmem>>, vector<200x128xf32>
    tpu.vector_store %arg7[%c0_15, %c0_16], %16 {strides = array<i32>} : memref<200x128xf32, #tpu.memory_space<vmem>>, vector<200x128xf32>,
    return
  }
  func.func @transform_0(%arg0: i32) -> (i32, i32) {
    %c0_i32 = arith.constant 0 : i32
    %c0_i32_0 = arith.constant 0 : i32
    return %arg0, %c0_i32 : i32, i32
  }
  func.func @transform_1(%arg0: i32) -> (i32, i32) {
    %c0_i32 = arith.constant 0 : i32
    %c0_i32_0 = arith.constant 0 : i32
    return %arg0, %c0_i32 : i32, i32
  }
  func.func @transform_2(%arg0: i32) -> (i32, i32) {
    %c0_i32 = arith.constant 0 : i32
    %c0_i32_0 = arith.constant 0 : i32
    return %arg0, %c0_i32 : i32, i32
  }
  func.func @transform_3(%arg0: i32) -> (i32, i32) {
    %c0_i32 = arith.constant 0 : i32
    %c0_i32_0 = arith.constant 0 : i32
    return %arg0, %c0_i32 : i32, i32
  }
  func.func @transform_4(%arg0: i32) -> (i32, i32) {
    %c0_i32 = arith.constant 0 : i32
    %c0_i32_0 = arith.constant 0 : i32
    %c0_i32_1 = arith.constant 0 : i32
    return %c0_i32, %c0_i32_0 : i32, i32
  }
  func.func @transform_5(%arg0: i32) -> (i32, i32) {
    %c0_i32 = arith.constant 0 : i32
    %c0_i32_0 = arith.constant 0 : i32
    %c0_i32_1 = arith.constant 0 : i32
    return %c0_i32, %c0_i32_0 : i32, i32
  }
  func.func @transform_6(%arg0: i32) -> (i32, i32) {
    %c0_i32 = arith.constant 0 : i32
    %c0_i32_0 = arith.constant 0 : i32
    return %arg0, %c0_i32 : i32, i32
  }
}

module attributes {stable_mosaic.version = 11 : i64} {
  func.func @_conv_pool_kernel(%arg0: i32, %arg1: memref<56x512xf32, #tpu.memory_space<vmem>>, %arg2: memref<56x512xf32, #tpu.memory_space<vmem>>, %arg3: memref<56x512xf32, #tpu.memory_space<vmem>>, %arg4: memref<56x512xf32, #tpu.memory_space<vmem>>, %arg5: memref<512x128xf32, #tpu.memory_space<vmem>>, %arg6: memref<1x128xf32, #tpu.memory_space<vmem>>, %arg7: memref<56x128xf32, #tpu.memory_space<vmem>>) attributes {dimension_semantics = [#tpu.dimension_semantics<parallel>], iteration_bounds = array<i64: 1>, scalar_prefetch = 0 : i64, scratch_operands = 0 : i64, tpu.core_type = #tpu.core_type<tc>, window_params = [{transform_indices = @transform_0, window_bounds = array<i64: 56, 512>}, {transform_indices = @transform_1, window_bounds = array<i64: 56, 512>}, {transform_indices = @transform_2, window_bounds = array<i64: 56, 512>}, {transform_indices = @transform_3, window_bounds = array<i64: 56, 512>}, {pipeline_mode = #tpu.pipeline_mode<synchronous>, transform_indices = @transform_4, window_bounds = array<i64: 512, 128>}, {pipeline_mode = #tpu.pipeline_mode<synchronous>, transform_indices = @transform_5, window_bounds = array<i64: 1, 128>}, {transform_indices = @transform_6, window_bounds = array<i64: 56, 128>}]} {
    %c0 = arith.constant 0 : index
    %c0_0 = arith.constant 0 : index
    %0 = vector.load %arg5[%c0, %c0_0] : memref<512x128xf32, #tpu.memory_space<vmem>>, vector<512x128xf32>
    %c0_1 = arith.constant 0 : index
    %c0_2 = arith.constant 0 : index
    %1 = vector.load %arg1[%c0_1, %c0_2] : memref<56x512xf32, #tpu.memory_space<vmem>>, vector<56x512xf32>
    %cst = arith.constant dense<0.000000e+00> : vector<56x128xf32>
    %2 = tpu.matmul %1, %0, %cst {dimension_numbers = #tpu.dot_dimension_numbers<[1], [0], [0], [1], [0, 0, 1, 1], [], []>} : vector<56x512xf32>, vector<512x128xf32>, vector<56x128xf32> -> vector<56x128xf32>
    %c0_3 = arith.constant 0 : index
    %c0_4 = arith.constant 0 : index
    %3 = vector.load %arg2[%c0_3, %c0_4] : memref<56x512xf32, #tpu.memory_space<vmem>>, vector<56x512xf32>
    %cst_5 = arith.constant dense<0.000000e+00> : vector<56x128xf32>
    %4 = tpu.matmul %3, %0, %cst_5 {dimension_numbers = #tpu.dot_dimension_numbers<[1], [0], [0], [1], [0, 0, 1, 1], [], []>} : vector<56x512xf32>, vector<512x128xf32>, vector<56x128xf32> -> vector<56x128xf32>
    %c0_6 = arith.constant 0 : index
    %c0_7 = arith.constant 0 : index
    %5 = vector.load %arg3[%c0_6, %c0_7] : memref<56x512xf32, #tpu.memory_space<vmem>>, vector<56x512xf32>
    %cst_8 = arith.constant dense<0.000000e+00> : vector<56x128xf32>
    %6 = tpu.matmul %5, %0, %cst_8 {dimension_numbers = #tpu.dot_dimension_numbers<[1], [0], [0], [1], [0, 0, 1, 1], [], []>} : vector<56x512xf32>, vector<512x128xf32>, vector<56x128xf32> -> vector<56x128xf32>
    %c0_9 = arith.constant 0 : index
    %c0_10 = arith.constant 0 : index
    %7 = vector.load %arg4[%c0_9, %c0_10] : memref<56x512xf32, #tpu.memory_space<vmem>>, vector<56x512xf32>
    %cst_11 = arith.constant dense<0.000000e+00> : vector<56x128xf32>
    %8 = tpu.matmul %7, %0, %cst_11 {dimension_numbers = #tpu.dot_dimension_numbers<[1], [0], [0], [1], [0, 0, 1, 1], [], []>} : vector<56x512xf32>, vector<512x128xf32>, vector<56x128xf32> -> vector<56x128xf32>
    %9 = arith.maximumf %2, %4 : vector<56x128xf32>
    %10 = arith.maximumf %6, %8 : vector<56x128xf32>
    %11 = arith.maximumf %9, %10 : vector<56x128xf32>
    %c0_12 = arith.constant 0 : index
    %c0_13 = arith.constant 0 : index
    %12 = vector.load %arg6[%c0_12, %c0_13] : memref<1x128xf32, #tpu.memory_space<vmem>>, vector<1x128xf32>
    %13 = vector.broadcast %12 : vector<1x128xf32> to vector<56x128xf32>
    %14 = arith.addf %11, %13 : vector<56x128xf32>
    %cst_14 = arith.constant 0.000000e+00 : f32
    %15 = vector.broadcast %cst_14 : f32 to vector<56x128xf32>
    %16 = arith.maximumf %14, %15 : vector<56x128xf32>
    %c0_15 = arith.constant 0 : index
    %c0_16 = arith.constant 0 : index
    %17 = vector.load %arg7[%c0_15, %c0_16] : memref<56x128xf32, #tpu.memory_space<vmem>>, vector<56x128xf32>
    tpu.vector_store %arg7[%c0_15, %c0_16], %16 {strides = array<i32>} : memref<56x128xf32, #tpu.memory_space<vmem>>, vector<56x128xf32>,
    return
  }
  func.func @transform_0(%arg0: i32) -> (i32, i32) {
    %c0_i32 = arith.constant 0 : i32
    %c0_i32_0 = arith.constant 0 : i32
    return %arg0, %c0_i32 : i32, i32
  }
  func.func @transform_1(%arg0: i32) -> (i32, i32) {
    %c0_i32 = arith.constant 0 : i32
    %c0_i32_0 = arith.constant 0 : i32
    return %arg0, %c0_i32 : i32, i32
  }
  func.func @transform_2(%arg0: i32) -> (i32, i32) {
    %c0_i32 = arith.constant 0 : i32
    %c0_i32_0 = arith.constant 0 : i32
    return %arg0, %c0_i32 : i32, i32
  }
  func.func @transform_3(%arg0: i32) -> (i32, i32) {
    %c0_i32 = arith.constant 0 : i32
    %c0_i32_0 = arith.constant 0 : i32
    return %arg0, %c0_i32 : i32, i32
  }
  func.func @transform_4(%arg0: i32) -> (i32, i32) {
    %c0_i32 = arith.constant 0 : i32
    %c0_i32_0 = arith.constant 0 : i32
    %c0_i32_1 = arith.constant 0 : i32
    return %c0_i32, %c0_i32_0 : i32, i32
  }
  func.func @transform_5(%arg0: i32) -> (i32, i32) {
    %c0_i32 = arith.constant 0 : i32
    %c0_i32_0 = arith.constant 0 : i32
    %c0_i32_1 = arith.constant 0 : i32
    return %c0_i32, %c0_i32_0 : i32, i32
  }
  func.func @transform_6(%arg0: i32) -> (i32, i32) {
    %c0_i32 = arith.constant 0 : i32
    %c0_i32_0 = arith.constant 0 : i32
    return %arg0, %c0_i32 : i32, i32
  }
}

module attributes {stable_mosaic.version = 11 : i64} {
  func.func @_fc_fused_kernel(%arg0: i32, %arg1: memref<8x3200xf32, #tpu.memory_space<vmem>>, %arg2: memref<3200x128xf32, #tpu.memory_space<vmem>>, %arg3: memref<1x128xf32, #tpu.memory_space<vmem>>, %arg4: memref<128x128xf32, #tpu.memory_space<vmem>>, %arg5: memref<1x128xf32, #tpu.memory_space<vmem>>, %arg6: memref<128x128xf32, #tpu.memory_space<vmem>>, %arg7: memref<1x128xf32, #tpu.memory_space<vmem>>, %arg8: memref<8x128xf32, #tpu.memory_space<vmem>>) attributes {dimension_semantics = [#tpu.dimension_semantics<parallel>], iteration_bounds = array<i64: 1>, scalar_prefetch = 0 : i64, scratch_operands = 0 : i64, tpu.core_type = #tpu.core_type<tc>, window_params = [{transform_indices = @transform_0, window_bounds = array<i64: 8, 3200>}, {pipeline_mode = #tpu.pipeline_mode<synchronous>, transform_indices = @transform_1, window_bounds = array<i64: 3200, 128>}, {pipeline_mode = #tpu.pipeline_mode<synchronous>, transform_indices = @transform_2, window_bounds = array<i64: 1, 128>}, {pipeline_mode = #tpu.pipeline_mode<synchronous>, transform_indices = @transform_3, window_bounds = array<i64: 128, 128>}, {pipeline_mode = #tpu.pipeline_mode<synchronous>, transform_indices = @transform_4, window_bounds = array<i64: 1, 128>}, {pipeline_mode = #tpu.pipeline_mode<synchronous>, transform_indices = @transform_5, window_bounds = array<i64: 128, 128>}, {pipeline_mode = #tpu.pipeline_mode<synchronous>, transform_indices = @transform_6, window_bounds = array<i64: 1, 128>}, {transform_indices = @transform_7, window_bounds = array<i64: 8, 128>}]} {
    %c0 = arith.constant 0 : index
    %c0_0 = arith.constant 0 : index
    %0 = vector.load %arg1[%c0, %c0_0] : memref<8x3200xf32, #tpu.memory_space<vmem>>, vector<8x3200xf32>
    %c0_1 = arith.constant 0 : index
    %c0_2 = arith.constant 0 : index
    %1 = vector.load %arg2[%c0_1, %c0_2] : memref<3200x128xf32, #tpu.memory_space<vmem>>, vector<3200x128xf32>
    %cst = arith.constant dense<0.000000e+00> : vector<8x128xf32>
    %2 = tpu.matmul %0, %1, %cst {dimension_numbers = #tpu.dot_dimension_numbers<[1], [0], [0], [1], [0, 0, 1, 1], [], []>} : vector<8x3200xf32>, vector<3200x128xf32>, vector<8x128xf32> -> vector<8x128xf32>
    %c0_3 = arith.constant 0 : index
    %c0_4 = arith.constant 0 : index
    %3 = vector.load %arg3[%c0_3, %c0_4] : memref<1x128xf32, #tpu.memory_space<vmem>>, vector<1x128xf32>
    %4 = vector.broadcast %3 : vector<1x128xf32> to vector<8x128xf32>
    %5 = arith.addf %2, %4 : vector<8x128xf32>
    %cst_5 = arith.constant 0.000000e+00 : f32
    %6 = vector.broadcast %cst_5 : f32 to vector<8x128xf32>
    %7 = arith.maximumf %5, %6 : vector<8x128xf32>
    %c0_6 = arith.constant 0 : index
    %c0_7 = arith.constant 0 : index
    %8 = vector.load %arg4[%c0_6, %c0_7] : memref<128x128xf32, #tpu.memory_space<vmem>>, vector<128x128xf32>
    %cst_8 = arith.constant dense<0.000000e+00> : vector<8x128xf32>
    %9 = tpu.matmul %7, %8, %cst_8 {dimension_numbers = #tpu.dot_dimension_numbers<[1], [0], [0], [1], [0, 0, 1, 1], [], []>} : vector<8x128xf32>, vector<128x128xf32>, vector<8x128xf32> -> vector<8x128xf32>
    %c0_9 = arith.constant 0 : index
    %c0_10 = arith.constant 0 : index
    %10 = vector.load %arg5[%c0_9, %c0_10] : memref<1x128xf32, #tpu.memory_space<vmem>>, vector<1x128xf32>
    %11 = vector.broadcast %10 : vector<1x128xf32> to vector<8x128xf32>
    %12 = arith.addf %9, %11 : vector<8x128xf32>
    %cst_11 = arith.constant 0.000000e+00 : f32
    %13 = vector.broadcast %cst_11 : f32 to vector<8x128xf32>
    %14 = arith.maximumf %12, %13 : vector<8x128xf32>
    %c0_12 = arith.constant 0 : index
    %c0_13 = arith.constant 0 : index
    %15 = vector.load %arg6[%c0_12, %c0_13] : memref<128x128xf32, #tpu.memory_space<vmem>>, vector<128x128xf32>
    %cst_14 = arith.constant dense<0.000000e+00> : vector<8x128xf32>
    %16 = tpu.matmul %14, %15, %cst_14 {dimension_numbers = #tpu.dot_dimension_numbers<[1], [0], [0], [1], [0, 0, 1, 1], [], []>} : vector<8x128xf32>, vector<128x128xf32>, vector<8x128xf32> -> vector<8x128xf32>
    %c0_15 = arith.constant 0 : index
    %c0_16 = arith.constant 0 : index
    %17 = vector.load %arg7[%c0_15, %c0_16] : memref<1x128xf32, #tpu.memory_space<vmem>>, vector<1x128xf32>
    %18 = vector.broadcast %17 : vector<1x128xf32> to vector<8x128xf32>
    %19 = arith.addf %16, %18 : vector<8x128xf32>
    %c0_17 = arith.constant 0 : index
    %c0_18 = arith.constant 0 : index
    %20 = vector.load %arg8[%c0_17, %c0_18] : memref<8x128xf32, #tpu.memory_space<vmem>>, vector<8x128xf32>
    tpu.vector_store %arg8[%c0_17, %c0_18], %19 {strides = array<i32>} : memref<8x128xf32, #tpu.memory_space<vmem>>, vector<8x128xf32>,
    return
  }
  func.func @transform_0(%arg0: i32) -> (i32, i32) {
    %c0_i32 = arith.constant 0 : i32
    %c0_i32_0 = arith.constant 0 : i32
    return %arg0, %c0_i32 : i32, i32
  }
  func.func @transform_1(%arg0: i32) -> (i32, i32) {
    %c0_i32 = arith.constant 0 : i32
    %c0_i32_0 = arith.constant 0 : i32
    %c0_i32_1 = arith.constant 0 : i32
    return %c0_i32, %c0_i32_0 : i32, i32
  }
  func.func @transform_2(%arg0: i32) -> (i32, i32) {
    %c0_i32 = arith.constant 0 : i32
    %c0_i32_0 = arith.constant 0 : i32
    %c0_i32_1 = arith.constant 0 : i32
    return %c0_i32, %c0_i32_0 : i32, i32
  }
  func.func @transform_3(%arg0: i32) -> (i32, i32) {
    %c0_i32 = arith.constant 0 : i32
    %c0_i32_0 = arith.constant 0 : i32
    %c0_i32_1 = arith.constant 0 : i32
    return %c0_i32, %c0_i32_0 : i32, i32
  }
  func.func @transform_4(%arg0: i32) -> (i32, i32) {
    %c0_i32 = arith.constant 0 : i32
    %c0_i32_0 = arith.constant 0 : i32
    %c0_i32_1 = arith.constant 0 : i32
    return %c0_i32, %c0_i32_0 : i32, i32
  }
  func.func @transform_5(%arg0: i32) -> (i32, i32) {
    %c0_i32 = arith.constant 0 : i32
    %c0_i32_0 = arith.constant 0 : i32
    %c0_i32_1 = arith.constant 0 : i32
    return %c0_i32, %c0_i32_0 : i32, i32
  }
  func.func @transform_6(%arg0: i32) -> (i32, i32) {
    %c0_i32 = arith.constant 0 : i32
    %c0_i32_0 = arith.constant 0 : i32
    %c0_i32_1 = arith.constant 0 : i32
    return %c0_i32, %c0_i32_0 : i32, i32
  }
  func.func @transform_7(%arg0: i32) -> (i32, i32) {
    %c0_i32 = arith.constant 0 : i32
    %c0_i32_0 = arith.constant 0 : i32
    return %arg0, %c0_i32 : i32, i32
  }
}

</mosaic_0001>

<llo_original>
// kernel: lenet_forward.3
$region0: #{lenet_forward.3}
  #allocation0 [shape = 'u32[]', space=smem, size = 0x4, offset = 0x4, fixed_abs, tag = 'smem constant byte address 0x4 - core index']
  #allocation1 [shape = 'u32[72,128]{1,0:T(1,128)}', space=vmem, size = 0x9000, scoped, tag = 'internal scratch']
  %s0 = inlined_call_operand.vmem [shape: f32[400,128], index: 0, kind: input, shape index: {}]
  %s1 = inlined_call_operand.vmem [shape: f32[400,128], index: 1, kind: input, shape index: {}]
  %s2 = inlined_call_operand.vmem [shape: f32[400,128], index: 2, kind: input, shape index: {}]
  %s3 = inlined_call_operand.vmem [shape: f32[400,128], index: 3, kind: input, shape index: {}]
  %s4 = inlined_call_operand.vmem [shape: f32[128,128], index: 4, kind: input, shape index: {}]
  %s5 = inlined_call_operand.vmem [shape: f32[1,128], index: 5, kind: input, shape index: {}]
  %s6 = inlined_call_operand.vmem [shape: f32[400,128], index: 6, kind: output, shape index: {}]
  %s7 = sld [smem:[#allocation0]]
  $region57: #{lenet_forward.3} parent=0
    _
  %s9 = ssub.s32 1, %s7
  %s10 = scalar_select 0, %s9, %s7
  loop: start=0, step=1, limit=4
  $region2: #{lenet_forward.3} parent=0 // loop_pre_header
    _
  $region3: #{lenet_forward.3} parent=0 // loop_header
    %s12 = sphi 0, %s16
    %p13 = scmp.ge.s32.totalorder %s12, 4
    %s22 = sphi 0, %s24
    %s25 = sphi 0, %s22
    %s26 = sphi 0, %s25
    %s42 = sphi 0, %s26
    %s48 = sphi 0, %s50
    %s51 = sphi 0, %s48
    %s52 = sphi 0, %s51
    %s68 = sphi 0, %s52
    %s74 = sphi 0, %s76
    %s77 = sphi 0, %s74
    %s78 = sphi 0, %s77
    %s94 = sphi 0, %s78
    %s100 = sphi 0, %s102
    %s103 = sphi 0, %s100
    %s104 = sphi 0, %s103
    %s120 = sphi 0, %s104
    %s124 = sphi 0, %s124
    %s126 = sphi 0, %s124
    %s127 = sphi 0, %s126
    %s141 = sphi 0, %s127
    %s145 = sphi 0, %s145
    %s147 = sphi 0, %s145
    %s148 = sphi 0, %s147
    %s162 = sphi 0, %s148
    %s168 = sphi 0, %s170
    %s171 = sphi 0, %s168
    %s172 = sphi 0, %s171
    %s188 = sphi 0, %s172
  $region4: #{lenet_forward.3} parent=0 // loop_header_branch
    %15 = sbr.rel (%p13) target = $region8
  $region5: #{lenet_forward.3} parent=0 // loop_body
    %s17 = ssub.s32 %s12, 1
    %s18 = ssub.s32 %s12, 2
    %s19 = sadd.s32 %s12, 1
    %s20 = ssub.s32 %s12, %s19
    %p21 = scmp.eq.s32.totalorder %s20, 0
    %s23 = sadd.s32 %s22, 1
    %s24 = scalar_select %p21, %s22, %s23
    %p27 = pneg %p21
    %p28 = scmp.eq.s32.totalorder %s12, 1
    %p29 = por %p27, %p28
    %p30 = scmp.ne.s32.totalorder %s22, %s25
    %p31 = scmp.eq.s32.totalorder %s12, 0
    %p32 = por %p30, %p31
    %p33 = scmp.ne.s32.totalorder %s22, %s25
    %p34 = scmp.eq.s32.totalorder %s17, 1
    %p35 = por %p33, %p34
    %p36 = scmp.ne.s32.totalorder %s25, %s26
    %p37 = scmp.eq.s32.totalorder %s17, 0
    %p38 = por %p36, %p37
    %p39 = scmp.ne.s32.totalorder %s25, %s26
    %p40 = scmp.eq.s32.totalorder %s18, 1
    %p41 = por %p39, %p40
    %p43 = scmp.ne.s32.totalorder %s26, %s42
    %p44 = scmp.eq.s32.totalorder %s18, 0
    %p45 = por %p43, %p44
    %s46 = ssub.s32 %s12, %s19
    %p47 = scmp.eq.s32.totalorder %s46, 0
    %s49 = sadd.s32 %s48, 1
    %s50 = scalar_select %p47, %s48, %s49
    %p53 = pneg %p47
    %p54 = scmp.eq.s32.totalorder %s12, 1
    %p55 = por %p53, %p54
    %p56 = scmp.ne.s32.totalorder %s48, %s51
    %p57 = scmp.eq.s32.totalorder %s12, 0
    %p58 = por %p56, %p57
    %p59 = scmp.ne.s32.totalorder %s48, %s51
    %p60 = scmp.eq.s32.totalorder %s17, 1
    %p61 = por %p59, %p60
    %p62 = scmp.ne.s32.totalorder %s51, %s52
    %p63 = scmp.eq.s32.totalorder %s17, 0
    %p64 = por %p62, %p63
    %p65 = scmp.ne.s32.totalorder %s51, %s52
    %p66 = scmp.eq.s32.totalorder %s18, 1
    %p67 = por %p65, %p66
    %p69 = scmp.ne.s32.totalorder %s52, %s68
    %p70 = scmp.eq.s32.totalorder %s18, 0
    %p71 = por %p69, %p70
    %s72 = ssub.s32 %s12, %s19
    %p73 = scmp.eq.s32.totalorder %s72, 0
    %s75 = sadd.s32 %s74, 1
    %s76 = scalar_select %p73, %s74, %s75
    %p79 = pneg %p73
    %p80 = scmp.eq.s32.totalorder %s12, 1
    %p81 = por %p79, %p80
    %p82 = scmp.ne.s32.totalorder %s74, %s77
    %p83 = scmp.eq.s32.totalorder %s12, 0
    %p84 = por %p82, %p83
    %p85 = scmp.ne.s32.totalorder %s74, %s77
    %p86 = scmp.eq.s32.totalorder %s17, 1
    %p87 = por %p85, %p86
    %p88 = scmp.ne.s32.totalorder %s77, %s78
    %p89 = scmp.eq.s32.totalorder %s17, 0
    %p90 = por %p88, %p89
    %p91 = scmp.ne.s32.totalorder %s77, %s78
    %p92 = scmp.eq.s32.totalorder %s18, 1
    %p93 = por %p91, %p92
    %p95 = scmp.ne.s32.totalorder %s78, %s94
    %p96 = scmp.eq.s32.totalorder %s18, 0
    %p97 = por %p95, %p96
    %s98 = ssub.s32 %s12, %s19
    %p99 = scmp.eq.s32.totalorder %s98, 0
    %s101 = sadd.s32 %s100, 1
    %s102 = scalar_select %p99, %s100, %s101
    %p105 = pneg %p99
    %p106 = scmp.eq.s32.totalorder %s12, 1
    %p107 = por %p105, %p106
    %p108 = scmp.ne.s32.totalorder %s100, %s103
    %p109 = scmp.eq.s32.totalorder %s12, 0
    %p110 = por %p108, %p109
    %p111 = scmp.ne.s32.totalorder %s100, %s103
    %p112 = scmp.eq.s32.totalorder %s17, 1
    %p113 = por %p111, %p112
    %p114 = scmp.ne.s32.totalorder %s103, %s104
    %p115 = scmp.eq.s32.totalorder %s17, 0
    %p116 = por %p114, %p115
    %p117 = scmp.ne.s32.totalorder %s103, %s104
    %p118 = scmp.eq.s32.totalorder %s18, 1
    %p119 = por %p117, %p118
    %p121 = scmp.ne.s32.totalorder %s104, %s120
    %p122 = scmp.eq.s32.totalorder %s18, 0
    %p123 = por %p121, %p122
    %s125 = sadd.s32 %s124, 1
    %p128 = scmp.eq.s32.totalorder %s12, 1
    %p129 = scmp.ne.s32.totalorder %s124, %s126
    %p130 = scmp.eq.s32.totalorder %s12, 0
    %p131 = por %p129, %p130
    %p132 = scmp.ne.s32.totalorder %s124, %s126
    %p133 = scmp.eq.s32.totalorder %s17, 1
    %p134 = por %p132, %p133
    %p135 = scmp.ne.s32.totalorder %s126, %s127
    %p136 = scmp.eq.s32.totalorder %s17, 0
    %p137 = por %p135, %p136
    %p138 = scmp.ne.s32.totalorder %s126, %s127
    %p139 = scmp.eq.s32.totalorder %s18, 1
    %p140 = por %p138, %p139
    %p142 = scmp.ne.s32.totalorder %s127, %s141
    %p143 = scmp.eq.s32.totalorder %s18, 0
    %p144 = por %p142, %p143
    %s146 = sadd.s32 %s145, 1
    %p149 = scmp.eq.s32.totalorder %s12, 1
    %p150 = scmp.ne.s32.totalorder %s145, %s147
    %p151 = scmp.eq.s32.totalorder %s12, 0
    %p152 = por %p150, %p151
    %p153 = scmp.ne.s32.totalorder %s145, %s147
    %p154 = scmp.eq.s32.totalorder %s17, 1
    %p155 = por %p153, %p154
    %p156 = scmp.ne.s32.totalorder %s147, %s148
    %p157 = scmp.eq.s32.totalorder %s17, 0
    %p158 = por %p156, %p157
    %p159 = scmp.ne.s32.totalorder %s147, %s148
    %p160 = scmp.eq.s32.totalorder %s18, 1
    %p161 = por %p159, %p160
    %p163 = scmp.ne.s32.totalorder %s148, %s162
    %p164 = scmp.eq.s32.totalorder %s18, 0
    %p165 = por %p163, %p164
    %s166 = ssub.s32 %s12, %s19
    %p167 = scmp.eq.s32.totalorder %s166, 0
    %s169 = sadd.s32 %s168, 1
    %s170 = scalar_select %p167, %s168, %s169
    %p173 = pneg %p167
    %p174 = scmp.eq.s32.totalorder %s12, 1
    %p175 = por %p173, %p174
    %p176 = scmp.ne.s32.totalorder %s168, %s171
    %p177 = scmp.eq.s32.totalorder %s12, 0
    %p178 = por %p176, %p177
    %p179 = scmp.ne.s32.totalorder %s168, %s171
    %p180 = scmp.eq.s32.totalorder %s17, 1
    %p181 = por %p179, %p180
    %p182 = scmp.ne.s32.totalorder %s171, %s172
    %p183 = scmp.eq.s32.totalorder %s17, 0
    %p184 = por %p182, %p183
    %p185 = scmp.ne.s32.totalorder %s171, %s172
    %p186 = scmp.eq.s32.totalorder %s18, 1
    %p187 = por %p185, %p186
    %p189 = scmp.ne.s32.totalorder %s172, %s188
    %p190 = scmp.eq.s32.totalorder %s18, 0
    %p191 = por %p189, %p190
    %p192 = scmp.le.s32.totalorder 1, %s12
    %p193 = scmp.lt.s32.totalorder %s12, 3
    %p194 = pnand %p192, %p193
    %p195 = pneg %p194
    // Predicated region
    $region9: #{lenet_forward.3} parent=5 // pred_check
      _
    $region10: #{lenet_forward.3} parent=5 // pred_check_branch
      %197 = sbr.rel (%p194) target = $region12
    $region11: #{lenet_forward.3} parent=5 // pred_region
      %s198 = ssub.s32 %s12, 1
      // Predicated region
      $region13: #{lenet_forward.3} parent=11 // pred_check
        %p199 = pneg %p137
      $region14: #{lenet_forward.3} parent=11 // pred_check_branch
        %201 = sbr.rel (%p199) target = $region16
      $region15: #{lenet_forward.3} parent=11 // pred_region
        _
      $region16: #{lenet_forward.3} parent=11 // pred_fallthru
        _
      // Predicated region
      $region17: #{lenet_forward.3} parent=11 // pred_check
        %p202 = pneg %p158
      $region18: #{lenet_forward.3} parent=11 // pred_check_branch
        %204 = sbr.rel (%p202) target = $region20
      $region19: #{lenet_forward.3} parent=11 // pred_region
        _
      $region20: #{lenet_forward.3} parent=11 // pred_fallthru
        _
    $region12: #{lenet_forward.3} parent=5 // pred_fallthru
      _
    %p205 = scmp.lt.s32.totalorder %s12, 2
    // Predicated region
    $region21: #{lenet_forward.3} parent=5 // pred_check
      %p206 = pneg %p205
    $region22: #{lenet_forward.3} parent=5 // pred_check_branch
      %208 = sbr.rel (%p206) target = $region24
    $region23: #{lenet_forward.3} parent=5 // pred_region
      // Predicated region
      $region25: #{lenet_forward.3} parent=23 // pred_check
        %p209 = pneg %p32
      $region26: #{lenet_forward.3} parent=23 // pred_check_branch
        %211 = sbr.rel (%p209) target = $region28
      $region27: #{lenet_forward.3} parent=23 // pred_region
        %s212 = smul.u32 25, %s12
        %p213 = scmp.lt.s32.totalorder %s212, 49
        %s214 = scalar_select %p213, %s212, 49
        %s215 = smul.addr %s214, 8
        %s216 = scalar_lea.vmem %s0, %s215
        %s217 = smul.u32 25, %s12
      $region28: #{lenet_forward.3} parent=23 // pred_fallthru
        _
      // Predicated region
      $region29: #{lenet_forward.3} parent=23 // pred_check
        %p218 = pneg %p58
      $region30: #{lenet_forward.3} parent=23 // pred_check_branch
        %220 = sbr.rel (%p218) target = $region32
      $region31: #{lenet_forward.3} parent=23 // pred_region
        %s221 = smul.u32 25, %s12
        %p222 = scmp.lt.s32.totalorder %s221, 49
        %s223 = scalar_select %p222, %s221, 49
        %s224 = smul.addr %s223, 8
        %s225 = scalar_lea.vmem %s1, %s224
        %s226 = smul.u32 25, %s12
      $region32: #{lenet_forward.3} parent=23 // pred_fallthru
        _
      // Predicated region
      $region33: #{lenet_forward.3} parent=23 // pred_check
        %p227 = pneg %p84
      $region34: #{lenet_forward.3} parent=23 // pred_check_branch
        %229 = sbr.rel (%p227) target = $region36
      $region35: #{lenet_forward.3} parent=23 // pred_region
        %s230 = smul.u32 25, %s12
        %p231 = scmp.lt.s32.totalorder %s230, 49
        %s232 = scalar_select %p231, %s230, 49
        %s233 = smul.addr %s232, 8
        %s234 = scalar_lea.vmem %s2, %s233
        %s235 = smul.u32 25, %s12
      $region36: #{lenet_forward.3} parent=23 // pred_fallthru
        _
      // Predicated region
      $region37: #{lenet_forward.3} parent=23 // pred_check
        %p236 = pneg %p110
      $region38: #{lenet_forward.3} parent=23 // pred_check_branch
        %238 = sbr.rel (%p236) target = $region40
      $region39: #{lenet_forward.3} parent=23 // pred_region
        %s239 = smul.u32 25, %s12
        %p240 = scmp.lt.s32.totalorder %s239, 49
        %s241 = scalar_select %p240, %s239, 49
        %s242 = smul.addr %s241, 8
        %s243 = scalar_lea.vmem %s3, %s242
        %s244 = smul.u32 25, %s12
      $region40: #{lenet_forward.3} parent=23 // pred_fallthru
        _
    $region24: #{lenet_forward.3} parent=5 // pred_fallthru
      _
    %p245 = scmp.le.s32.totalorder 1, %s12
    %p246 = scmp.lt.s32.totalorder %s12, 3
    %p247 = pnand %p245, %p246
    %p248 = pneg %p247
    // Predicated region
    $region41: #{lenet_forward.3} parent=5 // pred_check
      _
    $region42: #{lenet_forward.3} parent=5 // pred_check_branch
      %250 = sbr.rel (%p247) target = $region44
    $region43: #{lenet_forward.3} parent=5 // pred_region
      %s251 = ssub.s32 %s12, 1
      %s252 = smul.u32 25, %s17
      %p253 = scmp.lt.s32.totalorder %s252, 49
      %s254 = scalar_select %p253, %s252, 49
      %s255 = smul.addr %s254, 8
      %s256 = scalar_lea.vmem %s0, %s255
      %p257 = pneg %p38
      %p258 = pneg %p35
      %s259 = smul.u32 25, %s17
      %p260 = scmp.lt.s32.totalorder %s259, 49
      %s261 = scalar_select %p260, %s259, 49
      %s262 = smul.addr %s261, 8
      %s263 = scalar_lea.vmem %s1, %s262
      %p264 = pneg %p64
      %p265 = pneg %p61
      %s266 = smul.u32 25, %s17
      %p267 = scmp.lt.s32.totalorder %s266, 49
      %s268 = scalar_select %p267, %s266, 49
      %s269 = smul.addr %s268, 8
      %s270 = scalar_lea.vmem %s2, %s269
      %p271 = pneg %p90
      %p272 = pneg %p87
      %s273 = smul.u32 25, %s17
      %p274 = scmp.lt.s32.totalorder %s273, 49
      %s275 = scalar_select %p274, %s273, 49
      %s276 = smul.addr %s275, 8
      %s277 = scalar_lea.vmem %s3, %s276
      %p278 = pneg %p116
      %p279 = pneg %p113
      %p280 = pneg %p137
      %p281 = pneg %p134
      %p282 = pneg %p158
      %p283 = pneg %p155
      %p284 = pneg %p184
      %p285 = pneg %p181
      %s286 = smul.u32 25, %s17
      %p287 = scmp.lt.s32.totalorder %s286, 49
      %s288 = scalar_select %p287, %s286, 49
      %s289 = smul.addr %s288, 8
      %s290 = scalar_lea.vmem %s6, %s289
      %s291 = smul.u32 25, %s17
      %p292 = scmp.lt.s32.totalorder %s291, 49
      %s293 = scalar_select %p292, %s291, 49
      %s294 = smul.addr %s293, 8
      %s295 = scalar_lea.vmem %s0, %s294
      %s296 = smul.u32 25, %s17
      %s297 = smul.u32 25, %s17
      %p298 = scmp.lt.s32.totalorder %s297, 49
      %s299 = scalar_select %p298, %s297, 49
      %s300 = smul.addr %s299, 8
      %s301 = scalar_lea.vmem %s1, %s300
      %s302 = smul.u32 25, %s17
      %s303 = smul.u32 25, %s17
      %p304 = scmp.lt.s32.totalorder %s303, 49
      %s305 = scalar_select %p304, %s303, 49
      %s306 = smul.addr %s305, 8
      %s307 = scalar_lea.vmem %s2, %s306
      %s308 = smul.u32 25, %s17
      %s309 = smul.u32 25, %s17
      %p310 = scmp.lt.s32.totalorder %s309, 49
      %s311 = scalar_select %p310, %s309, 49
      %s312 = smul.addr %s311, 8
      %s313 = scalar_lea.vmem %s3, %s312
      %s314 = smul.u32 25, %s17
      %s315 = smul.u32 25, %s17
      %p316 = scmp.lt.s32.totalorder %s315, 49
      %s317 = scalar_select %p316, %s315, 49
      %s318 = smul.addr %s317, 8
      %s319 = scalar_lea.vmem %s6, %s318
      %s320 = smul.u32 25, %s17
      %v321 = vld [vmem:[%s4] sm:$0xff]
      %v322 = vld [vmem:[%s4 + $0x8] sm:$0xff]
      %v323 = vld [vmem:[%s4 + $0x10] sm:$0xff]
      %v324 = vld [vmem:[%s4 + $0x18] sm:$0xff]
      %v325 = vld [vmem:[%s4 + $0x20] sm:$0xff]
      %v326 = vld [vmem:[%s4 + $0x28] sm:$0xff]
      %v327 = vld [vmem:[%s4 + $0x30] sm:$0xff]
      %v328 = vld [vmem:[%s4 + $0x38] sm:$0xff]
      %v329 = vld [vmem:[%s4 + $0x40] sm:$0xff]
      %v330 = vld [vmem:[%s4 + $0x48] sm:$0xff]
      %v331 = vld [vmem:[%s4 + $0x50] sm:$0xff]
      %v332 = vld [vmem:[%s4 + $0x58] sm:$0xff]
      %v333 = vld [vmem:[%s4 + $0x60] sm:$0xff]
      %v334 = vld [vmem:[%s4 + $0x68] sm:$0xff]
      %v335 = vld [vmem:[%s4 + $0x70] sm:$0xff]
      %v336 = vld [vmem:[%s4 + $0x78] sm:$0xff]
      %v337 = vld [vmem:[%s295] sm:$0xff]
      %v338 = vld [vmem:[%s295 + $0x8] sm:$0xff]
      %v339 = vld [vmem:[%s295 + $0x10] sm:$0xff]
      %v340 = vld [vmem:[%s295 + $0x18] sm:$0xff]
      %v341 = vld [vmem:[%s295 + $0x20] sm:$0xff]
      %v342 = vld [vmem:[%s295 + $0x28] sm:$0xff]
      %v343 = vld [vmem:[%s295 + $0x30] sm:$0xff]
      %v344 = vld [vmem:[%s295 + $0x38] sm:$0xff]
      %v345 = vld [vmem:[%s295 + $0x40] sm:$0xff]
      %v346 = vld [vmem:[%s295 + $0x48] sm:$0xff]
      %v347 = vld [vmem:[%s295 + $0x50] sm:$0xff]
      %v348 = vld [vmem:[%s295 + $0x58] sm:$0xff]
      %v349 = vld [vmem:[%s295 + $0x60] sm:$0xff]
      %v350 = vld [vmem:[%s295 + $0x68] sm:$0xff]
      %v351 = vld [vmem:[%s295 + $0x70] sm:$0xff]
      %v352 = vld [vmem:[%s295 + $0x78] sm:$0xff]
      %v353 = vld [vmem:[%s295 + $0x80] sm:$0xff]
      %v354 = vld [vmem:[%s295 + $0x88] sm:$0xff]
      %v355 = vld [vmem:[%s295 + $0x90] sm:$0xff]
      %v356 = vld [vmem:[%s295 + $0x98] sm:$0xff]
      %v357 = vld [vmem:[%s295 + $0xa0] sm:$0xff]
      %v358 = vld [vmem:[%s295 + $0xa8] sm:$0xff]
      %v359 = vld [vmem:[%s295 + $0xb0] sm:$0xff]
      %v360 = vld [vmem:[%s295 + $0xb8] sm:$0xff]
      %v361 = vld [vmem:[%s295 + $0xc0] sm:$0xff]
      %362 = vmatpush.msra.mxu0 %v336
      %363 = vmatpush.msra.mxu0 %v335
      %364 = vmatpush.msra.mxu0 %v334
      %365 = vmatpush.msra.mxu0 %v333
      %366 = vmatpush.msra.mxu0 %v332
      %367 = vmatpush.msra.mxu0 %v331
      %368 = vmatpush.msra.mxu0 %v330
      %369 = vmatpush.msra.mxu0 %v329
      %370 = vmatpush.msra.mxu0 %v328
      %371 = vmatpush.msra.mxu0 %v327
      %372 = vmatpush.msra.mxu0 %v326
      %373 = vmatpush.msra.mxu0 %v325
      %374 = vmatpush.msra.mxu0 %v324
      %375 = vmatpush.msra.mxu0 %v323
      %376 = vmatpush.msra.mxu0 %v322
      %377 = vmatpush.msra.mxu0 %v321
      %378 = vmatmul.f32.gmra.mxu0 %v337
      %v379 = vpop.f32.mrf.mxu0
      %v380 = vadd.f32 0.0, %v379
      %381 = vmatmul.f32.gmra.mxu0 %v338
      %v382 = vpop.f32.mrf.mxu0
      %v383 = vadd.f32 0.0, %v382
      %384 = vmatmul.f32.gmra.mxu0 %v339
      %v385 = vpop.f32.mrf.mxu0
      %v386 = vadd.f32 0.0, %v385
      %387 = vmatmul.f32.gmra.mxu0 %v340
      %v388 = vpop.f32.mrf.mxu0
      %v389 = vadd.f32 0.0, %v388
      %390 = vmatmul.f32.gmra.mxu0 %v341
      %v391 = vpop.f32.mrf.mxu0
      %v392 = vadd.f32 0.0, %v391
      %393 = vmatmul.f32.gmra.mxu0 %v342
      %v394 = vpop.f32.mrf.mxu0
      %v395 = vadd.f32 0.0, %v394
      %396 = vmatmul.f32.gmra.mxu0 %v343
      %v397 = vpop.f32.mrf.mxu0
      %v398 = vadd.f32 0.0, %v397
      %399 = vmatmul.f32.gmra.mxu0 %v344
      %v400 = vpop.f32.mrf.mxu0
      %v401 = vadd.f32 0.0, %v400
      %402 = vmatmul.f32.gmra.mxu0 %v345
      %v403 = vpop.f32.mrf.mxu0
      %v404 = vadd.f32 0.0, %v403
      %405 = vmatmul.f32.gmra.mxu0 %v346
      %v406 = vpop.f32.mrf.mxu0
      %v407 = vadd.f32 0.0, %v406
      %408 = vmatmul.f32.gmra.mxu0 %v347
      %v409 = vpop.f32.mrf.mxu0
      %v410 = vadd.f32 0.0, %v409
      %411 = vmatmul.f32.gmra.mxu0 %v348
      %v412 = vpop.f32.mrf.mxu0
      %v413 = vadd.f32 0.0, %v412
      %414 = vmatmul.f32.gmra.mxu0 %v349
      %v415 = vpop.f32.mrf.mxu0
      %v416 = vadd.f32 0.0, %v415
      %417 = vmatmul.f32.gmra.mxu0 %v350
      %v418 = vpop.f32.mrf.mxu0
      %v419 = vadd.f32 0.0, %v418
      %420 = vmatmul.f32.gmra.mxu0 %v351
      %v421 = vpop.f32.mrf.mxu0
      %v422 = vadd.f32 0.0, %v421
      %423 = vmatmul.f32.gmra.mxu0 %v352
      %v424 = vpop.f32.mrf.mxu0
      %v425 = vadd.f32 0.0, %v424
      %426 = vmatmul.f32.gmra.mxu0 %v353
      %v427 = vpop.f32.mrf.mxu0
      %v428 = vadd.f32 0.0, %v427
      %429 = vmatmul.f32.gmra.mxu0 %v354
      %v430 = vpop.f32.mrf.mxu0
      %v431 = vadd.f32 0.0, %v430
      %432 = vmatmul.f32.gmra.mxu0 %v355
      %v433 = vpop.f32.mrf.mxu0
      %v434 = vadd.f32 0.0, %v433
      %435 = vmatmul.f32.gmra.mxu0 %v356
      %v436 = vpop.f32.mrf.mxu0
      %v437 = vadd.f32 0.0, %v436
      %438 = vmatmul.f32.gmra.mxu0 %v357
      %v439 = vpop.f32.mrf.mxu0
      %v440 = vadd.f32 0.0, %v439
      %441 = vmatmul.f32.gmra.mxu0 %v358
      %v442 = vpop.f32.mrf.mxu0
      %v443 = vadd.f32 0.0, %v442
      %444 = vmatmul.f32.gmra.mxu0 %v359
      %v445 = vpop.f32.mrf.mxu0
      %v446 = vadd.f32 0.0, %v445
      %447 = vmatmul.f32.gmra.mxu0 %v360
      %v448 = vpop.f32.mrf.mxu0
      %v449 = vadd.f32 0.0, %v448
      %450 = vmatmul.f32.gmra.mxu0 %v361
      %v451 = vpop.f32.mrf.mxu0
      %v452 = vadd.f32 0.0, %v451
      %453 = vdwg.mxu0
      %v454 = vld [vmem:[%s301] sm:$0xff]
      %v455 = vld [vmem:[%s301 + $0x8] sm:$0xff]
      %v456 = vld [vmem:[%s301 + $0x10] sm:$0xff]
      %v457 = vld [vmem:[%s301 + $0x18] sm:$0xff]
      %v458 = vld [vmem:[%s301 + $0x20] sm:$0xff]
      %v459 = vld [vmem:[%s301 + $0x28] sm:$0xff]
      %v460 = vld [vmem:[%s301 + $0x30] sm:$0xff]
      %v461 = vld [vmem:[%s301 + $0x38] sm:$0xff]
      %v462 = vld [vmem:[%s301 + $0x40] sm:$0xff]
      %v463 = vld [vmem:[%s301 + $0x48] sm:$0xff]
      %v464 = vld [vmem:[%s301 + $0x50] sm:$0xff]
      %v465 = vld [vmem:[%s301 + $0x58] sm:$0xff]
      %v466 = vld [vmem:[%s301 + $0x60] sm:$0xff]
      %v467 = vld [vmem:[%s301 + $0x68] sm:$0xff]
      %v468 = vld [vmem:[%s301 + $0x70] sm:$0xff]
      %v469 = vld [vmem:[%s301 + $0x78] sm:$0xff]
      %v470 = vld [vmem:[%s301 + $0x80] sm:$0xff]
      %v471 = vld [vmem:[%s301 + $0x88] sm:$0xff]
      %v472 = vld [vmem:[%s301 + $0x90] sm:$0xff]
      %v473 = vld [vmem:[%s301 + $0x98] sm:$0xff]
      %v474 = vld [vmem:[%s301 + $0xa0] sm:$0xff]
      %v475 = vld [vmem:[%s301 + $0xa8] sm:$0xff]
      %v476 = vld [vmem:[%s301 + $0xb0] sm:$0xff]
      %v477 = vld [vmem:[%s301 + $0xb8] sm:$0xff]
      %v478 = vld [vmem:[%s301 + $0xc0] sm:$0xff]
      %479 = vmatpush.msra.mxu0 %v336
      %480 = vmatpush.msra.mxu0 %v335
      %481 = vmatpush.msra.mxu0 %v334
      %482 = vmatpush.msra.mxu0 %v333
      %483 = vmatpush.msra.mxu0 %v332
      %484 = vmatpush.msra.mxu0 %v331
      %485 = vmatpush.msra.mxu0 %v330
      %486 = vmatpush.msra.mxu0 %v329
      %487 = vmatpush.msra.mxu0 %v328
      %488 = vmatpush.msra.mxu0 %v327
      %489 = vmatpush.msra.mxu0 %v326
      %490 = vmatpush.msra.mxu0 %v325
      %491 = vmatpush.msra.mxu0 %v324
      %492 = vmatpush.msra.mxu0 %v323
      %493 = vmatpush.msra.mxu0 %v322
      %494 = vmatpush.msra.mxu0 %v321
      %495 = vmatmul.f32.gmra.mxu0 %v454
      %v496 = vpop.f32.mrf.mxu0
      %v497 = vadd.f32 0.0, %v496
      %498 = vmatmul.f32.gmra.mxu0 %v455
      %v499 = vpop.f32.mrf.mxu0
      %v500 = vadd.f32 0.0, %v499
      %501 = vmatmul.f32.gmra.mxu0 %v456
      %v502 = vpop.f32.mrf.mxu0
      %v503 = vadd.f32 0.0, %v502
      %504 = vmatmul.f32.gmra.mxu0 %v457
      %v505 = vpop.f32.mrf.mxu0
      %v506 = vadd.f32 0.0, %v505
      %507 = vmatmul.f32.gmra.mxu0 %v458
      %v508 = vpop.f32.mrf.mxu0
      %v509 = vadd.f32 0.0, %v508
      %510 = vmatmul.f32.gmra.mxu0 %v459
      %v511 = vpop.f32.mrf.mxu0
      %v512 = vadd.f32 0.0, %v511
      %513 = vmatmul.f32.gmra.mxu0 %v460
      %v514 = vpop.f32.mrf.mxu0
      %v515 = vadd.f32 0.0, %v514
      %516 = vmatmul.f32.gmra.mxu0 %v461
      %v517 = vpop.f32.mrf.mxu0
      %v518 = vadd.f32 0.0, %v517
      %519 = vmatmul.f32.gmra.mxu0 %v462
      %v520 = vpop.f32.mrf.mxu0
      %v521 = vadd.f32 0.0, %v520
      %522 = vmatmul.f32.gmra.mxu0 %v463
      %v523 = vpop.f32.mrf.mxu0
      %v524 = vadd.f32 0.0, %v523
      %525 = vmatmul.f32.gmra.mxu0 %v464
      %v526 = vpop.f32.mrf.mxu0
      %v527 = vadd.f32 0.0, %v526
      %528 = vmatmul.f32.gmra.mxu0 %v465
      %v529 = vpop.f32.mrf.mxu0
      %v530 = vadd.f32 0.0, %v529
      %531 = vmatmul.f32.gmra.mxu0 %v466
      %v532 = vpop.f32.mrf.mxu0
      %v533 = vadd.f32 0.0, %v532
      %534 = vmatmul.f32.gmra.mxu0 %v467
      %v535 = vpop.f32.mrf.mxu0
      %v536 = vadd.f32 0.0, %v535
      %537 = vmatmul.f32.gmra.mxu0 %v468
      %v538 = vpop.f32.mrf.mxu0
      %v539 = vadd.f32 0.0, %v538
      %540 = vmatmul.f32.gmra.mxu0 %v469
      %v541 = vpop.f32.mrf.mxu0
      %v542 = vadd.f32 0.0, %v541
      %543 = vmatmul.f32.gmra.mxu0 %v470
      %v544 = vpop.f32.mrf.mxu0
      %v545 = vadd.f32 0.0, %v544
      %546 = vmatmul.f32.gmra.mxu0 %v471
      %v547 = vpop.f32.mrf.mxu0
      %v548 = vadd.f32 0.0, %v547
      %549 = vmatmul.f32.gmra.mxu0 %v472
      %v550 = vpop.f32.mrf.mxu0
      %v551 = vadd.f32 0.0, %v550
      %552 = vmatmul.f32.gmra.mxu0 %v473
      %v553 = vpop.f32.mrf.mxu0
      %v554 = vadd.f32 0.0, %v553
      %555 = vmatmul.f32.gmra.mxu0 %v474
      %v556 = vpop.f32.mrf.mxu0
      %v557 = vadd.f32 0.0, %v556
      %558 = vmatmul.f32.gmra.mxu0 %v475
      %v559 = vpop.f32.mrf.mxu0
      %v560 = vadd.f32 0.0, %v559
      %561 = vmatmul.f32.gmra.mxu0 %v476
      %v562 = vpop.f32.mrf.mxu0
      %v563 = vadd.f32 0.0, %v562
      %564 = vmatmul.f32.gmra.mxu0 %v477
      %v565 = vpop.f32.mrf.mxu0
      %v566 = vadd.f32 0.0, %v565
      %567 = vmatmul.f32.gmra.mxu0 %v478
      %v568 = vpop.f32.mrf.mxu0
      %v569 = vadd.f32 0.0, %v568
      %570 = vdwg.mxu0
      %v571 = vld [vmem:[%s307] sm:$0xff]
      %v572 = vld [vmem:[%s307 + $0x8] sm:$0xff]
      %v573 = vld [vmem:[%s307 + $0x10] sm:$0xff]
      %v574 = vld [vmem:[%s307 + $0x18] sm:$0xff]
      %v575 = vld [vmem:[%s307 + $0x20] sm:$0xff]
      %v576 = vld [vmem:[%s307 + $0x28] sm:$0xff]
      %v577 = vld [vmem:[%s307 + $0x30] sm:$0xff]
      %v578 = vld [vmem:[%s307 + $0x38] sm:$0xff]
      %v579 = vld [vmem:[%s307 + $0x40] sm:$0xff]
      %v580 = vld [vmem:[%s307 + $0x48] sm:$0xff]
      %v581 = vld [vmem:[%s307 + $0x50] sm:$0xff]
      %v582 = vld [vmem:[%s307 + $0x58] sm:$0xff]
      %v583 = vld [vmem:[%s307 + $0x60] sm:$0xff]
      %v584 = vld [vmem:[%s307 + $0x68] sm:$0xff]
      %v585 = vld [vmem:[%s307 + $0x70] sm:$0xff]
      %v586 = vld [vmem:[%s307 + $0x78] sm:$0xff]
      %v587 = vld [vmem:[%s307 + $0x80] sm:$0xff]
      %v588 = vld [vmem:[%s307 + $0x88] sm:$0xff]
      %v589 = vld [vmem:[%s307 + $0x90] sm:$0xff]
      %v590 = vld [vmem:[%s307 + $0x98] sm:$0xff]
      %v591 = vld [vmem:[%s307 + $0xa0] sm:$0xff]
      %v592 = vld [vmem:[%s307 + $0xa8] sm:$0xff]
      %v593 = vld [vmem:[%s307 + $0xb0] sm:$0xff]
      %v594 = vld [vmem:[%s307 + $0xb8] sm:$0xff]
      %v595 = vld [vmem:[%s307 + $0xc0] sm:$0xff]
      %596 = vmatpush.msra.mxu0 %v336
      %597 = vmatpush.msra.mxu0 %v335
      %598 = vmatpush.msra.mxu0 %v334
      %599 = vmatpush.msra.mxu0 %v333
      %600 = vmatpush.msra.mxu0 %v332
      %601 = vmatpush.msra.mxu0 %v331
      %602 = vmatpush.msra.mxu0 %v330
      %603 = vmatpush.msra.mxu0 %v329
      %604 = vmatpush.msra.mxu0 %v328
      %605 = vmatpush.msra.mxu0 %v327
      %606 = vmatpush.msra.mxu0 %v326
      %607 = vmatpush.msra.mxu0 %v325
      %608 = vmatpush.msra.mxu0 %v324
      %609 = vmatpush.msra.mxu0 %v323
      %610 = vmatpush.msra.mxu0 %v322
      %611 = vmatpush.msra.mxu0 %v321
      %612 = vmatmul.f32.gmra.mxu0 %v571
      %v613 = vpop.f32.mrf.mxu0
      %v614 = vadd.f32 0.0, %v613
      %615 = vmatmul.f32.gmra.mxu0 %v572
      %v616 = vpop.f32.mrf.mxu0
      %v617 = vadd.f32 0.0, %v616
      %618 = vmatmul.f32.gmra.mxu0 %v573
      %v619 = vpop.f32.mrf.mxu0
      %v620 = vadd.f32 0.0, %v619
      %621 = vmatmul.f32.gmra.mxu0 %v574
      %v622 = vpop.f32.mrf.mxu0
      %v623 = vadd.f32 0.0, %v622
      %624 = vmatmul.f32.gmra.mxu0 %v575
      %v625 = vpop.f32.mrf.mxu0
      %v626 = vadd.f32 0.0, %v625
      %627 = vmatmul.f32.gmra.mxu0 %v576
      %v628 = vpop.f32.mrf.mxu0
      %v629 = vadd.f32 0.0, %v628
      %630 = vmatmul.f32.gmra.mxu0 %v577
      %v631 = vpop.f32.mrf.mxu0
      %v632 = vadd.f32 0.0, %v631
      %633 = vmatmul.f32.gmra.mxu0 %v578
      %v634 = vpop.f32.mrf.mxu0
      %v635 = vadd.f32 0.0, %v634
      %636 = vmatmul.f32.gmra.mxu0 %v579
      %v637 = vpop.f32.mrf.mxu0
      %v638 = vadd.f32 0.0, %v637
      %639 = vmatmul.f32.gmra.mxu0 %v580
      %v640 = vpop.f32.mrf.mxu0
      %v641 = vadd.f32 0.0, %v640
      %642 = vmatmul.f32.gmra.mxu0 %v581
      %v643 = vpop.f32.mrf.mxu0
      %v644 = vadd.f32 0.0, %v643
      %645 = vmatmul.f32.gmra.mxu0 %v582
      %v646 = vpop.f32.mrf.mxu0
      %v647 = vadd.f32 0.0, %v646
      %648 = vmatmul.f32.gmra.mxu0 %v583
      %v649 = vpop.f32.mrf.mxu0
      %v650 = vadd.f32 0.0, %v649
      %651 = vmatmul.f32.gmra.mxu0 %v584
      %v652 = vpop.f32.mrf.mxu0
      %v653 = vadd.f32 0.0, %v652
      %654 = vmatmul.f32.gmra.mxu0 %v585
      %v655 = vpop.f32.mrf.mxu0
      %v656 = vadd.f32 0.0, %v655
      %657 = vmatmul.f32.gmra.mxu0 %v586
      %v658 = vpop.f32.mrf.mxu0
      %v659 = vadd.f32 0.0, %v658
      %660 = vmatmul.f32.gmra.mxu0 %v587
      %v661 = vpop.f32.mrf.mxu0
      %v662 = vadd.f32 0.0, %v661
      %663 = vmatmul.f32.gmra.mxu0 %v588
      %v664 = vpop.f32.mrf.mxu0
      %v665 = vadd.f32 0.0, %v664
      %666 = vmatmul.f32.gmra.mxu0 %v589
      %v667 = vpop.f32.mrf.mxu0
      %v668 = vadd.f32 0.0, %v667
      %669 = vmatmul.f32.gmra.mxu0 %v590
      %v670 = vpop.f32.mrf.mxu0
      %v671 = vadd.f32 0.0, %v670
      %672 = vmatmul.f32.gmra.mxu0 %v591
      %v673 = vpop.f32.mrf.mxu0
      %v674 = vadd.f32 0.0, %v673
      %675 = vmatmul.f32.gmra.mxu0 %v592
      %v676 = vpop.f32.mrf.mxu0
      %v677 = vadd.f32 0.0, %v676
      %678 = vmatmul.f32.gmra.mxu0 %v593
      %v679 = vpop.f32.mrf.mxu0
      %v680 = vadd.f32 0.0, %v679
      %681 = vmatmul.f32.gmra.mxu0 %v594
      %v682 = vpop.f32.mrf.mxu0
      %v683 = vadd.f32 0.0, %v682
      %684 = vmatmul.f32.gmra.mxu0 %v595
      %v685 = vpop.f32.mrf.mxu0
      %v686 = vadd.f32 0.0, %v685
      %687 = vdwg.mxu0
      %v688 = vld [vmem:[%s313] sm:$0xff]
      %v689 = vld [vmem:[%s313 + $0x8] sm:$0xff]
      %v690 = vld [vmem:[%s313 + $0x10] sm:$0xff]
      %v691 = vld [vmem:[%s313 + $0x18] sm:$0xff]
      %v692 = vld [vmem:[%s313 + $0x20] sm:$0xff]
      %v693 = vld [vmem:[%s313 + $0x28] sm:$0xff]
      %v694 = vld [vmem:[%s313 + $0x30] sm:$0xff]
      %v695 = vld [vmem:[%s313 + $0x38] sm:$0xff]
      %v696 = vld [vmem:[%s313 + $0x40] sm:$0xff]
      %v697 = vld [vmem:[%s313 + $0x48] sm:$0xff]
      %v698 = vld [vmem:[%s313 + $0x50] sm:$0xff]
      %v699 = vld [vmem:[%s313 + $0x58] sm:$0xff]
      %v700 = vld [vmem:[%s313 + $0x60] sm:$0xff]
      %v701 = vld [vmem:[%s313 + $0x68] sm:$0xff]
      %v702 = vld [vmem:[%s313 + $0x70] sm:$0xff]
      %v703 = vld [vmem:[%s313 + $0x78] sm:$0xff]
      %v704 = vld [vmem:[%s313 + $0x80] sm:$0xff]
      %v705 = vld [vmem:[%s313 + $0x88] sm:$0xff]
      %v706 = vld [vmem:[%s313 + $0x90] sm:$0xff]
      %v707 = vld [vmem:[%s313 + $0x98] sm:$0xff]
      %v708 = vld [vmem:[%s313 + $0xa0] sm:$0xff]
      %v709 = vld [vmem:[%s313 + $0xa8] sm:$0xff]
      %v710 = vld [vmem:[%s313 + $0xb0] sm:$0xff]
      %v711 = vld [vmem:[%s313 + $0xb8] sm:$0xff]
      %v712 = vld [vmem:[%s313 + $0xc0] sm:$0xff]
      %713 = vmatpush.msra.mxu0 %v336
      %714 = vmatpush.msra.mxu0 %v335
      %715 = vmatpush.msra.mxu0 %v334
      %716 = vmatpush.msra.mxu0 %v333
      %717 = vmatpush.msra.mxu0 %v332
      %718 = vmatpush.msra.mxu0 %v331
      %719 = vmatpush.msra.mxu0 %v330
      %720 = vmatpush.msra.mxu0 %v329
      %721 = vmatpush.msra.mxu0 %v328
      %722 = vmatpush.msra.mxu0 %v327
      %723 = vmatpush.msra.mxu0 %v326
      %724 = vmatpush.msra.mxu0 %v325
      %725 = vmatpush.msra.mxu0 %v324
      %726 = vmatpush.msra.mxu0 %v323
      %727 = vmatpush.msra.mxu0 %v322
      %728 = vmatpush.msra.mxu0 %v321
      %729 = vmatmul.f32.gmra.mxu0 %v688
      %v730 = vpop.f32.mrf.mxu0
      %v731 = vadd.f32 0.0, %v730
      %732 = vmatmul.f32.gmra.mxu0 %v689
      %v733 = vpop.f32.mrf.mxu0
      %v734 = vadd.f32 0.0, %v733
      %735 = vmatmul.f32.gmra.mxu0 %v690
      %v736 = vpop.f32.mrf.mxu0
      %v737 = vadd.f32 0.0, %v736
      %738 = vmatmul.f32.gmra.mxu0 %v691
      %v739 = vpop.f32.mrf.mxu0
      %v740 = vadd.f32 0.0, %v739
      %741 = vmatmul.f32.gmra.mxu0 %v692
      %v742 = vpop.f32.mrf.mxu0
      %v743 = vadd.f32 0.0, %v742
      %744 = vmatmul.f32.gmra.mxu0 %v693
      %v745 = vpop.f32.mrf.mxu0
      %v746 = vadd.f32 0.0, %v745
      %747 = vmatmul.f32.gmra.mxu0 %v694
      %v748 = vpop.f32.mrf.mxu0
      %v749 = vadd.f32 0.0, %v748
      %750 = vmatmul.f32.gmra.mxu0 %v695
      %v751 = vpop.f32.mrf.mxu0
      %v752 = vadd.f32 0.0, %v751
      %753 = vmatmul.f32.gmra.mxu0 %v696
      %v754 = vpop.f32.mrf.mxu0
      %v755 = vadd.f32 0.0, %v754
      %756 = vmatmul.f32.gmra.mxu0 %v697
      %v757 = vpop.f32.mrf.mxu0
      %v758 = vadd.f32 0.0, %v757
      %759 = vmatmul.f32.gmra.mxu0 %v698
      %v760 = vpop.f32.mrf.mxu0
      %v761 = vadd.f32 0.0, %v760
      %762 = vmatmul.f32.gmra.mxu0 %v699
      %v763 = vpop.f32.mrf.mxu0
      %v764 = vadd.f32 0.0, %v763
      %765 = vmatmul.f32.gmra.mxu0 %v700
      %v766 = vpop.f32.mrf.mxu0
      %v767 = vadd.f32 0.0, %v766
      %768 = vmatmul.f32.gmra.mxu0 %v701
      %v769 = vpop.f32.mrf.mxu0
      %v770 = vadd.f32 0.0, %v769
      %771 = vmatmul.f32.gmra.mxu0 %v702
      %v772 = vpop.f32.mrf.mxu0
      %v773 = vadd.f32 0.0, %v772
      %774 = vmatmul.f32.gmra.mxu0 %v703
      %v775 = vpop.f32.mrf.mxu0
      %v776 = vadd.f32 0.0, %v775
      %777 = vmatmul.f32.gmra.mxu0 %v704
      %v778 = vpop.f32.mrf.mxu0
      %v779 = vadd.f32 0.0, %v778
      %780 = vmatmul.f32.gmra.mxu0 %v705
      %v781 = vpop.f32.mrf.mxu0
      %v782 = vadd.f32 0.0, %v781
      %783 = vmatmul.f32.gmra.mxu0 %v706
      %v784 = vpop.f32.mrf.mxu0
      %v785 = vadd.f32 0.0, %v784
      %786 = vmatmul.f32.gmra.mxu0 %v707
      %v787 = vpop.f32.mrf.mxu0
      %v788 = vadd.f32 0.0, %v787
      %789 = vmatmul.f32.gmra.mxu0 %v708
      %v790 = vpop.f32.mrf.mxu0
      %v791 = vadd.f32 0.0, %v790
      %792 = vmatmul.f32.gmra.mxu0 %v709
      %v793 = vpop.f32.mrf.mxu0
      %v794 = vadd.f32 0.0, %v793
      %795 = vmatmul.f32.gmra.mxu0 %v710
      %v796 = vpop.f32.mrf.mxu0
      %v797 = vadd.f32 0.0, %v796
      %798 = vmatmul.f32.gmra.mxu0 %v711
      %v799 = vpop.f32.mrf.mxu0
      %v800 = vadd.f32 0.0, %v799
      %801 = vmatmul.f32.gmra.mxu0 %v712
      %v802 = vpop.f32.mrf.mxu0
      %v803 = vadd.f32 0.0, %v802
      %804 = vdwg.mxu0
      %v805 = vmax.f32 %v380, %v497
      %v806 = vmax.f32 %v383, %v500
      %v807 = vmax.f32 %v386, %v503
      %v808 = vmax.f32 %v389, %v506
      %v809 = vmax.f32 %v392, %v509
      %v810 = vmax.f32 %v395, %v512
      %v811 = vmax.f32 %v398, %v515
      %v812 = vmax.f32 %v401, %v518
      %v813 = vmax.f32 %v404, %v521
      %v814 = vmax.f32 %v407, %v524
      %v815 = vmax.f32 %v410, %v527
      %v816 = vmax.f32 %v413, %v530
      %v817 = vmax.f32 %v416, %v533
      %v818 = vmax.f32 %v419, %v536
      %v819 = vmax.f32 %v422, %v539
      %v820 = vmax.f32 %v425, %v542
      %v821 = vmax.f32 %v428, %v545
      %v822 = vmax.f32 %v431, %v548
      %v823 = vmax.f32 %v434, %v551
      %v824 = vmax.f32 %v437, %v554
      %v825 = vmax.f32 %v440, %v557
      %v826 = vmax.f32 %v443, %v560
      %v827 = vmax.f32 %v446, %v563
      %v828 = vmax.f32 %v449, %v566
      %v829 = vmax.f32 %v452, %v569
      %v830 = vmax.f32 %v614, %v731
      %v831 = vmax.f32 %v617, %v734
      %v832 = vmax.f32 %v620, %v737
      %v833 = vmax.f32 %v623, %v740
      %v834 = vmax.f32 %v626, %v743
      %v835 = vmax.f32 %v629, %v746
      %v836 = vmax.f32 %v632, %v749
      %v837 = vmax.f32 %v635, %v752
      %v838 = vmax.f32 %v638, %v755
      %v839 = vmax.f32 %v641, %v758
      %v840 = vmax.f32 %v644, %v761
      %v841 = vmax.f32 %v647, %v764
      %v842 = vmax.f32 %v650, %v767
      %v843 = vmax.f32 %v653, %v770
      %v844 = vmax.f32 %v656, %v773
      %v845 = vmax.f32 %v659, %v776
      %v846 = vmax.f32 %v662, %v779
      %v847 = vmax.f32 %v665, %v782
      %v848 = vmax.f32 %v668, %v785
      %v849 = vmax.f32 %v671, %v788
      %v850 = vmax.f32 %v674, %v791
      %v851 = vmax.f32 %v677, %v794
      %v852 = vmax.f32 %v680, %v797
      %v853 = vmax.f32 %v683, %v800
      %v854 = vmax.f32 %v686, %v803
      %v855 = vmax.f32 %v805, %v830
      %v856 = vmax.f32 %v806, %v831
      %v857 = vmax.f32 %v807, %v832
      %v858 = vmax.f32 %v808, %v833
      %v859 = vmax.f32 %v809, %v834
      %v860 = vmax.f32 %v810, %v835
      %v861 = vmax.f32 %v811, %v836
      %v862 = vmax.f32 %v812, %v837
      %v863 = vmax.f32 %v813, %v838
      %v864 = vmax.f32 %v814, %v839
      %v865 = vmax.f32 %v815, %v840
      %v866 = vmax.f32 %v816, %v841
      %v867 = vmax.f32 %v817, %v842
      %v868 = vmax.f32 %v818, %v843
      %v869 = vmax.f32 %v819, %v844
      %v870 = vmax.f32 %v820, %v845
      %v871 = vmax.f32 %v821, %v846
      %v872 = vmax.f32 %v822, %v847
      %v873 = vmax.f32 %v823, %v848
      %v874 = vmax.f32 %v824, %v849
      %v875 = vmax.f32 %v825, %v850
      %v876 = vmax.f32 %v826, %v851
      %v877 = vmax.f32 %v827, %v852
      %v878 = vmax.f32 %v828, %v853
      %v879 = vmax.f32 %v829, %v854
      %v880 = vld [vmem:[%s5] sm:$0x1]
      %v882 = vperm.slane %v880, 0
      %v884 = vadd.f32 %v855, %v882
      %v885 = vadd.f32 %v856, %v882
      %v886 = vadd.f32 %v857, %v882
      %v887 = vadd.f32 %v858, %v882
      %v888 = vadd.f32 %v859, %v882
      %v889 = vadd.f32 %v860, %v882
      %v890 = vadd.f32 %v861, %v882
      %v891 = vadd.f32 %v862, %v882
      %v892 = vadd.f32 %v863, %v882
      %v893 = vadd.f32 %v864, %v882
      %v894 = vadd.f32 %v865, %v882
      %v895 = vadd.f32 %v866, %v882
      %v896 = vadd.f32 %v867, %v882
      %v897 = vadd.f32 %v868, %v882
      %v898 = vadd.f32 %v869, %v882
      %v899 = vadd.f32 %v870, %v882
      %v900 = vadd.f32 %v871, %v882
      %v901 = vadd.f32 %v872, %v882
      %v902 = vadd.f32 %v873, %v882
      %v903 = vadd.f32 %v874, %v882
      %v904 = vadd.f32 %v875, %v882
      %v905 = vadd.f32 %v876, %v882
      %v906 = vadd.f32 %v877, %v882
      %v907 = vadd.f32 %v878, %v882
      %v908 = vadd.f32 %v879, %v882
      %v909 = vmax.f32 %v884, 0.0
      %v910 = vmax.f32 %v885, 0.0
      %v911 = vmax.f32 %v886, 0.0
      %v912 = vmax.f32 %v887, 0.0
      %v913 = vmax.f32 %v888, 0.0
      %v914 = vmax.f32 %v889, 0.0
      %v915 = vmax.f32 %v890, 0.0
      %v916 = vmax.f32 %v891, 0.0
      %v917 = vmax.f32 %v892, 0.0
      %v918 = vmax.f32 %v893, 0.0
      %v919 = vmax.f32 %v894, 0.0
      %v920 = vmax.f32 %v895, 0.0
      %v921 = vmax.f32 %v896, 0.0
      %v922 = vmax.f32 %v897, 0.0
      %v923 = vmax.f32 %v898, 0.0
      %v924 = vmax.f32 %v899, 0.0
      %v925 = vmax.f32 %v900, 0.0
      %v926 = vmax.f32 %v901, 0.0
      %v927 = vmax.f32 %v902, 0.0
      %v928 = vmax.f32 %v903, 0.0
      %v929 = vmax.f32 %v904, 0.0
      %v930 = vmax.f32 %v905, 0.0
      %v931 = vmax.f32 %v906, 0.0
      %v932 = vmax.f32 %v907, 0.0
      %v933 = vmax.f32 %v908, 0.0
      %934 = vst [vmem:[%s319] sm:$0xff] %v909
      %935 = vst [vmem:[%s319 + $0x8] sm:$0xff] %v910
      %936 = vst [vmem:[%s319 + $0x10] sm:$0xff] %v911
      %937 = vst [vmem:[%s319 + $0x18] sm:$0xff] %v912
      %938 = vst [vmem:[%s319 + $0x20] sm:$0xff] %v913
      %939 = vst [vmem:[%s319 + $0x28] sm:$0xff] %v914
      %940 = vst [vmem:[%s319 + $0x30] sm:$0xff] %v915
      %941 = vst [vmem:[%s319 + $0x38] sm:$0xff] %v916
      %942 = vst [vmem:[%s319 + $0x40] sm:$0xff] %v917
      %943 = vst [vmem:[%s319 + $0x48] sm:$0xff] %v918
      %944 = vst [vmem:[%s319 + $0x50] sm:$0xff] %v919
      %945 = vst [vmem:[%s319 + $0x58] sm:$0xff] %v920
      %946 = vst [vmem:[%s319 + $0x60] sm:$0xff] %v921
      %947 = vst [vmem:[%s319 + $0x68] sm:$0xff] %v922
      %948 = vst [vmem:[%s319 + $0x70] sm:$0xff] %v923
      %949 = vst [vmem:[%s319 + $0x78] sm:$0xff] %v924
      %950 = vst [vmem:[%s319 + $0x80] sm:$0xff] %v925
      %951 = vst [vmem:[%s319 + $0x88] sm:$0xff] %v926
      %952 = vst [vmem:[%s319 + $0x90] sm:$0xff] %v927
      %953 = vst [vmem:[%s319 + $0x98] sm:$0xff] %v928
      %954 = vst [vmem:[%s319 + $0xa0] sm:$0xff] %v929
      %955 = vst [vmem:[%s319 + $0xa8] sm:$0xff] %v930
      %956 = vst [vmem:[%s319 + $0xb0] sm:$0xff] %v931
      %957 = vst [vmem:[%s319 + $0xb8] sm:$0xff] %v932
      %958 = vst [vmem:[%s319 + $0xc0] sm:$0xff] %v933
      %s959 = smul.u32 25, %s17
      %p960 = scmp.lt.s32.totalorder %s959, 49
      %s961 = scalar_select %p960, %s959, 49
      %s962 = smul.addr %s961, 8
      %s963 = scalar_lea.vmem %s6, %s962
      // Predicated region
      $region45: #{lenet_forward.3} parent=43 // pred_check
        %p964 = pneg %p181
      $region46: #{lenet_forward.3} parent=43 // pred_check_branch
        %966 = sbr.rel (%p964) target = $region48
      $region47: #{lenet_forward.3} parent=43 // pred_region
        %s967 = smul.u32 25, %s17
      $region48: #{lenet_forward.3} parent=43 // pred_fallthru
        _
    $region44: #{lenet_forward.3} parent=5 // pred_fallthru
      _
    %p968 = scmp.le.s32.totalorder 2, %s12
    // Predicated region
    $region49: #{lenet_forward.3} parent=5 // pred_check
      %p969 = pneg %p968
    $region50: #{lenet_forward.3} parent=5 // pred_check_branch
      %971 = sbr.rel (%p969) target = $region52
    $region51: #{lenet_forward.3} parent=5 // pred_region
      %s972 = ssub.s32 %s12, 2
      // Predicated region
      $region53: #{lenet_forward.3} parent=51 // pred_check
        %p973 = pneg %p187
      $region54: #{lenet_forward.3} parent=51 // pred_check_branch
        %975 = sbr.rel (%p973) target = $region56
      $region55: #{lenet_forward.3} parent=51 // pred_region
        %s976 = smul.u32 25, %s18
        %p977 = scmp.lt.s32.totalorder %s976, 49
        %s978 = scalar_select %p977, %s976, 49
        %s979 = smul.addr %s978, 8
        %s980 = scalar_lea.vmem %s6, %s979
      $region56: #{lenet_forward.3} parent=51 // pred_fallthru
        _
    $region52: #{lenet_forward.3} parent=5 // pred_fallthru
      _
  $region6: #{lenet_forward.3} parent=0 // loop_footer
    %s16 = sadd.s32 1, %s12
  $region7: #{lenet_forward.3} parent=0 // loop_footer_branch
    %11 = sbr.rel target = $region3
  $region8: #{lenet_forward.3} parent=0 // loop_exit
    _

// kernel: lenet_forward.4
$region0: #{lenet_forward.4}
  #allocation0 [shape = 'u32[]', space=smem, size = 0x4, offset = 0x4, fixed_abs, tag = 'smem constant byte address 0x4 - core index']
  #allocation1 [shape = 'u32[72,128]{1,0:T(1,128)}', space=vmem, size = 0x9000, scoped, tag = 'internal scratch']
  %s0 = inlined_call_operand.vmem [shape: f32[56,512], index: 0, kind: input, shape index: {}]
  %s1 = inlined_call_operand.vmem [shape: f32[56,512], index: 1, kind: input, shape index: {}]
  %s2 = inlined_call_operand.vmem [shape: f32[56,512], index: 2, kind: input, shape index: {}]
  %s3 = inlined_call_operand.vmem [shape: f32[56,512], index: 3, kind: input, shape index: {}]
  %s4 = inlined_call_operand.vmem [shape: f32[512,128], index: 4, kind: input, shape index: {}]
  %s5 = inlined_call_operand.vmem [shape: f32[1,128], index: 5, kind: input, shape index: {}]
  %s6 = inlined_call_operand.vmem [shape: f32[56,128], index: 6, kind: output, shape index: {}]
  %s7 = sld [smem:[#allocation0]]
  $region34: #{lenet_forward.4} parent=0
    _
  %s9 = ssub.s32 1, %s7
  %s10 = scalar_select 0, %s9, %s7
  // Predicated region
  $region2: #{lenet_forward.4} parent=0 // pred_check
    _
  $region3: #{lenet_forward.4} parent=0 // pred_check_branch
    %12 = sbr.rel (0) target = $region5
  $region4: #{lenet_forward.4} parent=0 // pred_region
    _
  $region5: #{lenet_forward.4} parent=0 // pred_fallthru
    _
  // Predicated region
  $region6: #{lenet_forward.4} parent=0 // pred_check
    _
  $region7: #{lenet_forward.4} parent=0 // pred_check_branch
    %14 = sbr.rel (0) target = $region9
  $region8: #{lenet_forward.4} parent=0 // pred_region
    _
  $region9: #{lenet_forward.4} parent=0 // pred_fallthru
    _
  // Predicated region
  $region10: #{lenet_forward.4} parent=0 // pred_check
    _
  $region11: #{lenet_forward.4} parent=0 // pred_check_branch
    %16 = sbr.rel (0) target = $region13
  $region12: #{lenet_forward.4} parent=0 // pred_region
    _
  $region13: #{lenet_forward.4} parent=0 // pred_fallthru
    _
  // Predicated region
  $region14: #{lenet_forward.4} parent=0 // pred_check
    _
  $region15: #{lenet_forward.4} parent=0 // pred_check_branch
    %18 = sbr.rel (0) target = $region17
  $region16: #{lenet_forward.4} parent=0 // pred_region
    _
  $region17: #{lenet_forward.4} parent=0 // pred_fallthru
    _
  // Predicated region
  $region18: #{lenet_forward.4} parent=0 // pred_check
    _
  $region19: #{lenet_forward.4} parent=0 // pred_check_branch
    %20 = sbr.rel (0) target = $region21
  $region20: #{lenet_forward.4} parent=0 // pred_region
    _
  $region21: #{lenet_forward.4} parent=0 // pred_fallthru
    _
  // Predicated region
  $region22: #{lenet_forward.4} parent=0 // pred_check
    _
  $region23: #{lenet_forward.4} parent=0 // pred_check_branch
    %22 = sbr.rel (0) target = $region25
  $region24: #{lenet_forward.4} parent=0 // pred_region
    _
  $region25: #{lenet_forward.4} parent=0 // pred_fallthru
    _
  %v23 = vld [vmem:[%s4] sm:$0xff]
  %v24 = vld [vmem:[%s4 + $0x8] sm:$0xff]
  %v25 = vld [vmem:[%s4 + $0x10] sm:$0xff]
  %v26 = vld [vmem:[%s4 + $0x18] sm:$0xff]
  %v27 = vld [vmem:[%s4 + $0x20] sm:$0xff]
  %v28 = vld [vmem:[%s4 + $0x28] sm:$0xff]
  %v29 = vld [vmem:[%s4 + $0x30] sm:$0xff]
  %v30 = vld [vmem:[%s4 + $0x38] sm:$0xff]
  %v31 = vld [vmem:[%s4 + $0x40] sm:$0xff]
  %v32 = vld [vmem:[%s4 + $0x48] sm:$0xff]
  %v33 = vld [vmem:[%s4 + $0x50] sm:$0xff]
  %v34 = vld [vmem:[%s4 + $0x58] sm:$0xff]
  %v35 = vld [vmem:[%s4 + $0x60] sm:$0xff]
  %v36 = vld [vmem:[%s4 + $0x68] sm:$0xff]
  %v37 = vld [vmem:[%s4 + $0x70] sm:$0xff]
  %v38 = vld [vmem:[%s4 + $0x78] sm:$0xff]
  %v39 = vld [vmem:[%s4 + $0x80] sm:$0xff]
  %v40 = vld [vmem:[%s4 + $0x88] sm:$0xff]
  %v41 = vld [vmem:[%s4 + $0x90] sm:$0xff]
  %v42 = vld [vmem:[%s4 + $0x98] sm:$0xff]
  %v43 = vld [vmem:[%s4 + $0xa0] sm:$0xff]
  %v44 = vld [vmem:[%s4 + $0xa8] sm:$0xff]
  %v45 = vld [vmem:[%s4 + $0xb0] sm:$0xff]
  %v46 = vld [vmem:[%s4 + $0xb8] sm:$0xff]
  %v47 = vld [vmem:[%s4 + $0xc0] sm:$0xff]
  %v48 = vld [vmem:[%s4 + $0xc8] sm:$0xff]
  %v49 = vld [vmem:[%s4 + $0xd0] sm:$0xff]
  %v50 = vld [vmem:[%s4 + $0xd8] sm:$0xff]
  %v51 = vld [vmem:[%s4 + $0xe0] sm:$0xff]
  %v52 = vld [vmem:[%s4 + $0xe8] sm:$0xff]
  %v53 = vld [vmem:[%s4 + $0xf0] sm:$0xff]
  %v54 = vld [vmem:[%s4 + $0xf8] sm:$0xff]
  %v55 = vld [vmem:[%s4 + $0x100] sm:$0xff]
  %v56 = vld [vmem:[%s4 + $0x108] sm:$0xff]
  %v57 = vld [vmem:[%s4 + $0x110] sm:$0xff]
  %v58 = vld [vmem:[%s4 + $0x118] sm:$0xff]
  %v59 = vld [vmem:[%s4 + $0x120] sm:$0xff]
  %v60 = vld [vmem:[%s4 + $0x128] sm:$0xff]
  %v61 = vld [vmem:[%s4 + $0x130] sm:$0xff]
  %v62 = vld [vmem:[%s4 + $0x138] sm:$0xff]
  %v63 = vld [vmem:[%s4 + $0x140] sm:$0xff]
  %v64 = vld [vmem:[%s4 + $0x148] sm:$0xff]
  %v65 = vld [vmem:[%s4 + $0x150] sm:$0xff]
  %v66 = vld [vmem:[%s4 + $0x158] sm:$0xff]
  %v67 = vld [vmem:[%s4 + $0x160] sm:$0xff]
  %v68 = vld [vmem:[%s4 + $0x168] sm:$0xff]
  %v69 = vld [vmem:[%s4 + $0x170] sm:$0xff]
  %v70 = vld [vmem:[%s4 + $0x178] sm:$0xff]
  %v71 = vld [vmem:[%s4 + $0x180] sm:$0xff]
  %v72 = vld [vmem:[%s4 + $0x188] sm:$0xff]
  %v73 = vld [vmem:[%s4 + $0x190] sm:$0xff]
  %v74 = vld [vmem:[%s4 + $0x198] sm:$0xff]
  %v75 = vld [vmem:[%s4 + $0x1a0] sm:$0xff]
  %v76 = vld [vmem:[%s4 + $0x1a8] sm:$0xff]
  %v77 = vld [vmem:[%s4 + $0x1b0] sm:$0xff]
  %v78 = vld [vmem:[%s4 + $0x1b8] sm:$0xff]
  %v79 = vld [vmem:[%s4 + $0x1c0] sm:$0xff]
  %v80 = vld [vmem:[%s4 + $0x1c8] sm:$0xff]
  %v81 = vld [vmem:[%s4 + $0x1d0] sm:$0xff]
  %v82 = vld [vmem:[%s4 + $0x1d8] sm:$0xff]
  %v83 = vld [vmem:[%s4 + $0x1e0] sm:$0xff]
  %v84 = vld [vmem:[%s4 + $0x1e8] sm:$0xff]
  %v85 = vld [vmem:[%s4 + $0x1f0] sm:$0xff]
  %v86 = vld [vmem:[%s4 + $0x1f8] sm:$0xff]
  %v87 = vld [vmem:[%s0] sm:$0xff]
  %v88 = vld [vmem:[%s0 + $0x8] sm:$0xff]
  %v89 = vld [vmem:[%s0 + $0x10] sm:$0xff]
  %v90 = vld [vmem:[%s0 + $0x18] sm:$0xff]
  %v91 = vld [vmem:[%s0 + $0x20] sm:$0xff]
  %v92 = vld [vmem:[%s0 + $0x28] sm:$0xff]
  %v93 = vld [vmem:[%s0 + $0x30] sm:$0xff]
  %v94 = vld [vmem:[%s0 + $0x38] sm:$0xff]
  %v95 = vld [vmem:[%s0 + $0x40] sm:$0xff]
  %v96 = vld [vmem:[%s0 + $0x48] sm:$0xff]
  %v97 = vld [vmem:[%s0 + $0x50] sm:$0xff]
  %v98 = vld [vmem:[%s0 + $0x58] sm:$0xff]
  %v99 = vld [vmem:[%s0 + $0x60] sm:$0xff]
  %v100 = vld [vmem:[%s0 + $0x68] sm:$0xff]
  %v101 = vld [vmem:[%s0 + $0x70] sm:$0xff]
  %v102 = vld [vmem:[%s0 + $0x78] sm:$0xff]
  %v103 = vld [vmem:[%s0 + $0x80] sm:$0xff]
  %v104 = vld [vmem:[%s0 + $0x88] sm:$0xff]
  %v105 = vld [vmem:[%s0 + $0x90] sm:$0xff]
  %v106 = vld [vmem:[%s0 + $0x98] sm:$0xff]
  %v107 = vld [vmem:[%s0 + $0xa0] sm:$0xff]
  %v108 = vld [vmem:[%s0 + $0xa8] sm:$0xff]
  %v109 = vld [vmem:[%s0 + $0xb0] sm:$0xff]
  %v110 = vld [vmem:[%s0 + $0xb8] sm:$0xff]
  %v111 = vld [vmem:[%s0 + $0xc0] sm:$0xff]
  %v112 = vld [vmem:[%s0 + $0xc8] sm:$0xff]
  %v113 = vld [vmem:[%s0 + $0xd0] sm:$0xff]
  %v114 = vld [vmem:[%s0 + $0xd8] sm:$0xff]
  %115 = vmatpush.msra.mxu0 %v38
  %116 = vmatpush.msra.mxu0 %v37
  %117 = vmatpush.msra.mxu0 %v36
  %118 = vmatpush.msra.mxu0 %v35
  %119 = vmatpush.msra.mxu0 %v34
  %120 = vmatpush.msra.mxu0 %v33
  %121 = vmatpush.msra.mxu0 %v32
  %122 = vmatpush.msra.mxu0 %v31
  %123 = vmatpush.msra.mxu0 %v30
  %124 = vmatpush.msra.mxu0 %v29
  %125 = vmatpush.msra.mxu0 %v28
  %126 = vmatpush.msra.mxu0 %v27
  %127 = vmatpush.msra.mxu0 %v26
  %128 = vmatpush.msra.mxu0 %v25
  %129 = vmatpush.msra.mxu0 %v24
  %130 = vmatpush.msra.mxu0 %v23
  %131 = vmatmul.f32.gmra.mxu0 %v87
  %v132 = vpop.f32.mrf.mxu0
  %v133 = vadd.f32 0.0, %v132
  %134 = vmatmul.f32.gmra.mxu0 %v91
  %v135 = vpop.f32.mrf.mxu0
  %v136 = vadd.f32 0.0, %v135
  %137 = vmatmul.f32.gmra.mxu0 %v95
  %v138 = vpop.f32.mrf.mxu0
  %v139 = vadd.f32 0.0, %v138
  %140 = vmatmul.f32.gmra.mxu0 %v99
  %v141 = vpop.f32.mrf.mxu0
  %v142 = vadd.f32 0.0, %v141
  %143 = vmatmul.f32.gmra.mxu0 %v103
  %v144 = vpop.f32.mrf.mxu0
  %v145 = vadd.f32 0.0, %v144
  %146 = vmatmul.f32.gmra.mxu0 %v107
  %v147 = vpop.f32.mrf.mxu0
  %v148 = vadd.f32 0.0, %v147
  %149 = vmatmul.f32.gmra.mxu0 %v111
  %v150 = vpop.f32.mrf.mxu0
  %v151 = vadd.f32 0.0, %v150
  %152 = vdwg.mxu0
  %153 = vmatpush.msra.mxu0 %v54
  %154 = vmatpush.msra.mxu0 %v53
  %155 = vmatpush.msra.mxu0 %v52
  %156 = vmatpush.msra.mxu0 %v51
  %157 = vmatpush.msra.mxu0 %v50
  %158 = vmatpush.msra.mxu0 %v49
  %159 = vmatpush.msra.mxu0 %v48
  %160 = vmatpush.msra.mxu0 %v47
  %161 = vmatpush.msra.mxu0 %v46
  %162 = vmatpush.msra.mxu0 %v45
  %163 = vmatpush.msra.mxu0 %v44
  %164 = vmatpush.msra.mxu0 %v43
  %165 = vmatpush.msra.mxu0 %v42
  %166 = vmatpush.msra.mxu0 %v41
  %167 = vmatpush.msra.mxu0 %v40
  %168 = vmatpush.msra.mxu0 %v39
  %169 = vmatmul.f32.gmra.mxu0 %v88
  %v170 = vpop.f32.mrf.mxu0
  %v171 = vadd.f32 %v133, %v170
  %172 = vmatmul.f32.gmra.mxu0 %v92
  %v173 = vpop.f32.mrf.mxu0
  %v174 = vadd.f32 %v136, %v173
  %175 = vmatmul.f32.gmra.mxu0 %v96
  %v176 = vpop.f32.mrf.mxu0
  %v177 = vadd.f32 %v139, %v176
  %178 = vmatmul.f32.gmra.mxu0 %v100
  %v179 = vpop.f32.mrf.mxu0
  %v180 = vadd.f32 %v142, %v179
  %181 = vmatmul.f32.gmra.mxu0 %v104
  %v182 = vpop.f32.mrf.mxu0
  %v183 = vadd.f32 %v145, %v182
  %184 = vmatmul.f32.gmra.mxu0 %v108
  %v185 = vpop.f32.mrf.mxu0
  %v186 = vadd.f32 %v148, %v185
  %187 = vmatmul.f32.gmra.mxu0 %v112
  %v188 = vpop.f32.mrf.mxu0
  %v189 = vadd.f32 %v151, %v188
  %190 = vdwg.mxu0
  %191 = vmatpush.msra.mxu0 %v70
  %192 = vmatpush.msra.mxu0 %v69
  %193 = vmatpush.msra.mxu0 %v68
  %194 = vmatpush.msra.mxu0 %v67
  %195 = vmatpush.msra.mxu0 %v66
  %196 = vmatpush.msra.mxu0 %v65
  %197 = vmatpush.msra.mxu0 %v64
  %198 = vmatpush.msra.mxu0 %v63
  %199 = vmatpush.msra.mxu0 %v62
  %200 = vmatpush.msra.mxu0 %v61
  %201 = vmatpush.msra.mxu0 %v60
  %202 = vmatpush.msra.mxu0 %v59
  %203 = vmatpush.msra.mxu0 %v58
  %204 = vmatpush.msra.mxu0 %v57
  %205 = vmatpush.msra.mxu0 %v56
  %206 = vmatpush.msra.mxu0 %v55
  %207 = vmatmul.f32.gmra.mxu0 %v89
  %v208 = vpop.f32.mrf.mxu0
  %v209 = vadd.f32 %v171, %v208
  %210 = vmatmul.f32.gmra.mxu0 %v93
  %v211 = vpop.f32.mrf.mxu0
  %v212 = vadd.f32 %v174, %v211
  %213 = vmatmul.f32.gmra.mxu0 %v97
  %v214 = vpop.f32.mrf.mxu0
  %v215 = vadd.f32 %v177, %v214
  %216 = vmatmul.f32.gmra.mxu0 %v101
  %v217 = vpop.f32.mrf.mxu0
  %v218 = vadd.f32 %v180, %v217
  %219 = vmatmul.f32.gmra.mxu0 %v105
  %v220 = vpop.f32.mrf.mxu0
  %v221 = vadd.f32 %v183, %v220
  %222 = vmatmul.f32.gmra.mxu0 %v109
  %v223 = vpop.f32.mrf.mxu0
  %v224 = vadd.f32 %v186, %v223
  %225 = vmatmul.f32.gmra.mxu0 %v113
  %v226 = vpop.f32.mrf.mxu0
  %v227 = vadd.f32 %v189, %v226
  %228 = vdwg.mxu0
  %229 = vmatpush.msra.mxu0 %v86
  %230 = vmatpush.msra.mxu0 %v85
  %231 = vmatpush.msra.mxu0 %v84
  %232 = vmatpush.msra.mxu0 %v83
  %233 = vmatpush.msra.mxu0 %v82
  %234 = vmatpush.msra.mxu0 %v81
  %235 = vmatpush.msra.mxu0 %v80
  %236 = vmatpush.msra.mxu0 %v79
  %237 = vmatpush.msra.mxu0 %v78
  %238 = vmatpush.msra.mxu0 %v77
  %239 = vmatpush.msra.mxu0 %v76
  %240 = vmatpush.msra.mxu0 %v75
  %241 = vmatpush.msra.mxu0 %v74
  %242 = vmatpush.msra.mxu0 %v73
  %243 = vmatpush.msra.mxu0 %v72
  %244 = vmatpush.msra.mxu0 %v71
  %245 = vmatmul.f32.gmra.mxu0 %v90
  %v246 = vpop.f32.mrf.mxu0
  %v247 = vadd.f32 %v209, %v246
  %248 = vmatmul.f32.gmra.mxu0 %v94
  %v249 = vpop.f32.mrf.mxu0
  %v250 = vadd.f32 %v212, %v249
  %251 = vmatmul.f32.gmra.mxu0 %v98
  %v252 = vpop.f32.mrf.mxu0
  %v253 = vadd.f32 %v215, %v252
  %254 = vmatmul.f32.gmra.mxu0 %v102
  %v255 = vpop.f32.mrf.mxu0
  %v256 = vadd.f32 %v218, %v255
  %257 = vmatmul.f32.gmra.mxu0 %v106
  %v258 = vpop.f32.mrf.mxu0
  %v259 = vadd.f32 %v221, %v258
  %260 = vmatmul.f32.gmra.mxu0 %v110
  %v261 = vpop.f32.mrf.mxu0
  %v262 = vadd.f32 %v224, %v261
  %263 = vmatmul.f32.gmra.mxu0 %v114
  %v264 = vpop.f32.mrf.mxu0
  %v265 = vadd.f32 %v227, %v264
  %266 = vdwg.mxu0
  %v267 = vld [vmem:[%s1] sm:$0xff]
  %v268 = vld [vmem:[%s1 + $0x8] sm:$0xff]
  %v269 = vld [vmem:[%s1 + $0x10] sm:$0xff]
  %v270 = vld [vmem:[%s1 + $0x18] sm:$0xff]
  %v271 = vld [vmem:[%s1 + $0x20] sm:$0xff]
  %v272 = vld [vmem:[%s1 + $0x28] sm:$0xff]
  %v273 = vld [vmem:[%s1 + $0x30] sm:$0xff]
  %v274 = vld [vmem:[%s1 + $0x38] sm:$0xff]
  %v275 = vld [vmem:[%s1 + $0x40] sm:$0xff]
  %v276 = vld [vmem:[%s1 + $0x48] sm:$0xff]
  %v277 = vld [vmem:[%s1 + $0x50] sm:$0xff]
  %v278 = vld [vmem:[%s1 + $0x58] sm:$0xff]
  %v279 = vld [vmem:[%s1 + $0x60] sm:$0xff]
  %v280 = vld [vmem:[%s1 + $0x68] sm:$0xff]
  %v281 = vld [vmem:[%s1 + $0x70] sm:$0xff]
  %v282 = vld [vmem:[%s1 + $0x78] sm:$0xff]
  %v283 = vld [vmem:[%s1 + $0x80] sm:$0xff]
  %v284 = vld [vmem:[%s1 + $0x88] sm:$0xff]
  %v285 = vld [vmem:[%s1 + $0x90] sm:$0xff]
  %v286 = vld [vmem:[%s1 + $0x98] sm:$0xff]
  %v287 = vld [vmem:[%s1 + $0xa0] sm:$0xff]
  %v288 = vld [vmem:[%s1 + $0xa8] sm:$0xff]
  %v289 = vld [vmem:[%s1 + $0xb0] sm:$0xff]
  %v290 = vld [vmem:[%s1 + $0xb8] sm:$0xff]
  %v291 = vld [vmem:[%s1 + $0xc0] sm:$0xff]
  %v292 = vld [vmem:[%s1 + $0xc8] sm:$0xff]
  %v293 = vld [vmem:[%s1 + $0xd0] sm:$0xff]
  %v294 = vld [vmem:[%s1 + $0xd8] sm:$0xff]
  %295 = vmatpush.msra.mxu0 %v38
  %296 = vmatpush.msra.mxu0 %v37
  %297 = vmatpush.msra.mxu0 %v36
  %298 = vmatpush.msra.mxu0 %v35
  %299 = vmatpush.msra.mxu0 %v34
  %300 = vmatpush.msra.mxu0 %v33
  %301 = vmatpush.msra.mxu0 %v32
  %302 = vmatpush.msra.mxu0 %v31
  %303 = vmatpush.msra.mxu0 %v30
  %304 = vmatpush.msra.mxu0 %v29
  %305 = vmatpush.msra.mxu0 %v28
  %306 = vmatpush.msra.mxu0 %v27
  %307 = vmatpush.msra.mxu0 %v26
  %308 = vmatpush.msra.mxu0 %v25
  %309 = vmatpush.msra.mxu0 %v24
  %310 = vmatpush.msra.mxu0 %v23
  %311 = vmatmul.f32.gmra.mxu0 %v267
  %v312 = vpop.f32.mrf.mxu0
  %v313 = vadd.f32 0.0, %v312
  %314 = vmatmul.f32.gmra.mxu0 %v271
  %v315 = vpop.f32.mrf.mxu0
  %v316 = vadd.f32 0.0, %v315
  %317 = vmatmul.f32.gmra.mxu0 %v275
  %v318 = vpop.f32.mrf.mxu0
  %v319 = vadd.f32 0.0, %v318
  %320 = vmatmul.f32.gmra.mxu0 %v279
  %v321 = vpop.f32.mrf.mxu0
  %v322 = vadd.f32 0.0, %v321
  %323 = vmatmul.f32.gmra.mxu0 %v283
  %v324 = vpop.f32.mrf.mxu0
  %v325 = vadd.f32 0.0, %v324
  %326 = vmatmul.f32.gmra.mxu0 %v287
  %v327 = vpop.f32.mrf.mxu0
  %v328 = vadd.f32 0.0, %v327
  %329 = vmatmul.f32.gmra.mxu0 %v291
  %v330 = vpop.f32.mrf.mxu0
  %v331 = vadd.f32 0.0, %v330
  %332 = vdwg.mxu0
  %333 = vmatpush.msra.mxu0 %v54
  %334 = vmatpush.msra.mxu0 %v53
  %335 = vmatpush.msra.mxu0 %v52
  %336 = vmatpush.msra.mxu0 %v51
  %337 = vmatpush.msra.mxu0 %v50
  %338 = vmatpush.msra.mxu0 %v49
  %339 = vmatpush.msra.mxu0 %v48
  %340 = vmatpush.msra.mxu0 %v47
  %341 = vmatpush.msra.mxu0 %v46
  %342 = vmatpush.msra.mxu0 %v45
  %343 = vmatpush.msra.mxu0 %v44
  %344 = vmatpush.msra.mxu0 %v43
  %345 = vmatpush.msra.mxu0 %v42
  %346 = vmatpush.msra.mxu0 %v41
  %347 = vmatpush.msra.mxu0 %v40
  %348 = vmatpush.msra.mxu0 %v39
  %349 = vmatmul.f32.gmra.mxu0 %v268
  %v350 = vpop.f32.mrf.mxu0
  %v351 = vadd.f32 %v313, %v350
  %352 = vmatmul.f32.gmra.mxu0 %v272
  %v353 = vpop.f32.mrf.mxu0
  %v354 = vadd.f32 %v316, %v353
  %355 = vmatmul.f32.gmra.mxu0 %v276
  %v356 = vpop.f32.mrf.mxu0
  %v357 = vadd.f32 %v319, %v356
  %358 = vmatmul.f32.gmra.mxu0 %v280
  %v359 = vpop.f32.mrf.mxu0
  %v360 = vadd.f32 %v322, %v359
  %361 = vmatmul.f32.gmra.mxu0 %v284
  %v362 = vpop.f32.mrf.mxu0
  %v363 = vadd.f32 %v325, %v362
  %364 = vmatmul.f32.gmra.mxu0 %v288
  %v365 = vpop.f32.mrf.mxu0
  %v366 = vadd.f32 %v328, %v365
  %367 = vmatmul.f32.gmra.mxu0 %v292
  %v368 = vpop.f32.mrf.mxu0
  %v369 = vadd.f32 %v331, %v368
  %370 = vdwg.mxu0
  %371 = vmatpush.msra.mxu0 %v70
  %372 = vmatpush.msra.mxu0 %v69
  %373 = vmatpush.msra.mxu0 %v68
  %374 = vmatpush.msra.mxu0 %v67
  %375 = vmatpush.msra.mxu0 %v66
  %376 = vmatpush.msra.mxu0 %v65
  %377 = vmatpush.msra.mxu0 %v64
  %378 = vmatpush.msra.mxu0 %v63
  %379 = vmatpush.msra.mxu0 %v62
  %380 = vmatpush.msra.mxu0 %v61
  %381 = vmatpush.msra.mxu0 %v60
  %382 = vmatpush.msra.mxu0 %v59
  %383 = vmatpush.msra.mxu0 %v58
  %384 = vmatpush.msra.mxu0 %v57
  %385 = vmatpush.msra.mxu0 %v56
  %386 = vmatpush.msra.mxu0 %v55
  %387 = vmatmul.f32.gmra.mxu0 %v269
  %v388 = vpop.f32.mrf.mxu0
  %v389 = vadd.f32 %v351, %v388
  %390 = vmatmul.f32.gmra.mxu0 %v273
  %v391 = vpop.f32.mrf.mxu0
  %v392 = vadd.f32 %v354, %v391
  %393 = vmatmul.f32.gmra.mxu0 %v277
  %v394 = vpop.f32.mrf.mxu0
  %v395 = vadd.f32 %v357, %v394
  %396 = vmatmul.f32.gmra.mxu0 %v281
  %v397 = vpop.f32.mrf.mxu0
  %v398 = vadd.f32 %v360, %v397
  %399 = vmatmul.f32.gmra.mxu0 %v285
  %v400 = vpop.f32.mrf.mxu0
  %v401 = vadd.f32 %v363, %v400
  %402 = vmatmul.f32.gmra.mxu0 %v289
  %v403 = vpop.f32.mrf.mxu0
  %v404 = vadd.f32 %v366, %v403
  %405 = vmatmul.f32.gmra.mxu0 %v293
  %v406 = vpop.f32.mrf.mxu0
  %v407 = vadd.f32 %v369, %v406
  %408 = vdwg.mxu0
  %409 = vmatpush.msra.mxu0 %v86
  %410 = vmatpush.msra.mxu0 %v85
  %411 = vmatpush.msra.mxu0 %v84
  %412 = vmatpush.msra.mxu0 %v83
  %413 = vmatpush.msra.mxu0 %v82
  %414 = vmatpush.msra.mxu0 %v81
  %415 = vmatpush.msra.mxu0 %v80
  %416 = vmatpush.msra.mxu0 %v79
  %417 = vmatpush.msra.mxu0 %v78
  %418 = vmatpush.msra.mxu0 %v77
  %419 = vmatpush.msra.mxu0 %v76
  %420 = vmatpush.msra.mxu0 %v75
  %421 = vmatpush.msra.mxu0 %v74
  %422 = vmatpush.msra.mxu0 %v73
  %423 = vmatpush.msra.mxu0 %v72
  %424 = vmatpush.msra.mxu0 %v71
  %425 = vmatmul.f32.gmra.mxu0 %v270
  %v426 = vpop.f32.mrf.mxu0
  %v427 = vadd.f32 %v389, %v426
  %428 = vmatmul.f32.gmra.mxu0 %v274
  %v429 = vpop.f32.mrf.mxu0
  %v430 = vadd.f32 %v392, %v429
  %431 = vmatmul.f32.gmra.mxu0 %v278
  %v432 = vpop.f32.mrf.mxu0
  %v433 = vadd.f32 %v395, %v432
  %434 = vmatmul.f32.gmra.mxu0 %v282
  %v435 = vpop.f32.mrf.mxu0
  %v436 = vadd.f32 %v398, %v435
  %437 = vmatmul.f32.gmra.mxu0 %v286
  %v438 = vpop.f32.mrf.mxu0
  %v439 = vadd.f32 %v401, %v438
  %440 = vmatmul.f32.gmra.mxu0 %v290
  %v441 = vpop.f32.mrf.mxu0
  %v442 = vadd.f32 %v404, %v441
  %443 = vmatmul.f32.gmra.mxu0 %v294
  %v444 = vpop.f32.mrf.mxu0
  %v445 = vadd.f32 %v407, %v444
  %446 = vdwg.mxu0
  %v447 = vld [vmem:[%s2] sm:$0xff]
  %v448 = vld [vmem:[%s2 + $0x8] sm:$0xff]
  %v449 = vld [vmem:[%s2 + $0x10] sm:$0xff]
  %v450 = vld [vmem:[%s2 + $0x18] sm:$0xff]
  %v451 = vld [vmem:[%s2 + $0x20] sm:$0xff]
  %v452 = vld [vmem:[%s2 + $0x28] sm:$0xff]
  %v453 = vld [vmem:[%s2 + $0x30] sm:$0xff]
  %v454 = vld [vmem:[%s2 + $0x38] sm:$0xff]
  %v455 = vld [vmem:[%s2 + $0x40] sm:$0xff]
  %v456 = vld [vmem:[%s2 + $0x48] sm:$0xff]
  %v457 = vld [vmem:[%s2 + $0x50] sm:$0xff]
  %v458 = vld [vmem:[%s2 + $0x58] sm:$0xff]
  %v459 = vld [vmem:[%s2 + $0x60] sm:$0xff]
  %v460 = vld [vmem:[%s2 + $0x68] sm:$0xff]
  %v461 = vld [vmem:[%s2 + $0x70] sm:$0xff]
  %v462 = vld [vmem:[%s2 + $0x78] sm:$0xff]
  %v463 = vld [vmem:[%s2 + $0x80] sm:$0xff]
  %v464 = vld [vmem:[%s2 + $0x88] sm:$0xff]
  %v465 = vld [vmem:[%s2 + $0x90] sm:$0xff]
  %v466 = vld [vmem:[%s2 + $0x98] sm:$0xff]
  %v467 = vld [vmem:[%s2 + $0xa0] sm:$0xff]
  %v468 = vld [vmem:[%s2 + $0xa8] sm:$0xff]
  %v469 = vld [vmem:[%s2 + $0xb0] sm:$0xff]
  %v470 = vld [vmem:[%s2 + $0xb8] sm:$0xff]
  %v471 = vld [vmem:[%s2 + $0xc0] sm:$0xff]
  %v472 = vld [vmem:[%s2 + $0xc8] sm:$0xff]
  %v473 = vld [vmem:[%s2 + $0xd0] sm:$0xff]
  %v474 = vld [vmem:[%s2 + $0xd8] sm:$0xff]
  %475 = vmatpush.msra.mxu0 %v38
  %476 = vmatpush.msra.mxu0 %v37
  %477 = vmatpush.msra.mxu0 %v36
  %478 = vmatpush.msra.mxu0 %v35
  %479 = vmatpush.msra.mxu0 %v34
  %480 = vmatpush.msra.mxu0 %v33
  %481 = vmatpush.msra.mxu0 %v32
  %482 = vmatpush.msra.mxu0 %v31
  %483 = vmatpush.msra.mxu0 %v30
  %484 = vmatpush.msra.mxu0 %v29
  %485 = vmatpush.msra.mxu0 %v28
  %486 = vmatpush.msra.mxu0 %v27
  %487 = vmatpush.msra.mxu0 %v26
  %488 = vmatpush.msra.mxu0 %v25
  %489 = vmatpush.msra.mxu0 %v24
  %490 = vmatpush.msra.mxu0 %v23
  %491 = vmatmul.f32.gmra.mxu0 %v447
  %v492 = vpop.f32.mrf.mxu0
  %v493 = vadd.f32 0.0, %v492
  %494 = vmatmul.f32.gmra.mxu0 %v451
  %v495 = vpop.f32.mrf.mxu0
  %v496 = vadd.f32 0.0, %v495
  %497 = vmatmul.f32.gmra.mxu0 %v455
  %v498 = vpop.f32.mrf.mxu0
  %v499 = vadd.f32 0.0, %v498
  %500 = vmatmul.f32.gmra.mxu0 %v459
  %v501 = vpop.f32.mrf.mxu0
  %v502 = vadd.f32 0.0, %v501
  %503 = vmatmul.f32.gmra.mxu0 %v463
  %v504 = vpop.f32.mrf.mxu0
  %v505 = vadd.f32 0.0, %v504
  %506 = vmatmul.f32.gmra.mxu0 %v467
  %v507 = vpop.f32.mrf.mxu0
  %v508 = vadd.f32 0.0, %v507
  %509 = vmatmul.f32.gmra.mxu0 %v471
  %v510 = vpop.f32.mrf.mxu0
  %v511 = vadd.f32 0.0, %v510
  %512 = vdwg.mxu0
  %513 = vmatpush.msra.mxu0 %v54
  %514 = vmatpush.msra.mxu0 %v53
  %515 = vmatpush.msra.mxu0 %v52
  %516 = vmatpush.msra.mxu0 %v51
  %517 = vmatpush.msra.mxu0 %v50
  %518 = vmatpush.msra.mxu0 %v49
  %519 = vmatpush.msra.mxu0 %v48
  %520 = vmatpush.msra.mxu0 %v47
  %521 = vmatpush.msra.mxu0 %v46
  %522 = vmatpush.msra.mxu0 %v45
  %523 = vmatpush.msra.mxu0 %v44
  %524 = vmatpush.msra.mxu0 %v43
  %525 = vmatpush.msra.mxu0 %v42
  %526 = vmatpush.msra.mxu0 %v41
  %527 = vmatpush.msra.mxu0 %v40
  %528 = vmatpush.msra.mxu0 %v39
  %529 = vmatmul.f32.gmra.mxu0 %v448
  %v530 = vpop.f32.mrf.mxu0
  %v531 = vadd.f32 %v493, %v530
  %532 = vmatmul.f32.gmra.mxu0 %v452
  %v533 = vpop.f32.mrf.mxu0
  %v534 = vadd.f32 %v496, %v533
  %535 = vmatmul.f32.gmra.mxu0 %v456
  %v536 = vpop.f32.mrf.mxu0
  %v537 = vadd.f32 %v499, %v536
  %538 = vmatmul.f32.gmra.mxu0 %v460
  %v539 = vpop.f32.mrf.mxu0
  %v540 = vadd.f32 %v502, %v539
  %541 = vmatmul.f32.gmra.mxu0 %v464
  %v542 = vpop.f32.mrf.mxu0
  %v543 = vadd.f32 %v505, %v542
  %544 = vmatmul.f32.gmra.mxu0 %v468
  %v545 = vpop.f32.mrf.mxu0
  %v546 = vadd.f32 %v508, %v545
  %547 = vmatmul.f32.gmra.mxu0 %v472
  %v548 = vpop.f32.mrf.mxu0
  %v549 = vadd.f32 %v511, %v548
  %550 = vdwg.mxu0
  %551 = vmatpush.msra.mxu0 %v70
  %552 = vmatpush.msra.mxu0 %v69
  %553 = vmatpush.msra.mxu0 %v68
  %554 = vmatpush.msra.mxu0 %v67
  %555 = vmatpush.msra.mxu0 %v66
  %556 = vmatpush.msra.mxu0 %v65
  %557 = vmatpush.msra.mxu0 %v64
  %558 = vmatpush.msra.mxu0 %v63
  %559 = vmatpush.msra.mxu0 %v62
  %560 = vmatpush.msra.mxu0 %v61
  %561 = vmatpush.msra.mxu0 %v60
  %562 = vmatpush.msra.mxu0 %v59
  %563 = vmatpush.msra.mxu0 %v58
  %564 = vmatpush.msra.mxu0 %v57
  %565 = vmatpush.msra.mxu0 %v56
  %566 = vmatpush.msra.mxu0 %v55
  %567 = vmatmul.f32.gmra.mxu0 %v449
  %v568 = vpop.f32.mrf.mxu0
  %v569 = vadd.f32 %v531, %v568
  %570 = vmatmul.f32.gmra.mxu0 %v453
  %v571 = vpop.f32.mrf.mxu0
  %v572 = vadd.f32 %v534, %v571
  %573 = vmatmul.f32.gmra.mxu0 %v457
  %v574 = vpop.f32.mrf.mxu0
  %v575 = vadd.f32 %v537, %v574
  %576 = vmatmul.f32.gmra.mxu0 %v461
  %v577 = vpop.f32.mrf.mxu0
  %v578 = vadd.f32 %v540, %v577
  %579 = vmatmul.f32.gmra.mxu0 %v465
  %v580 = vpop.f32.mrf.mxu0
  %v581 = vadd.f32 %v543, %v580
  %582 = vmatmul.f32.gmra.mxu0 %v469
  %v583 = vpop.f32.mrf.mxu0
  %v584 = vadd.f32 %v546, %v583
  %585 = vmatmul.f32.gmra.mxu0 %v473
  %v586 = vpop.f32.mrf.mxu0
  %v587 = vadd.f32 %v549, %v586
  %588 = vdwg.mxu0
  %589 = vmatpush.msra.mxu0 %v86
  %590 = vmatpush.msra.mxu0 %v85
  %591 = vmatpush.msra.mxu0 %v84
  %592 = vmatpush.msra.mxu0 %v83
  %593 = vmatpush.msra.mxu0 %v82
  %594 = vmatpush.msra.mxu0 %v81
  %595 = vmatpush.msra.mxu0 %v80
  %596 = vmatpush.msra.mxu0 %v79
  %597 = vmatpush.msra.mxu0 %v78
  %598 = vmatpush.msra.mxu0 %v77
  %599 = vmatpush.msra.mxu0 %v76
  %600 = vmatpush.msra.mxu0 %v75
  %601 = vmatpush.msra.mxu0 %v74
  %602 = vmatpush.msra.mxu0 %v73
  %603 = vmatpush.msra.mxu0 %v72
  %604 = vmatpush.msra.mxu0 %v71
  %605 = vmatmul.f32.gmra.mxu0 %v450
  %v606 = vpop.f32.mrf.mxu0
  %v607 = vadd.f32 %v569, %v606
  %608 = vmatmul.f32.gmra.mxu0 %v454
  %v609 = vpop.f32.mrf.mxu0
  %v610 = vadd.f32 %v572, %v609
  %611 = vmatmul.f32.gmra.mxu0 %v458
  %v612 = vpop.f32.mrf.mxu0
  %v613 = vadd.f32 %v575, %v612
  %614 = vmatmul.f32.gmra.mxu0 %v462
  %v615 = vpop.f32.mrf.mxu0
  %v616 = vadd.f32 %v578, %v615
  %617 = vmatmul.f32.gmra.mxu0 %v466
  %v618 = vpop.f32.mrf.mxu0
  %v619 = vadd.f32 %v581, %v618
  %620 = vmatmul.f32.gmra.mxu0 %v470
  %v621 = vpop.f32.mrf.mxu0
  %v622 = vadd.f32 %v584, %v621
  %623 = vmatmul.f32.gmra.mxu0 %v474
  %v624 = vpop.f32.mrf.mxu0
  %v625 = vadd.f32 %v587, %v624
  %626 = vdwg.mxu0
  %v627 = vld [vmem:[%s3] sm:$0xff]
  %v628 = vld [vmem:[%s3 + $0x8] sm:$0xff]
  %v629 = vld [vmem:[%s3 + $0x10] sm:$0xff]
  %v630 = vld [vmem:[%s3 + $0x18] sm:$0xff]
  %v631 = vld [vmem:[%s3 + $0x20] sm:$0xff]
  %v632 = vld [vmem:[%s3 + $0x28] sm:$0xff]
  %v633 = vld [vmem:[%s3 + $0x30] sm:$0xff]
  %v634 = vld [vmem:[%s3 + $0x38] sm:$0xff]
  %v635 = vld [vmem:[%s3 + $0x40] sm:$0xff]
  %v636 = vld [vmem:[%s3 + $0x48] sm:$0xff]
  %v637 = vld [vmem:[%s3 + $0x50] sm:$0xff]
  %v638 = vld [vmem:[%s3 + $0x58] sm:$0xff]
  %v639 = vld [vmem:[%s3 + $0x60] sm:$0xff]
  %v640 = vld [vmem:[%s3 + $0x68] sm:$0xff]
  %v641 = vld [vmem:[%s3 + $0x70] sm:$0xff]
  %v642 = vld [vmem:[%s3 + $0x78] sm:$0xff]
  %v643 = vld [vmem:[%s3 + $0x80] sm:$0xff]
  %v644 = vld [vmem:[%s3 + $0x88] sm:$0xff]
  %v645 = vld [vmem:[%s3 + $0x90] sm:$0xff]
  %v646 = vld [vmem:[%s3 + $0x98] sm:$0xff]
  %v647 = vld [vmem:[%s3 + $0xa0] sm:$0xff]
  %v648 = vld [vmem:[%s3 + $0xa8] sm:$0xff]
  %v649 = vld [vmem:[%s3 + $0xb0] sm:$0xff]
  %v650 = vld [vmem:[%s3 + $0xb8] sm:$0xff]
  %v651 = vld [vmem:[%s3 + $0xc0] sm:$0xff]
  %v652 = vld [vmem:[%s3 + $0xc8] sm:$0xff]
  %v653 = vld [vmem:[%s3 + $0xd0] sm:$0xff]
  %v654 = vld [vmem:[%s3 + $0xd8] sm:$0xff]
  %655 = vmatpush.msra.mxu0 %v38
  %656 = vmatpush.msra.mxu0 %v37
  %657 = vmatpush.msra.mxu0 %v36
  %658 = vmatpush.msra.mxu0 %v35
  %659 = vmatpush.msra.mxu0 %v34
  %660 = vmatpush.msra.mxu0 %v33
  %661 = vmatpush.msra.mxu0 %v32
  %662 = vmatpush.msra.mxu0 %v31
  %663 = vmatpush.msra.mxu0 %v30
  %664 = vmatpush.msra.mxu0 %v29
  %665 = vmatpush.msra.mxu0 %v28
  %666 = vmatpush.msra.mxu0 %v27
  %667 = vmatpush.msra.mxu0 %v26
  %668 = vmatpush.msra.mxu0 %v25
  %669 = vmatpush.msra.mxu0 %v24
  %670 = vmatpush.msra.mxu0 %v23
  %671 = vmatmul.f32.gmra.mxu0 %v627
  %v672 = vpop.f32.mrf.mxu0
  %v673 = vadd.f32 0.0, %v672
  %674 = vmatmul.f32.gmra.mxu0 %v631
  %v675 = vpop.f32.mrf.mxu0
  %v676 = vadd.f32 0.0, %v675
  %677 = vmatmul.f32.gmra.mxu0 %v635
  %v678 = vpop.f32.mrf.mxu0
  %v679 = vadd.f32 0.0, %v678
  %680 = vmatmul.f32.gmra.mxu0 %v639
  %v681 = vpop.f32.mrf.mxu0
  %v682 = vadd.f32 0.0, %v681
  %683 = vmatmul.f32.gmra.mxu0 %v643
  %v684 = vpop.f32.mrf.mxu0
  %v685 = vadd.f32 0.0, %v684
  %686 = vmatmul.f32.gmra.mxu0 %v647
  %v687 = vpop.f32.mrf.mxu0
  %v688 = vadd.f32 0.0, %v687
  %689 = vmatmul.f32.gmra.mxu0 %v651
  %v690 = vpop.f32.mrf.mxu0
  %v691 = vadd.f32 0.0, %v690
  %692 = vdwg.mxu0
  %693 = vmatpush.msra.mxu0 %v54
  %694 = vmatpush.msra.mxu0 %v53
  %695 = vmatpush.msra.mxu0 %v52
  %696 = vmatpush.msra.mxu0 %v51
  %697 = vmatpush.msra.mxu0 %v50
  %698 = vmatpush.msra.mxu0 %v49
  %699 = vmatpush.msra.mxu0 %v48
  %700 = vmatpush.msra.mxu0 %v47
  %701 = vmatpush.msra.mxu0 %v46
  %702 = vmatpush.msra.mxu0 %v45
  %703 = vmatpush.msra.mxu0 %v44
  %704 = vmatpush.msra.mxu0 %v43
  %705 = vmatpush.msra.mxu0 %v42
  %706 = vmatpush.msra.mxu0 %v41
  %707 = vmatpush.msra.mxu0 %v40
  %708 = vmatpush.msra.mxu0 %v39
  %709 = vmatmul.f32.gmra.mxu0 %v628
  %v710 = vpop.f32.mrf.mxu0
  %v711 = vadd.f32 %v673, %v710
  %712 = vmatmul.f32.gmra.mxu0 %v632
  %v713 = vpop.f32.mrf.mxu0
  %v714 = vadd.f32 %v676, %v713
  %715 = vmatmul.f32.gmra.mxu0 %v636
  %v716 = vpop.f32.mrf.mxu0
  %v717 = vadd.f32 %v679, %v716
  %718 = vmatmul.f32.gmra.mxu0 %v640
  %v719 = vpop.f32.mrf.mxu0
  %v720 = vadd.f32 %v682, %v719
  %721 = vmatmul.f32.gmra.mxu0 %v644
  %v722 = vpop.f32.mrf.mxu0
  %v723 = vadd.f32 %v685, %v722
  %724 = vmatmul.f32.gmra.mxu0 %v648
  %v725 = vpop.f32.mrf.mxu0
  %v726 = vadd.f32 %v688, %v725
  %727 = vmatmul.f32.gmra.mxu0 %v652
  %v728 = vpop.f32.mrf.mxu0
  %v729 = vadd.f32 %v691, %v728
  %730 = vdwg.mxu0
  %731 = vmatpush.msra.mxu0 %v70
  %732 = vmatpush.msra.mxu0 %v69
  %733 = vmatpush.msra.mxu0 %v68
  %734 = vmatpush.msra.mxu0 %v67
  %735 = vmatpush.msra.mxu0 %v66
  %736 = vmatpush.msra.mxu0 %v65
  %737 = vmatpush.msra.mxu0 %v64
  %738 = vmatpush.msra.mxu0 %v63
  %739 = vmatpush.msra.mxu0 %v62
  %740 = vmatpush.msra.mxu0 %v61
  %741 = vmatpush.msra.mxu0 %v60
  %742 = vmatpush.msra.mxu0 %v59
  %743 = vmatpush.msra.mxu0 %v58
  %744 = vmatpush.msra.mxu0 %v57
  %745 = vmatpush.msra.mxu0 %v56
  %746 = vmatpush.msra.mxu0 %v55
  %747 = vmatmul.f32.gmra.mxu0 %v629
  %v748 = vpop.f32.mrf.mxu0
  %v749 = vadd.f32 %v711, %v748
  %750 = vmatmul.f32.gmra.mxu0 %v633
  %v751 = vpop.f32.mrf.mxu0
  %v752 = vadd.f32 %v714, %v751
  %753 = vmatmul.f32.gmra.mxu0 %v637
  %v754 = vpop.f32.mrf.mxu0
  %v755 = vadd.f32 %v717, %v754
  %756 = vmatmul.f32.gmra.mxu0 %v641
  %v757 = vpop.f32.mrf.mxu0
  %v758 = vadd.f32 %v720, %v757
  %759 = vmatmul.f32.gmra.mxu0 %v645
  %v760 = vpop.f32.mrf.mxu0
  %v761 = vadd.f32 %v723, %v760
  %762 = vmatmul.f32.gmra.mxu0 %v649
  %v763 = vpop.f32.mrf.mxu0
  %v764 = vadd.f32 %v726, %v763
  %765 = vmatmul.f32.gmra.mxu0 %v653
  %v766 = vpop.f32.mrf.mxu0
  %v767 = vadd.f32 %v729, %v766
  %768 = vdwg.mxu0
  %769 = vmatpush.msra.mxu0 %v86
  %770 = vmatpush.msra.mxu0 %v85
  %771 = vmatpush.msra.mxu0 %v84
  %772 = vmatpush.msra.mxu0 %v83
  %773 = vmatpush.msra.mxu0 %v82
  %774 = vmatpush.msra.mxu0 %v81
  %775 = vmatpush.msra.mxu0 %v80
  %776 = vmatpush.msra.mxu0 %v79
  %777 = vmatpush.msra.mxu0 %v78
  %778 = vmatpush.msra.mxu0 %v77
  %779 = vmatpush.msra.mxu0 %v76
  %780 = vmatpush.msra.mxu0 %v75
  %781 = vmatpush.msra.mxu0 %v74
  %782 = vmatpush.msra.mxu0 %v73
  %783 = vmatpush.msra.mxu0 %v72
  %784 = vmatpush.msra.mxu0 %v71
  %785 = vmatmul.f32.gmra.mxu0 %v630
  %v786 = vpop.f32.mrf.mxu0
  %v787 = vadd.f32 %v749, %v786
  %788 = vmatmul.f32.gmra.mxu0 %v634
  %v789 = vpop.f32.mrf.mxu0
  %v790 = vadd.f32 %v752, %v789
  %791 = vmatmul.f32.gmra.mxu0 %v638
  %v792 = vpop.f32.mrf.mxu0
  %v793 = vadd.f32 %v755, %v792
  %794 = vmatmul.f32.gmra.mxu0 %v642
  %v795 = vpop.f32.mrf.mxu0
  %v796 = vadd.f32 %v758, %v795
  %797 = vmatmul.f32.gmra.mxu0 %v646
  %v798 = vpop.f32.mrf.mxu0
  %v799 = vadd.f32 %v761, %v798
  %800 = vmatmul.f32.gmra.mxu0 %v650
  %v801 = vpop.f32.mrf.mxu0
  %v802 = vadd.f32 %v764, %v801
  %803 = vmatmul.f32.gmra.mxu0 %v654
  %v804 = vpop.f32.mrf.mxu0
  %v805 = vadd.f32 %v767, %v804
  %806 = vdwg.mxu0
  %v807 = vmax.f32 %v247, %v427
  %v808 = vmax.f32 %v250, %v430
  %v809 = vmax.f32 %v253, %v433
  %v810 = vmax.f32 %v256, %v436
  %v811 = vmax.f32 %v259, %v439
  %v812 = vmax.f32 %v262, %v442
  %v813 = vmax.f32 %v265, %v445
  %v814 = vmax.f32 %v607, %v787
  %v815 = vmax.f32 %v610, %v790
  %v816 = vmax.f32 %v613, %v793
  %v817 = vmax.f32 %v616, %v796
  %v818 = vmax.f32 %v619, %v799
  %v819 = vmax.f32 %v622, %v802
  %v820 = vmax.f32 %v625, %v805
  %v821 = vmax.f32 %v807, %v814
  %v822 = vmax.f32 %v808, %v815
  %v823 = vmax.f32 %v809, %v816
  %v824 = vmax.f32 %v810, %v817
  %v825 = vmax.f32 %v811, %v818
  %v826 = vmax.f32 %v812, %v819
  %v827 = vmax.f32 %v813, %v820
  %v828 = vld [vmem:[%s5] sm:$0x1]
  %v830 = vperm.slane %v828, 0
  %v832 = vadd.f32 %v821, %v830
  %v833 = vadd.f32 %v822, %v830
  %v834 = vadd.f32 %v823, %v830
  %v835 = vadd.f32 %v824, %v830
  %v836 = vadd.f32 %v825, %v830
  %v837 = vadd.f32 %v826, %v830
  %v838 = vadd.f32 %v827, %v830
  %v839 = vmax.f32 %v832, 0.0
  %v840 = vmax.f32 %v833, 0.0
  %v841 = vmax.f32 %v834, 0.0
  %v842 = vmax.f32 %v835, 0.0
  %v843 = vmax.f32 %v836, 0.0
  %v844 = vmax.f32 %v837, 0.0
  %v845 = vmax.f32 %v838, 0.0
  %846 = vst [vmem:[%s6] sm:$0xff] %v839
  %847 = vst [vmem:[%s6 + $0x8] sm:$0xff] %v840
  %848 = vst [vmem:[%s6 + $0x10] sm:$0xff] %v841
  %849 = vst [vmem:[%s6 + $0x18] sm:$0xff] %v842
  %850 = vst [vmem:[%s6 + $0x20] sm:$0xff] %v843
  %851 = vst [vmem:[%s6 + $0x28] sm:$0xff] %v844
  %852 = vst [vmem:[%s6 + $0x30] sm:$0xff] %v845
  // Predicated region
  $region26: #{lenet_forward.4} parent=0 // pred_check
    _
  $region27: #{lenet_forward.4} parent=0 // pred_check_branch
    %854 = sbr.rel (0) target = $region29
  $region28: #{lenet_forward.4} parent=0 // pred_region
    _
  $region29: #{lenet_forward.4} parent=0 // pred_fallthru
    _
  // Predicated region
  $region30: #{lenet_forward.4} parent=0 // pred_check
    _
  $region31: #{lenet_forward.4} parent=0 // pred_check_branch
    %856 = sbr.rel (0) target = $region33
  $region32: #{lenet_forward.4} parent=0 // pred_region
    _
  $region33: #{lenet_forward.4} parent=0 // pred_fallthru
    _

// kernel: lenet_forward.5
$region0: #{lenet_forward.5}
  #allocation0 [shape = 'u32[]', space=smem, size = 0x4, offset = 0x4, fixed_abs, tag = 'smem constant byte address 0x4 - core index']
  #allocation1 [shape = 'u32[72,128]{1,0:T(1,128)}', space=vmem, size = 0x9000, scoped, tag = 'internal scratch']
  %s0 = inlined_call_operand.vmem [shape: f32[8,3200], index: 0, kind: input, shape index: {}]
  %s1 = inlined_call_operand.vmem [shape: f32[3200,128], index: 1, kind: input, shape index: {}]
  %s2 = inlined_call_operand.vmem [shape: f32[1,128], index: 2, kind: input, shape index: {}]
  %s3 = inlined_call_operand.vmem [shape: f32[128,128], index: 3, kind: input, shape index: {}]
  %s4 = inlined_call_operand.vmem [shape: f32[1,128], index: 4, kind: input, shape index: {}]
  %s5 = inlined_call_operand.vmem [shape: f32[128,128], index: 5, kind: input, shape index: {}]
  %s6 = inlined_call_operand.vmem [shape: f32[1,128], index: 6, kind: input, shape index: {}]
  %s7 = inlined_call_operand.vmem [shape: f32[8,128], index: 7, kind: output, shape index: {}]
  %s8 = sld [smem:[#allocation0]]
  $region38: #{lenet_forward.5} parent=0
    _
  %s10 = ssub.s32 1, %s8
  %s11 = scalar_select 0, %s10, %s8
  // Predicated region
  $region2: #{lenet_forward.5} parent=0 // pred_check
    _
  $region3: #{lenet_forward.5} parent=0 // pred_check_branch
    %13 = sbr.rel (0) target = $region5
  $region4: #{lenet_forward.5} parent=0 // pred_region
    _
  $region5: #{lenet_forward.5} parent=0 // pred_fallthru
    _
  // Predicated region
  $region6: #{lenet_forward.5} parent=0 // pred_check
    _
  $region7: #{lenet_forward.5} parent=0 // pred_check_branch
    %15 = sbr.rel (0) target = $region9
  $region8: #{lenet_forward.5} parent=0 // pred_region
    _
  $region9: #{lenet_forward.5} parent=0 // pred_fallthru
    _
  // Predicated region
  $region10: #{lenet_forward.5} parent=0 // pred_check
    _
  $region11: #{lenet_forward.5} parent=0 // pred_check_branch
    %17 = sbr.rel (0) target = $region13
  $region12: #{lenet_forward.5} parent=0 // pred_region
    _
  $region13: #{lenet_forward.5} parent=0 // pred_fallthru
    _
  // Predicated region
  $region14: #{lenet_forward.5} parent=0 // pred_check
    _
  $region15: #{lenet_forward.5} parent=0 // pred_check_branch
    %19 = sbr.rel (0) target = $region17
  $region16: #{lenet_forward.5} parent=0 // pred_region
    _
  $region17: #{lenet_forward.5} parent=0 // pred_fallthru
    _
  // Predicated region
  $region18: #{lenet_forward.5} parent=0 // pred_check
    _
  $region19: #{lenet_forward.5} parent=0 // pred_check_branch
    %21 = sbr.rel (0) target = $region21
  $region20: #{lenet_forward.5} parent=0 // pred_region
    _
  $region21: #{lenet_forward.5} parent=0 // pred_fallthru
    _
  // Predicated region
  $region22: #{lenet_forward.5} parent=0 // pred_check
    _
  $region23: #{lenet_forward.5} parent=0 // pred_check_branch
    %23 = sbr.rel (0) target = $region25
  $region24: #{lenet_forward.5} parent=0 // pred_region
    _
  $region25: #{lenet_forward.5} parent=0 // pred_fallthru
    _
  // Predicated region
  $region26: #{lenet_forward.5} parent=0 // pred_check
    _
  $region27: #{lenet_forward.5} parent=0 // pred_check_branch
    %25 = sbr.rel (0) target = $region29
  $region28: #{lenet_forward.5} parent=0 // pred_region
    _
  $region29: #{lenet_forward.5} parent=0 // pred_fallthru
    _
  %v26 = vld [vmem:[%s0] sm:$0xff]
  %v27 = vld [vmem:[%s0 + $0x8] sm:$0xff]
  %v28 = vld [vmem:[%s0 + $0x10] sm:$0xff]
  %v29 = vld [vmem:[%s0 + $0x18] sm:$0xff]
  %v30 = vld [vmem:[%s0 + $0x20] sm:$0xff]
  %v31 = vld [vmem:[%s0 + $0x28] sm:$0xff]
  %v32 = vld [vmem:[%s0 + $0x30] sm:$0xff]
  %v33 = vld [vmem:[%s0 + $0x38] sm:$0xff]
  %v34 = vld [vmem:[%s0 + $0x40] sm:$0xff]
  %v35 = vld [vmem:[%s0 + $0x48] sm:$0xff]
  %v36 = vld [vmem:[%s0 + $0x50] sm:$0xff]
  %v37 = vld [vmem:[%s0 + $0x58] sm:$0xff]
  %v38 = vld [vmem:[%s0 + $0x60] sm:$0xff]
  %v39 = vld [vmem:[%s0 + $0x68] sm:$0xff]
  %v40 = vld [vmem:[%s0 + $0x70] sm:$0xff]
  %v41 = vld [vmem:[%s0 + $0x78] sm:$0xff]
  %v42 = vld [vmem:[%s0 + $0x80] sm:$0xff]
  %v43 = vld [vmem:[%s0 + $0x88] sm:$0xff]
  %v44 = vld [vmem:[%s0 + $0x90] sm:$0xff]
  %v45 = vld [vmem:[%s0 + $0x98] sm:$0xff]
  %v46 = vld [vmem:[%s0 + $0xa0] sm:$0xff]
  %v47 = vld [vmem:[%s0 + $0xa8] sm:$0xff]
  %v48 = vld [vmem:[%s0 + $0xb0] sm:$0xff]
  %v49 = vld [vmem:[%s0 + $0xb8] sm:$0xff]
  %v50 = vld [vmem:[%s0 + $0xc0] sm:$0xff]
  %v51 = vld [vmem:[%s1] sm:$0xff]
  %v52 = vld [vmem:[%s1 + $0x8] sm:$0xff]
  %v53 = vld [vmem:[%s1 + $0x10] sm:$0xff]
  %v54 = vld [vmem:[%s1 + $0x18] sm:$0xff]
  %v55 = vld [vmem:[%s1 + $0x20] sm:$0xff]
  %v56 = vld [vmem:[%s1 + $0x28] sm:$0xff]
  %v57 = vld [vmem:[%s1 + $0x30] sm:$0xff]
  %v58 = vld [vmem:[%s1 + $0x38] sm:$0xff]
  %v59 = vld [vmem:[%s1 + $0x40] sm:$0xff]
  %v60 = vld [vmem:[%s1 + $0x48] sm:$0xff]
  %v61 = vld [vmem:[%s1 + $0x50] sm:$0xff]
  %v62 = vld [vmem:[%s1 + $0x58] sm:$0xff]
  %v63 = vld [vmem:[%s1 + $0x60] sm:$0xff]
  %v64 = vld [vmem:[%s1 + $0x68] sm:$0xff]
  %v65 = vld [vmem:[%s1 + $0x70] sm:$0xff]
  %v66 = vld [vmem:[%s1 + $0x78] sm:$0xff]
  %v67 = vld [vmem:[%s1 + $0x80] sm:$0xff]
  %v68 = vld [vmem:[%s1 + $0x88] sm:$0xff]
  %v69 = vld [vmem:[%s1 + $0x90] sm:$0xff]
  %v70 = vld [vmem:[%s1 + $0x98] sm:$0xff]
  %v71 = vld [vmem:[%s1 + $0xa0] sm:$0xff]
  %v72 = vld [vmem:[%s1 + $0xa8] sm:$0xff]
  %v73 = vld [vmem:[%s1 + $0xb0] sm:$0xff]
  %v74 = vld [vmem:[%s1 + $0xb8] sm:$0xff]
  %v75 = vld [vmem:[%s1 + $0xc0] sm:$0xff]
  %v76 = vld [vmem:[%s1 + $0xc8] sm:$0xff]
  %v77 = vld [vmem:[%s1 + $0xd0] sm:$0xff]
  %v78 = vld [vmem:[%s1 + $0xd8] sm:$0xff]
  %v79 = vld [vmem:[%s1 + $0xe0] sm:$0xff]
  %v80 = vld [vmem:[%s1 + $0xe8] sm:$0xff]
  %v81 = vld [vmem:[%s1 + $0xf0] sm:$0xff]
  %v82 = vld [vmem:[%s1 + $0xf8] sm:$0xff]
  %v83 = vld [vmem:[%s1 + $0x100] sm:$0xff]
  %v84 = vld [vmem:[%s1 + $0x108] sm:$0xff]
  %v85 = vld [vmem:[%s1 + $0x110] sm:$0xff]
  %v86 = vld [vmem:[%s1 + $0x118] sm:$0xff]
  %v87 = vld [vmem:[%s1 + $0x120] sm:$0xff]
  %v88 = vld [vmem:[%s1 + $0x128] sm:$0xff]
  %v89 = vld [vmem:[%s1 + $0x130] sm:$0xff]
  %v90 = vld [vmem:[%s1 + $0x138] sm:$0xff]
  %v91 = vld [vmem:[%s1 + $0x140] sm:$0xff]
  %v92 = vld [vmem:[%s1 + $0x148] sm:$0xff]
  %v93 = vld [vmem:[%s1 + $0x150] sm:$0xff]
  %v94 = vld [vmem:[%s1 + $0x158] sm:$0xff]
  %v95 = vld [vmem:[%s1 + $0x160] sm:$0xff]
  %v96 = vld [vmem:[%s1 + $0x168] sm:$0xff]
  %v97 = vld [vmem:[%s1 + $0x170] sm:$0xff]
  %v98 = vld [vmem:[%s1 + $0x178] sm:$0xff]
  %v99 = vld [vmem:[%s1 + $0x180] sm:$0xff]
  %v100 = vld [vmem:[%s1 + $0x188] sm:$0xff]
  %v101 = vld [vmem:[%s1 + $0x190] sm:$0xff]
  %v102 = vld [vmem:[%s1 + $0x198] sm:$0xff]
  %v103 = vld [vmem:[%s1 + $0x1a0] sm:$0xff]
  %v104 = vld [vmem:[%s1 + $0x1a8] sm:$0xff]
  %v105 = vld [vmem:[%s1 + $0x1b0] sm:$0xff]
  %v106 = vld [vmem:[%s1 + $0x1b8] sm:$0xff]
  %v107 = vld [vmem:[%s1 + $0x1c0] sm:$0xff]
  %v108 = vld [vmem:[%s1 + $0x1c8] sm:$0xff]
  %v109 = vld [vmem:[%s1 + $0x1d0] sm:$0xff]
  %v110 = vld [vmem:[%s1 + $0x1d8] sm:$0xff]
  %v111 = vld [vmem:[%s1 + $0x1e0] sm:$0xff]
  %v112 = vld [vmem:[%s1 + $0x1e8] sm:$0xff]
  %v113 = vld [vmem:[%s1 + $0x1f0] sm:$0xff]
  %v114 = vld [vmem:[%s1 + $0x1f8] sm:$0xff]
  %v115 = vld [vmem:[%s1 + $0x200] sm:$0xff]
  %v116 = vld [vmem:[%s1 + $0x208] sm:$0xff]
  %v117 = vld [vmem:[%s1 + $0x210] sm:$0xff]
  %v118 = vld [vmem:[%s1 + $0x218] sm:$0xff]
  %v119 = vld [vmem:[%s1 + $0x220] sm:$0xff]
  %v120 = vld [vmem:[%s1 + $0x228] sm:$0xff]
  %v121 = vld [vmem:[%s1 + $0x230] sm:$0xff]
  %v122 = vld [vmem:[%s1 + $0x238] sm:$0xff]
  %v123 = vld [vmem:[%s1 + $0x240] sm:$0xff]
  %v124 = vld [vmem:[%s1 + $0x248] sm:$0xff]
  %v125 = vld [vmem:[%s1 + $0x250] sm:$0xff]
  %v126 = vld [vmem:[%s1 + $0x258] sm:$0xff]
  %v127 = vld [vmem:[%s1 + $0x260] sm:$0xff]
  %v128 = vld [vmem:[%s1 + $0x268] sm:$0xff]
  %v129 = vld [vmem:[%s1 + $0x270] sm:$0xff]
  %v130 = vld [vmem:[%s1 + $0x278] sm:$0xff]
  %v131 = vld [vmem:[%s1 + $0x280] sm:$0xff]
  %v132 = vld [vmem:[%s1 + $0x288] sm:$0xff]
  %v133 = vld [vmem:[%s1 + $0x290] sm:$0xff]
  %v134 = vld [vmem:[%s1 + $0x298] sm:$0xff]
  %v135 = vld [vmem:[%s1 + $0x2a0] sm:$0xff]
  %v136 = vld [vmem:[%s1 + $0x2a8] sm:$0xff]
  %v137 = vld [vmem:[%s1 + $0x2b0] sm:$0xff]
  %v138 = vld [vmem:[%s1 + $0x2b8] sm:$0xff]
  %v139 = vld [vmem:[%s1 + $0x2c0] sm:$0xff]
  %v140 = vld [vmem:[%s1 + $0x2c8] sm:$0xff]
  %v141 = vld [vmem:[%s1 + $0x2d0] sm:$0xff]
  %v142 = vld [vmem:[%s1 + $0x2d8] sm:$0xff]
  %v143 = vld [vmem:[%s1 + $0x2e0] sm:$0xff]
  %v144 = vld [vmem:[%s1 + $0x2e8] sm:$0xff]
  %v145 = vld [vmem:[%s1 + $0x2f0] sm:$0xff]
  %v146 = vld [vmem:[%s1 + $0x2f8] sm:$0xff]
  %v147 = vld [vmem:[%s1 + $0x300] sm:$0xff]
  %v148 = vld [vmem:[%s1 + $0x308] sm:$0xff]
  %v149 = vld [vmem:[%s1 + $0x310] sm:$0xff]
  %v150 = vld [vmem:[%s1 + $0x318] sm:$0xff]
  %v151 = vld [vmem:[%s1 + $0x320] sm:$0xff]
  %v152 = vld [vmem:[%s1 + $0x328] sm:$0xff]
  %v153 = vld [vmem:[%s1 + $0x330] sm:$0xff]
  %v154 = vld [vmem:[%s1 + $0x338] sm:$0xff]
  %v155 = vld [vmem:[%s1 + $0x340] sm:$0xff]
  %v156 = vld [vmem:[%s1 + $0x348] sm:$0xff]
  %v157 = vld [vmem:[%s1 + $0x350] sm:$0xff]
  %v158 = vld [vmem:[%s1 + $0x358] sm:$0xff]
  %v159 = vld [vmem:[%s1 + $0x360] sm:$0xff]
  %v160 = vld [vmem:[%s1 + $0x368] sm:$0xff]
  %v161 = vld [vmem:[%s1 + $0x370] sm:$0xff]
  %v162 = vld [vmem:[%s1 + $0x378] sm:$0xff]
  %v163 = vld [vmem:[%s1 + $0x380] sm:$0xff]
  %v164 = vld [vmem:[%s1 + $0x388] sm:$0xff]
  %v165 = vld [vmem:[%s1 + $0x390] sm:$0xff]
  %v166 = vld [vmem:[%s1 + $0x398] sm:$0xff]
  %v167 = vld [vmem:[%s1 + $0x3a0] sm:$0xff]
  %v168 = vld [vmem:[%s1 + $0x3a8] sm:$0xff]
  %v169 = vld [vmem:[%s1 + $0x3b0] sm:$0xff]
  %v170 = vld [vmem:[%s1 + $0x3b8] sm:$0xff]
  %v171 = vld [vmem:[%s1 + $0x3c0] sm:$0xff]
  %v172 = vld [vmem:[%s1 + $0x3c8] sm:$0xff]
  %v173 = vld [vmem:[%s1 + $0x3d0] sm:$0xff]
  %v174 = vld [vmem:[%s1 + $0x3d8] sm:$0xff]
  %v175 = vld [vmem:[%s1 + $0x3e0] sm:$0xff]
  %v176 = vld [vmem:[%s1 + $0x3e8] sm:$0xff]
  %v177 = vld [vmem:[%s1 + $0x3f0] sm:$0xff]
  %v178 = vld [vmem:[%s1 + $0x3f8] sm:$0xff]
  %v179 = vld [vmem:[%s1 + $0x400] sm:$0xff]
  %v180 = vld [vmem:[%s1 + $0x408] sm:$0xff]
  %v181 = vld [vmem:[%s1 + $0x410] sm:$0xff]
  %v182 = vld [vmem:[%s1 + $0x418] sm:$0xff]
  %v183 = vld [vmem:[%s1 + $0x420] sm:$0xff]
  %v184 = vld [vmem:[%s1 + $0x428] sm:$0xff]
  %v185 = vld [vmem:[%s1 + $0x430] sm:$0xff]
  %v186 = vld [vmem:[%s1 + $0x438] sm:$0xff]
  %v187 = vld [vmem:[%s1 + $0x440] sm:$0xff]
  %v188 = vld [vmem:[%s1 + $0x448] sm:$0xff]
  %v189 = vld [vmem:[%s1 + $0x450] sm:$0xff]
  %v190 = vld [vmem:[%s1 + $0x458] sm:$0xff]
  %v191 = vld [vmem:[%s1 + $0x460] sm:$0xff]
  %v192 = vld [vmem:[%s1 + $0x468] sm:$0xff]
  %v193 = vld [vmem:[%s1 + $0x470] sm:$0xff]
  %v194 = vld [vmem:[%s1 + $0x478] sm:$0xff]
  %v195 = vld [vmem:[%s1 + $0x480] sm:$0xff]
  %v196 = vld [vmem:[%s1 + $0x488] sm:$0xff]
  %v197 = vld [vmem:[%s1 + $0x490] sm:$0xff]
  %v198 = vld [vmem:[%s1 + $0x498] sm:$0xff]
  %v199 = vld [vmem:[%s1 + $0x4a0] sm:$0xff]
  %v200 = vld [vmem:[%s1 + $0x4a8] sm:$0xff]
  %v201 = vld [vmem:[%s1 + $0x4b0] sm:$0xff]
  %v202 = vld [vmem:[%s1 + $0x4b8] sm:$0xff]
  %v203 = vld [vmem:[%s1 + $0x4c0] sm:$0xff]
  %v204 = vld [vmem:[%s1 + $0x4c8] sm:$0xff]
  %v205 = vld [vmem:[%s1 + $0x4d0] sm:$0xff]
  %v206 = vld [vmem:[%s1 + $0x4d8] sm:$0xff]
  %v207 = vld [vmem:[%s1 + $0x4e0] sm:$0xff]
  %v208 = vld [vmem:[%s1 + $0x4e8] sm:$0xff]
  %v209 = vld [vmem:[%s1 + $0x4f0] sm:$0xff]
  %v210 = vld [vmem:[%s1 + $0x4f8] sm:$0xff]
  %v211 = vld [vmem:[%s1 + $0x500] sm:$0xff]
  %v212 = vld [vmem:[%s1 + $0x508] sm:$0xff]
  %v213 = vld [vmem:[%s1 + $0x510] sm:$0xff]
  %v214 = vld [vmem:[%s1 + $0x518] sm:$0xff]
  %v215 = vld [vmem:[%s1 + $0x520] sm:$0xff]
  %v216 = vld [vmem:[%s1 + $0x528] sm:$0xff]
  %v217 = vld [vmem:[%s1 + $0x530] sm:$0xff]
  %v218 = vld [vmem:[%s1 + $0x538] sm:$0xff]
  %v219 = vld [vmem:[%s1 + $0x540] sm:$0xff]
  %v220 = vld [vmem:[%s1 + $0x548] sm:$0xff]
  %v221 = vld [vmem:[%s1 + $0x550] sm:$0xff]
  %v222 = vld [vmem:[%s1 + $0x558] sm:$0xff]
  %v223 = vld [vmem:[%s1 + $0x560] sm:$0xff]
  %v224 = vld [vmem:[%s1 + $0x568] sm:$0xff]
  %v225 = vld [vmem:[%s1 + $0x570] sm:$0xff]
  %v226 = vld [vmem:[%s1 + $0x578] sm:$0xff]
  %v227 = vld [vmem:[%s1 + $0x580] sm:$0xff]
  %v228 = vld [vmem:[%s1 + $0x588] sm:$0xff]
  %v229 = vld [vmem:[%s1 + $0x590] sm:$0xff]
  %v230 = vld [vmem:[%s1 + $0x598] sm:$0xff]
  %v231 = vld [vmem:[%s1 + $0x5a0] sm:$0xff]
  %v232 = vld [vmem:[%s1 + $0x5a8] sm:$0xff]
  %v233 = vld [vmem:[%s1 + $0x5b0] sm:$0xff]
  %v234 = vld [vmem:[%s1 + $0x5b8] sm:$0xff]
  %v235 = vld [vmem:[%s1 + $0x5c0] sm:$0xff]
  %v236 = vld [vmem:[%s1 + $0x5c8] sm:$0xff]
  %v237 = vld [vmem:[%s1 + $0x5d0] sm:$0xff]
  %v238 = vld [vmem:[%s1 + $0x5d8] sm:$0xff]
  %v239 = vld [vmem:[%s1 + $0x5e0] sm:$0xff]
  %v240 = vld [vmem:[%s1 + $0x5e8] sm:$0xff]
  %v241 = vld [vmem:[%s1 + $0x5f0] sm:$0xff]
  %v242 = vld [vmem:[%s1 + $0x5f8] sm:$0xff]
  %v243 = vld [vmem:[%s1 + $0x600] sm:$0xff]
  %v244 = vld [vmem:[%s1 + $0x608] sm:$0xff]
  %v245 = vld [vmem:[%s1 + $0x610] sm:$0xff]
  %v246 = vld [vmem:[%s1 + $0x618] sm:$0xff]
  %v247 = vld [vmem:[%s1 + $0x620] sm:$0xff]
  %v248 = vld [vmem:[%s1 + $0x628] sm:$0xff]
  %v249 = vld [vmem:[%s1 + $0x630] sm:$0xff]
  %v250 = vld [vmem:[%s1 + $0x638] sm:$0xff]
  %v251 = vld [vmem:[%s1 + $0x640] sm:$0xff]
  %v252 = vld [vmem:[%s1 + $0x648] sm:$0xff]
  %v253 = vld [vmem:[%s1 + $0x650] sm:$0xff]
  %v254 = vld [vmem:[%s1 + $0x658] sm:$0xff]
  %v255 = vld [vmem:[%s1 + $0x660] sm:$0xff]
  %v256 = vld [vmem:[%s1 + $0x668] sm:$0xff]
  %v257 = vld [vmem:[%s1 + $0x670] sm:$0xff]
  %v258 = vld [vmem:[%s1 + $0x678] sm:$0xff]
  %v259 = vld [vmem:[%s1 + $0x680] sm:$0xff]
  %v260 = vld [vmem:[%s1 + $0x688] sm:$0xff]
  %v261 = vld [vmem:[%s1 + $0x690] sm:$0xff]
  %v262 = vld [vmem:[%s1 + $0x698] sm:$0xff]
  %v263 = vld [vmem:[%s1 + $0x6a0] sm:$0xff]
  %v264 = vld [vmem:[%s1 + $0x6a8] sm:$0xff]
  %v265 = vld [vmem:[%s1 + $0x6b0] sm:$0xff]
  %v266 = vld [vmem:[%s1 + $0x6b8] sm:$0xff]
  %v267 = vld [vmem:[%s1 + $0x6c0] sm:$0xff]
  %v268 = vld [vmem:[%s1 + $0x6c8] sm:$0xff]
  %v269 = vld [vmem:[%s1 + $0x6d0] sm:$0xff]
  %v270 = vld [vmem:[%s1 + $0x6d8] sm:$0xff]
  %v271 = vld [vmem:[%s1 + $0x6e0] sm:$0xff]
  %v272 = vld [vmem:[%s1 + $0x6e8] sm:$0xff]
  %v273 = vld [vmem:[%s1 + $0x6f0] sm:$0xff]
  %v274 = vld [vmem:[%s1 + $0x6f8] sm:$0xff]
  %v275 = vld [vmem:[%s1 + $0x700] sm:$0xff]
  %v276 = vld [vmem:[%s1 + $0x708] sm:$0xff]
  %v277 = vld [vmem:[%s1 + $0x710] sm:$0xff]
  %v278 = vld [vmem:[%s1 + $0x718] sm:$0xff]
  %v279 = vld [vmem:[%s1 + $0x720] sm:$0xff]
  %v280 = vld [vmem:[%s1 + $0x728] sm:$0xff]
  %v281 = vld [vmem:[%s1 + $0x730] sm:$0xff]
  %v282 = vld [vmem:[%s1 + $0x738] sm:$0xff]
  %v283 = vld [vmem:[%s1 + $0x740] sm:$0xff]
  %v284 = vld [vmem:[%s1 + $0x748] sm:$0xff]
  %v285 = vld [vmem:[%s1 + $0x750] sm:$0xff]
  %v286 = vld [vmem:[%s1 + $0x758] sm:$0xff]
  %v287 = vld [vmem:[%s1 + $0x760] sm:$0xff]
  %v288 = vld [vmem:[%s1 + $0x768] sm:$0xff]
  %v289 = vld [vmem:[%s1 + $0x770] sm:$0xff]
  %v290 = vld [vmem:[%s1 + $0x778] sm:$0xff]
  %v291 = vld [vmem:[%s1 + $0x780] sm:$0xff]
  %v292 = vld [vmem:[%s1 + $0x788] sm:$0xff]
  %v293 = vld [vmem:[%s1 + $0x790] sm:$0xff]
  %v294 = vld [vmem:[%s1 + $0x798] sm:$0xff]
  %v295 = vld [vmem:[%s1 + $0x7a0] sm:$0xff]
  %v296 = vld [vmem:[%s1 + $0x7a8] sm:$0xff]
  %v297 = vld [vmem:[%s1 + $0x7b0] sm:$0xff]
  %v298 = vld [vmem:[%s1 + $0x7b8] sm:$0xff]
  %v299 = vld [vmem:[%s1 + $0x7c0] sm:$0xff]
  %v300 = vld [vmem:[%s1 + $0x7c8] sm:$0xff]
  %v301 = vld [vmem:[%s1 + $0x7d0] sm:$0xff]
  %v302 = vld [vmem:[%s1 + $0x7d8] sm:$0xff]
  %v303 = vld [vmem:[%s1 + $0x7e0] sm:$0xff]
  %v304 = vld [vmem:[%s1 + $0x7e8] sm:$0xff]
  %v305 = vld [vmem:[%s1 + $0x7f0] sm:$0xff]
  %v306 = vld [vmem:[%s1 + $0x7f8] sm:$0xff]
  %v307 = vld [vmem:[%s1 + $0x800] sm:$0xff]
  %v308 = vld [vmem:[%s1 + $0x808] sm:$0xff]
  %v309 = vld [vmem:[%s1 + $0x810] sm:$0xff]
  %v310 = vld [vmem:[%s1 + $0x818] sm:$0xff]
  %v311 = vld [vmem:[%s1 + $0x820] sm:$0xff]
  %v312 = vld [vmem:[%s1 + $0x828] sm:$0xff]
  %v313 = vld [vmem:[%s1 + $0x830] sm:$0xff]
  %v314 = vld [vmem:[%s1 + $0x838] sm:$0xff]
  %v315 = vld [vmem:[%s1 + $0x840] sm:$0xff]
  %v316 = vld [vmem:[%s1 + $0x848] sm:$0xff]
  %v317 = vld [vmem:[%s1 + $0x850] sm:$0xff]
  %v318 = vld [vmem:[%s1 + $0x858] sm:$0xff]
  %v319 = vld [vmem:[%s1 + $0x860] sm:$0xff]
  %v320 = vld [vmem:[%s1 + $0x868] sm:$0xff]
  %v321 = vld [vmem:[%s1 + $0x870] sm:$0xff]
  %v322 = vld [vmem:[%s1 + $0x878] sm:$0xff]
  %v323 = vld [vmem:[%s1 + $0x880] sm:$0xff]
  %v324 = vld [vmem:[%s1 + $0x888] sm:$0xff]
  %v325 = vld [vmem:[%s1 + $0x890] sm:$0xff]
  %v326 = vld [vmem:[%s1 + $0x898] sm:$0xff]
  %v327 = vld [vmem:[%s1 + $0x8a0] sm:$0xff]
  %v328 = vld [vmem:[%s1 + $0x8a8] sm:$0xff]
  %v329 = vld [vmem:[%s1 + $0x8b0] sm:$0xff]
  %v330 = vld [vmem:[%s1 + $0x8b8] sm:$0xff]
  %v331 = vld [vmem:[%s1 + $0x8c0] sm:$0xff]
  %v332 = vld [vmem:[%s1 + $0x8c8] sm:$0xff]
  %v333 = vld [vmem:[%s1 + $0x8d0] sm:$0xff]
  %v334 = vld [vmem:[%s1 + $0x8d8] sm:$0xff]
  %v335 = vld [vmem:[%s1 + $0x8e0] sm:$0xff]
  %v336 = vld [vmem:[%s1 + $0x8e8] sm:$0xff]
  %v337 = vld [vmem:[%s1 + $0x8f0] sm:$0xff]
  %v338 = vld [vmem:[%s1 + $0x8f8] sm:$0xff]
  %v339 = vld [vmem:[%s1 + $0x900] sm:$0xff]
  %v340 = vld [vmem:[%s1 + $0x908] sm:$0xff]
  %v341 = vld [vmem:[%s1 + $0x910] sm:$0xff]
  %v342 = vld [vmem:[%s1 + $0x918] sm:$0xff]
  %v343 = vld [vmem:[%s1 + $0x920] sm:$0xff]
  %v344 = vld [vmem:[%s1 + $0x928] sm:$0xff]
  %v345 = vld [vmem:[%s1 + $0x930] sm:$0xff]
  %v346 = vld [vmem:[%s1 + $0x938] sm:$0xff]
  %v347 = vld [vmem:[%s1 + $0x940] sm:$0xff]
  %v348 = vld [vmem:[%s1 + $0x948] sm:$0xff]
  %v349 = vld [vmem:[%s1 + $0x950] sm:$0xff]
  %v350 = vld [vmem:[%s1 + $0x958] sm:$0xff]
  %v351 = vld [vmem:[%s1 + $0x960] sm:$0xff]
  %v352 = vld [vmem:[%s1 + $0x968] sm:$0xff]
  %v353 = vld [vmem:[%s1 + $0x970] sm:$0xff]
  %v354 = vld [vmem:[%s1 + $0x978] sm:$0xff]
  %v355 = vld [vmem:[%s1 + $0x980] sm:$0xff]
  %v356 = vld [vmem:[%s1 + $0x988] sm:$0xff]
  %v357 = vld [vmem:[%s1 + $0x990] sm:$0xff]
  %v358 = vld [vmem:[%s1 + $0x998] sm:$0xff]
  %v359 = vld [vmem:[%s1 + $0x9a0] sm:$0xff]
  %v360 = vld [vmem:[%s1 + $0x9a8] sm:$0xff]
  %v361 = vld [vmem:[%s1 + $0x9b0] sm:$0xff]
  %v362 = vld [vmem:[%s1 + $0x9b8] sm:$0xff]
  %v363 = vld [vmem:[%s1 + $0x9c0] sm:$0xff]
  %v364 = vld [vmem:[%s1 + $0x9c8] sm:$0xff]
  %v365 = vld [vmem:[%s1 + $0x9d0] sm:$0xff]
  %v366 = vld [vmem:[%s1 + $0x9d8] sm:$0xff]
  %v367 = vld [vmem:[%s1 + $0x9e0] sm:$0xff]
  %v368 = vld [vmem:[%s1 + $0x9e8] sm:$0xff]
  %v369 = vld [vmem:[%s1 + $0x9f0] sm:$0xff]
  %v370 = vld [vmem:[%s1 + $0x9f8] sm:$0xff]
  %v371 = vld [vmem:[%s1 + $0xa00] sm:$0xff]
  %v372 = vld [vmem:[%s1 + $0xa08] sm:$0xff]
  %v373 = vld [vmem:[%s1 + $0xa10] sm:$0xff]
  %v374 = vld [vmem:[%s1 + $0xa18] sm:$0xff]
  %v375 = vld [vmem:[%s1 + $0xa20] sm:$0xff]
  %v376 = vld [vmem:[%s1 + $0xa28] sm:$0xff]
  %v377 = vld [vmem:[%s1 + $0xa30] sm:$0xff]
  %v378 = vld [vmem:[%s1 + $0xa38] sm:$0xff]
  %v379 = vld [vmem:[%s1 + $0xa40] sm:$0xff]
  %v380 = vld [vmem:[%s1 + $0xa48] sm:$0xff]
  %v381 = vld [vmem:[%s1 + $0xa50] sm:$0xff]
  %v382 = vld [vmem:[%s1 + $0xa58] sm:$0xff]
  %v383 = vld [vmem:[%s1 + $0xa60] sm:$0xff]
  %v384 = vld [vmem:[%s1 + $0xa68] sm:$0xff]
  %v385 = vld [vmem:[%s1 + $0xa70] sm:$0xff]
  %v386 = vld [vmem:[%s1 + $0xa78] sm:$0xff]
  %v387 = vld [vmem:[%s1 + $0xa80] sm:$0xff]
  %v388 = vld [vmem:[%s1 + $0xa88] sm:$0xff]
  %v389 = vld [vmem:[%s1 + $0xa90] sm:$0xff]
  %v390 = vld [vmem:[%s1 + $0xa98] sm:$0xff]
  %v391 = vld [vmem:[%s1 + $0xaa0] sm:$0xff]
  %v392 = vld [vmem:[%s1 + $0xaa8] sm:$0xff]
  %v393 = vld [vmem:[%s1 + $0xab0] sm:$0xff]
  %v394 = vld [vmem:[%s1 + $0xab8] sm:$0xff]
  %v395 = vld [vmem:[%s1 + $0xac0] sm:$0xff]
  %v396 = vld [vmem:[%s1 + $0xac8] sm:$0xff]
  %v397 = vld [vmem:[%s1 + $0xad0] sm:$0xff]
  %v398 = vld [vmem:[%s1 + $0xad8] sm:$0xff]
  %v399 = vld [vmem:[%s1 + $0xae0] sm:$0xff]
  %v400 = vld [vmem:[%s1 + $0xae8] sm:$0xff]
  %v401 = vld [vmem:[%s1 + $0xaf0] sm:$0xff]
  %v402 = vld [vmem:[%s1 + $0xaf8] sm:$0xff]
  %v403 = vld [vmem:[%s1 + $0xb00] sm:$0xff]
  %v404 = vld [vmem:[%s1 + $0xb08] sm:$0xff]
  %v405 = vld [vmem:[%s1 + $0xb10] sm:$0xff]
  %v406 = vld [vmem:[%s1 + $0xb18] sm:$0xff]
  %v407 = vld [vmem:[%s1 + $0xb20] sm:$0xff]
  %v408 = vld [vmem:[%s1 + $0xb28] sm:$0xff]
  %v409 = vld [vmem:[%s1 + $0xb30] sm:$0xff]
  %v410 = vld [vmem:[%s1 + $0xb38] sm:$0xff]
  %v411 = vld [vmem:[%s1 + $0xb40] sm:$0xff]
  %v412 = vld [vmem:[%s1 + $0xb48] sm:$0xff]
  %v413 = vld [vmem:[%s1 + $0xb50] sm:$0xff]
  %v414 = vld [vmem:[%s1 + $0xb58] sm:$0xff]
  %v415 = vld [vmem:[%s1 + $0xb60] sm:$0xff]
  %v416 = vld [vmem:[%s1 + $0xb68] sm:$0xff]
  %v417 = vld [vmem:[%s1 + $0xb70] sm:$0xff]
  %v418 = vld [vmem:[%s1 + $0xb78] sm:$0xff]
  %v419 = vld [vmem:[%s1 + $0xb80] sm:$0xff]
  %v420 = vld [vmem:[%s1 + $0xb88] sm:$0xff]
  %v421 = vld [vmem:[%s1 + $0xb90] sm:$0xff]
  %v422 = vld [vmem:[%s1 + $0xb98] sm:$0xff]
  %v423 = vld [vmem:[%s1 + $0xba0] sm:$0xff]
  %v424 = vld [vmem:[%s1 + $0xba8] sm:$0xff]
  %v425 = vld [vmem:[%s1 + $0xbb0] sm:$0xff]
  %v426 = vld [vmem:[%s1 + $0xbb8] sm:$0xff]
  %v427 = vld [vmem:[%s1 + $0xbc0] sm:$0xff]
  %v428 = vld [vmem:[%s1 + $0xbc8] sm:$0xff]
  %v429 = vld [vmem:[%s1 + $0xbd0] sm:$0xff]
  %v430 = vld [vmem:[%s1 + $0xbd8] sm:$0xff]
  %v431 = vld [vmem:[%s1 + $0xbe0] sm:$0xff]
  %v432 = vld [vmem:[%s1 + $0xbe8] sm:$0xff]
  %v433 = vld [vmem:[%s1 + $0xbf0] sm:$0xff]
  %v434 = vld [vmem:[%s1 + $0xbf8] sm:$0xff]
  %v435 = vld [vmem:[%s1 + $0xc00] sm:$0xff]
  %v436 = vld [vmem:[%s1 + $0xc08] sm:$0xff]
  %v437 = vld [vmem:[%s1 + $0xc10] sm:$0xff]
  %v438 = vld [vmem:[%s1 + $0xc18] sm:$0xff]
  %v439 = vld [vmem:[%s1 + $0xc20] sm:$0xff]
  %v440 = vld [vmem:[%s1 + $0xc28] sm:$0xff]
  %v441 = vld [vmem:[%s1 + $0xc30] sm:$0xff]
  %v442 = vld [vmem:[%s1 + $0xc38] sm:$0xff]
  %v443 = vld [vmem:[%s1 + $0xc40] sm:$0xff]
  %v444 = vld [vmem:[%s1 + $0xc48] sm:$0xff]
  %v445 = vld [vmem:[%s1 + $0xc50] sm:$0xff]
  %v446 = vld [vmem:[%s1 + $0xc58] sm:$0xff]
  %v447 = vld [vmem:[%s1 + $0xc60] sm:$0xff]
  %v448 = vld [vmem:[%s1 + $0xc68] sm:$0xff]
  %v449 = vld [vmem:[%s1 + $0xc70] sm:$0xff]
  %v450 = vld [vmem:[%s1 + $0xc78] sm:$0xff]
  %v451 = vld [vmem:[%s2] sm:$0x1]
  %v453 = vperm.slane %v451, 0
  %455 = vmatpush.msra.mxu0 %v66
  %456 = vmatpush.msra.mxu0 %v65
  %457 = vmatpush.msra.mxu0 %v64
  %458 = vmatpush.msra.mxu0 %v63
  %459 = vmatpush.msra.mxu0 %v62
  %460 = vmatpush.msra.mxu0 %v61
  %461 = vmatpush.msra.mxu0 %v60
  %462 = vmatpush.msra.mxu0 %v59
  %463 = vmatpush.msra.mxu0 %v58
  %464 = vmatpush.msra.mxu0 %v57
  %465 = vmatpush.msra.mxu0 %v56
  %466 = vmatpush.msra.mxu0 %v55
  %467 = vmatpush.msra.mxu0 %v54
  %468 = vmatpush.msra.mxu0 %v53
  %469 = vmatpush.msra.mxu0 %v52
  %470 = vmatpush.msra.mxu0 %v51
  %471 = vmatmul.f32.gmra.mxu0 %v26
  %v472 = vpop.f32.mrf.mxu0
  %v473 = vadd.f32 %v453, %v472
  %474 = vdwg.mxu0
  %475 = vmatpush.msra.mxu0 %v82
  %476 = vmatpush.msra.mxu0 %v81
  %477 = vmatpush.msra.mxu0 %v80
  %478 = vmatpush.msra.mxu0 %v79
  %479 = vmatpush.msra.mxu0 %v78
  %480 = vmatpush.msra.mxu0 %v77
  %481 = vmatpush.msra.mxu0 %v76
  %482 = vmatpush.msra.mxu0 %v75
  %483 = vmatpush.msra.mxu0 %v74
  %484 = vmatpush.msra.mxu0 %v73
  %485 = vmatpush.msra.mxu0 %v72
  %486 = vmatpush.msra.mxu0 %v71
  %487 = vmatpush.msra.mxu0 %v70
  %488 = vmatpush.msra.mxu0 %v69
  %489 = vmatpush.msra.mxu0 %v68
  %490 = vmatpush.msra.mxu0 %v67
  %491 = vmatmul.f32.gmra.mxu0 %v27
  %v492 = vpop.f32.mrf.mxu0
  %v493 = vadd.f32 %v473, %v492
  %494 = vdwg.mxu0
  %495 = vmatpush.msra.mxu0 %v98
  %496 = vmatpush.msra.mxu0 %v97
  %497 = vmatpush.msra.mxu0 %v96
  %498 = vmatpush.msra.mxu0 %v95
  %499 = vmatpush.msra.mxu0 %v94
  %500 = vmatpush.msra.mxu0 %v93
  %501 = vmatpush.msra.mxu0 %v92
  %502 = vmatpush.msra.mxu0 %v91
  %503 = vmatpush.msra.mxu0 %v90
  %504 = vmatpush.msra.mxu0 %v89
  %505 = vmatpush.msra.mxu0 %v88
  %506 = vmatpush.msra.mxu0 %v87
  %507 = vmatpush.msra.mxu0 %v86
  %508 = vmatpush.msra.mxu0 %v85
  %509 = vmatpush.msra.mxu0 %v84
  %510 = vmatpush.msra.mxu0 %v83
  %511 = vmatmul.f32.gmra.mxu0 %v28
  %v512 = vpop.f32.mrf.mxu0
  %v513 = vadd.f32 %v493, %v512
  %514 = vdwg.mxu0
  %515 = vmatpush.msra.mxu0 %v114
  %516 = vmatpush.msra.mxu0 %v113
  %517 = vmatpush.msra.mxu0 %v112
  %518 = vmatpush.msra.mxu0 %v111
  %519 = vmatpush.msra.mxu0 %v110
  %520 = vmatpush.msra.mxu0 %v109
  %521 = vmatpush.msra.mxu0 %v108
  %522 = vmatpush.msra.mxu0 %v107
  %523 = vmatpush.msra.mxu0 %v106
  %524 = vmatpush.msra.mxu0 %v105
  %525 = vmatpush.msra.mxu0 %v104
  %526 = vmatpush.msra.mxu0 %v103
  %527 = vmatpush.msra.mxu0 %v102
  %528 = vmatpush.msra.mxu0 %v101
  %529 = vmatpush.msra.mxu0 %v100
  %530 = vmatpush.msra.mxu0 %v99
  %531 = vmatmul.f32.gmra.mxu0 %v29
  %v532 = vpop.f32.mrf.mxu0
  %v533 = vadd.f32 %v513, %v532
  %534 = vdwg.mxu0
  %535 = vmatpush.msra.mxu0 %v130
  %536 = vmatpush.msra.mxu0 %v129
  %537 = vmatpush.msra.mxu0 %v128
  %538 = vmatpush.msra.mxu0 %v127
  %539 = vmatpush.msra.mxu0 %v126
  %540 = vmatpush.msra.mxu0 %v125
  %541 = vmatpush.msra.mxu0 %v124
  %542 = vmatpush.msra.mxu0 %v123
  %543 = vmatpush.msra.mxu0 %v122
  %544 = vmatpush.msra.mxu0 %v121
  %545 = vmatpush.msra.mxu0 %v120
  %546 = vmatpush.msra.mxu0 %v119
  %547 = vmatpush.msra.mxu0 %v118
  %548 = vmatpush.msra.mxu0 %v117
  %549 = vmatpush.msra.mxu0 %v116
  %550 = vmatpush.msra.mxu0 %v115
  %551 = vmatmul.f32.gmra.mxu0 %v30
  %v552 = vpop.f32.mrf.mxu0
  %v553 = vadd.f32 %v533, %v552
  %554 = vdwg.mxu0
  %555 = vmatpush.msra.mxu0 %v146
  %556 = vmatpush.msra.mxu0 %v145
  %557 = vmatpush.msra.mxu0 %v144
  %558 = vmatpush.msra.mxu0 %v143
  %559 = vmatpush.msra.mxu0 %v142
  %560 = vmatpush.msra.mxu0 %v141
  %561 = vmatpush.msra.mxu0 %v140
  %562 = vmatpush.msra.mxu0 %v139
  %563 = vmatpush.msra.mxu0 %v138
  %564 = vmatpush.msra.mxu0 %v137
  %565 = vmatpush.msra.mxu0 %v136
  %566 = vmatpush.msra.mxu0 %v135
  %567 = vmatpush.msra.mxu0 %v134
  %568 = vmatpush.msra.mxu0 %v133
  %569 = vmatpush.msra.mxu0 %v132
  %570 = vmatpush.msra.mxu0 %v131
  %571 = vmatmul.f32.gmra.mxu0 %v31
  %v572 = vpop.f32.mrf.mxu0
  %v573 = vadd.f32 %v553, %v572
  %574 = vdwg.mxu0
  %575 = vmatpush.msra.mxu0 %v162
  %576 = vmatpush.msra.mxu0 %v161
  %577 = vmatpush.msra.mxu0 %v160
  %578 = vmatpush.msra.mxu0 %v159
  %579 = vmatpush.msra.mxu0 %v158
  %580 = vmatpush.msra.mxu0 %v157
  %581 = vmatpush.msra.mxu0 %v156
  %582 = vmatpush.msra.mxu0 %v155
  %583 = vmatpush.msra.mxu0 %v154
  %584 = vmatpush.msra.mxu0 %v153
  %585 = vmatpush.msra.mxu0 %v152
  %586 = vmatpush.msra.mxu0 %v151
  %587 = vmatpush.msra.mxu0 %v150
  %588 = vmatpush.msra.mxu0 %v149
  %589 = vmatpush.msra.mxu0 %v148
  %590 = vmatpush.msra.mxu0 %v147
  %591 = vmatmul.f32.gmra.mxu0 %v32
  %v592 = vpop.f32.mrf.mxu0
  %v593 = vadd.f32 %v573, %v592
  %594 = vdwg.mxu0
  %595 = vmatpush.msra.mxu0 %v178
  %596 = vmatpush.msra.mxu0 %v177
  %597 = vmatpush.msra.mxu0 %v176
  %598 = vmatpush.msra.mxu0 %v175
  %599 = vmatpush.msra.mxu0 %v174
  %600 = vmatpush.msra.mxu0 %v173
  %601 = vmatpush.msra.mxu0 %v172
  %602 = vmatpush.msra.mxu0 %v171
  %603 = vmatpush.msra.mxu0 %v170
  %604 = vmatpush.msra.mxu0 %v169
  %605 = vmatpush.msra.mxu0 %v168
  %606 = vmatpush.msra.mxu0 %v167
  %607 = vmatpush.msra.mxu0 %v166
  %608 = vmatpush.msra.mxu0 %v165
  %609 = vmatpush.msra.mxu0 %v164
  %610 = vmatpush.msra.mxu0 %v163
  %611 = vmatmul.f32.gmra.mxu0 %v33
  %v612 = vpop.f32.mrf.mxu0
  %v613 = vadd.f32 %v593, %v612
  %614 = vdwg.mxu0
  %615 = vmatpush.msra.mxu0 %v194
  %616 = vmatpush.msra.mxu0 %v193
  %617 = vmatpush.msra.mxu0 %v192
  %618 = vmatpush.msra.mxu0 %v191
  %619 = vmatpush.msra.mxu0 %v190
  %620 = vmatpush.msra.mxu0 %v189
  %621 = vmatpush.msra.mxu0 %v188
  %622 = vmatpush.msra.mxu0 %v187
  %623 = vmatpush.msra.mxu0 %v186
  %624 = vmatpush.msra.mxu0 %v185
  %625 = vmatpush.msra.mxu0 %v184
  %626 = vmatpush.msra.mxu0 %v183
  %627 = vmatpush.msra.mxu0 %v182
  %628 = vmatpush.msra.mxu0 %v181
  %629 = vmatpush.msra.mxu0 %v180
  %630 = vmatpush.msra.mxu0 %v179
  %631 = vmatmul.f32.gmra.mxu0 %v34
  %v632 = vpop.f32.mrf.mxu0
  %v633 = vadd.f32 %v613, %v632
  %634 = vdwg.mxu0
  %635 = vmatpush.msra.mxu0 %v210
  %636 = vmatpush.msra.mxu0 %v209
  %637 = vmatpush.msra.mxu0 %v208
  %638 = vmatpush.msra.mxu0 %v207
  %639 = vmatpush.msra.mxu0 %v206
  %640 = vmatpush.msra.mxu0 %v205
  %641 = vmatpush.msra.mxu0 %v204
  %642 = vmatpush.msra.mxu0 %v203
  %643 = vmatpush.msra.mxu0 %v202
  %644 = vmatpush.msra.mxu0 %v201
  %645 = vmatpush.msra.mxu0 %v200
  %646 = vmatpush.msra.mxu0 %v199
  %647 = vmatpush.msra.mxu0 %v198
  %648 = vmatpush.msra.mxu0 %v197
  %649 = vmatpush.msra.mxu0 %v196
  %650 = vmatpush.msra.mxu0 %v195
  %651 = vmatmul.f32.gmra.mxu0 %v35
  %v652 = vpop.f32.mrf.mxu0
  %v653 = vadd.f32 %v633, %v652
  %654 = vdwg.mxu0
  %655 = vmatpush.msra.mxu0 %v226
  %656 = vmatpush.msra.mxu0 %v225
  %657 = vmatpush.msra.mxu0 %v224
  %658 = vmatpush.msra.mxu0 %v223
  %659 = vmatpush.msra.mxu0 %v222
  %660 = vmatpush.msra.mxu0 %v221
  %661 = vmatpush.msra.mxu0 %v220
  %662 = vmatpush.msra.mxu0 %v219
  %663 = vmatpush.msra.mxu0 %v218
  %664 = vmatpush.msra.mxu0 %v217
  %665 = vmatpush.msra.mxu0 %v216
  %666 = vmatpush.msra.mxu0 %v215
  %667 = vmatpush.msra.mxu0 %v214
  %668 = vmatpush.msra.mxu0 %v213
  %669 = vmatpush.msra.mxu0 %v212
  %670 = vmatpush.msra.mxu0 %v211
  %671 = vmatmul.f32.gmra.mxu0 %v36
  %v672 = vpop.f32.mrf.mxu0
  %v673 = vadd.f32 %v653, %v672
  %674 = vdwg.mxu0
  %675 = vmatpush.msra.mxu0 %v242
  %676 = vmatpush.msra.mxu0 %v241
  %677 = vmatpush.msra.mxu0 %v240
  %678 = vmatpush.msra.mxu0 %v239
  %679 = vmatpush.msra.mxu0 %v238
  %680 = vmatpush.msra.mxu0 %v237
  %681 = vmatpush.msra.mxu0 %v236
  %682 = vmatpush.msra.mxu0 %v235
  %683 = vmatpush.msra.mxu0 %v234
  %684 = vmatpush.msra.mxu0 %v233
  %685 = vmatpush.msra.mxu0 %v232
  %686 = vmatpush.msra.mxu0 %v231
  %687 = vmatpush.msra.mxu0 %v230
  %688 = vmatpush.msra.mxu0 %v229
  %689 = vmatpush.msra.mxu0 %v228
  %690 = vmatpush.msra.mxu0 %v227
  %691 = vmatmul.f32.gmra.mxu0 %v37
  %v692 = vpop.f32.mrf.mxu0
  %v693 = vadd.f32 %v673, %v692
  %694 = vdwg.mxu0
  %695 = vmatpush.msra.mxu0 %v258
  %696 = vmatpush.msra.mxu0 %v257
  %697 = vmatpush.msra.mxu0 %v256
  %698 = vmatpush.msra.mxu0 %v255
  %699 = vmatpush.msra.mxu0 %v254
  %700 = vmatpush.msra.mxu0 %v253
  %701 = vmatpush.msra.mxu0 %v252
  %702 = vmatpush.msra.mxu0 %v251
  %703 = vmatpush.msra.mxu0 %v250
  %704 = vmatpush.msra.mxu0 %v249
  %705 = vmatpush.msra.mxu0 %v248
  %706 = vmatpush.msra.mxu0 %v247
  %707 = vmatpush.msra.mxu0 %v246
  %708 = vmatpush.msra.mxu0 %v245
  %709 = vmatpush.msra.mxu0 %v244
  %710 = vmatpush.msra.mxu0 %v243
  %711 = vmatmul.f32.gmra.mxu0 %v38
  %v712 = vpop.f32.mrf.mxu0
  %v713 = vadd.f32 %v693, %v712
  %714 = vdwg.mxu0
  %715 = vmatpush.msra.mxu0 %v274
  %716 = vmatpush.msra.mxu0 %v273
  %717 = vmatpush.msra.mxu0 %v272
  %718 = vmatpush.msra.mxu0 %v271
  %719 = vmatpush.msra.mxu0 %v270
  %720 = vmatpush.msra.mxu0 %v269
  %721 = vmatpush.msra.mxu0 %v268
  %722 = vmatpush.msra.mxu0 %v267
  %723 = vmatpush.msra.mxu0 %v266
  %724 = vmatpush.msra.mxu0 %v265
  %725 = vmatpush.msra.mxu0 %v264
  %726 = vmatpush.msra.mxu0 %v263
  %727 = vmatpush.msra.mxu0 %v262
  %728 = vmatpush.msra.mxu0 %v261
  %729 = vmatpush.msra.mxu0 %v260
  %730 = vmatpush.msra.mxu0 %v259
  %731 = vmatmul.f32.gmra.mxu0 %v39
  %v732 = vpop.f32.mrf.mxu0
  %v733 = vadd.f32 %v713, %v732
  %734 = vdwg.mxu0
  %735 = vmatpush.msra.mxu0 %v290
  %736 = vmatpush.msra.mxu0 %v289
  %737 = vmatpush.msra.mxu0 %v288
  %738 = vmatpush.msra.mxu0 %v287
  %739 = vmatpush.msra.mxu0 %v286
  %740 = vmatpush.msra.mxu0 %v285
  %741 = vmatpush.msra.mxu0 %v284
  %742 = vmatpush.msra.mxu0 %v283
  %743 = vmatpush.msra.mxu0 %v282
  %744 = vmatpush.msra.mxu0 %v281
  %745 = vmatpush.msra.mxu0 %v280
  %746 = vmatpush.msra.mxu0 %v279
  %747 = vmatpush.msra.mxu0 %v278
  %748 = vmatpush.msra.mxu0 %v277
  %749 = vmatpush.msra.mxu0 %v276
  %750 = vmatpush.msra.mxu0 %v275
  %751 = vmatmul.f32.gmra.mxu0 %v40
  %v752 = vpop.f32.mrf.mxu0
  %v753 = vadd.f32 %v733, %v752
  %754 = vdwg.mxu0
  %755 = vmatpush.msra.mxu0 %v306
  %756 = vmatpush.msra.mxu0 %v305
  %757 = vmatpush.msra.mxu0 %v304
  %758 = vmatpush.msra.mxu0 %v303
  %759 = vmatpush.msra.mxu0 %v302
  %760 = vmatpush.msra.mxu0 %v301
  %761 = vmatpush.msra.mxu0 %v300
  %762 = vmatpush.msra.mxu0 %v299
  %763 = vmatpush.msra.mxu0 %v298
  %764 = vmatpush.msra.mxu0 %v297
  %765 = vmatpush.msra.mxu0 %v296
  %766 = vmatpush.msra.mxu0 %v295
  %767 = vmatpush.msra.mxu0 %v294
  %768 = vmatpush.msra.mxu0 %v293
  %769 = vmatpush.msra.mxu0 %v292
  %770 = vmatpush.msra.mxu0 %v291
  %771 = vmatmul.f32.gmra.mxu0 %v41
  %v772 = vpop.f32.mrf.mxu0
  %v773 = vadd.f32 %v753, %v772
  %774 = vdwg.mxu0
  %775 = vmatpush.msra.mxu0 %v322
  %776 = vmatpush.msra.mxu0 %v321
  %777 = vmatpush.msra.mxu0 %v320
  %778 = vmatpush.msra.mxu0 %v319
  %779 = vmatpush.msra.mxu0 %v318
  %780 = vmatpush.msra.mxu0 %v317
  %781 = vmatpush.msra.mxu0 %v316
  %782 = vmatpush.msra.mxu0 %v315
  %783 = vmatpush.msra.mxu0 %v314
  %784 = vmatpush.msra.mxu0 %v313
  %785 = vmatpush.msra.mxu0 %v312
  %786 = vmatpush.msra.mxu0 %v311
  %787 = vmatpush.msra.mxu0 %v310
  %788 = vmatpush.msra.mxu0 %v309
  %789 = vmatpush.msra.mxu0 %v308
  %790 = vmatpush.msra.mxu0 %v307
  %791 = vmatmul.f32.gmra.mxu0 %v42
  %v792 = vpop.f32.mrf.mxu0
  %v793 = vadd.f32 %v773, %v792
  %794 = vdwg.mxu0
  %795 = vmatpush.msra.mxu0 %v338
  %796 = vmatpush.msra.mxu0 %v337
  %797 = vmatpush.msra.mxu0 %v336
  %798 = vmatpush.msra.mxu0 %v335
  %799 = vmatpush.msra.mxu0 %v334
  %800 = vmatpush.msra.mxu0 %v333
  %801 = vmatpush.msra.mxu0 %v332
  %802 = vmatpush.msra.mxu0 %v331
  %803 = vmatpush.msra.mxu0 %v330
  %804 = vmatpush.msra.mxu0 %v329
  %805 = vmatpush.msra.mxu0 %v328
  %806 = vmatpush.msra.mxu0 %v327
  %807 = vmatpush.msra.mxu0 %v326
  %808 = vmatpush.msra.mxu0 %v325
  %809 = vmatpush.msra.mxu0 %v324
  %810 = vmatpush.msra.mxu0 %v323
  %811 = vmatmul.f32.gmra.mxu0 %v43
  %v812 = vpop.f32.mrf.mxu0
  %v813 = vadd.f32 %v793, %v812
  %814 = vdwg.mxu0
  %815 = vmatpush.msra.mxu0 %v354
  %816 = vmatpush.msra.mxu0 %v353
  %817 = vmatpush.msra.mxu0 %v352
  %818 = vmatpush.msra.mxu0 %v351
  %819 = vmatpush.msra.mxu0 %v350
  %820 = vmatpush.msra.mxu0 %v349
  %821 = vmatpush.msra.mxu0 %v348
  %822 = vmatpush.msra.mxu0 %v347
  %823 = vmatpush.msra.mxu0 %v346
  %824 = vmatpush.msra.mxu0 %v345
  %825 = vmatpush.msra.mxu0 %v344
  %826 = vmatpush.msra.mxu0 %v343
  %827 = vmatpush.msra.mxu0 %v342
  %828 = vmatpush.msra.mxu0 %v341
  %829 = vmatpush.msra.mxu0 %v340
  %830 = vmatpush.msra.mxu0 %v339
  %831 = vmatmul.f32.gmra.mxu0 %v44
  %v832 = vpop.f32.mrf.mxu0
  %v833 = vadd.f32 %v813, %v832
  %834 = vdwg.mxu0
  %835 = vmatpush.msra.mxu0 %v370
  %836 = vmatpush.msra.mxu0 %v369
  %837 = vmatpush.msra.mxu0 %v368
  %838 = vmatpush.msra.mxu0 %v367
  %839 = vmatpush.msra.mxu0 %v366
  %840 = vmatpush.msra.mxu0 %v365
  %841 = vmatpush.msra.mxu0 %v364
  %842 = vmatpush.msra.mxu0 %v363
  %843 = vmatpush.msra.mxu0 %v362
  %844 = vmatpush.msra.mxu0 %v361
  %845 = vmatpush.msra.mxu0 %v360
  %846 = vmatpush.msra.mxu0 %v359
  %847 = vmatpush.msra.mxu0 %v358
  %848 = vmatpush.msra.mxu0 %v357
  %849 = vmatpush.msra.mxu0 %v356
  %850 = vmatpush.msra.mxu0 %v355
  %851 = vmatmul.f32.gmra.mxu0 %v45
  %v852 = vpop.f32.mrf.mxu0
  %v853 = vadd.f32 %v833, %v852
  %854 = vdwg.mxu0
  %855 = vmatpush.msra.mxu0 %v386
  %856 = vmatpush.msra.mxu0 %v385
  %857 = vmatpush.msra.mxu0 %v384
  %858 = vmatpush.msra.mxu0 %v383
  %859 = vmatpush.msra.mxu0 %v382
  %860 = vmatpush.msra.mxu0 %v381
  %861 = vmatpush.msra.mxu0 %v380
  %862 = vmatpush.msra.mxu0 %v379
  %863 = vmatpush.msra.mxu0 %v378
  %864 = vmatpush.msra.mxu0 %v377
  %865 = vmatpush.msra.mxu0 %v376
  %866 = vmatpush.msra.mxu0 %v375
  %867 = vmatpush.msra.mxu0 %v374
  %868 = vmatpush.msra.mxu0 %v373
  %869 = vmatpush.msra.mxu0 %v372
  %870 = vmatpush.msra.mxu0 %v371
  %871 = vmatmul.f32.gmra.mxu0 %v46
  %v872 = vpop.f32.mrf.mxu0
  %v873 = vadd.f32 %v853, %v872
  %874 = vdwg.mxu0
  %875 = vmatpush.msra.mxu0 %v402
  %876 = vmatpush.msra.mxu0 %v401
  %877 = vmatpush.msra.mxu0 %v400
  %878 = vmatpush.msra.mxu0 %v399
  %879 = vmatpush.msra.mxu0 %v398
  %880 = vmatpush.msra.mxu0 %v397
  %881 = vmatpush.msra.mxu0 %v396
  %882 = vmatpush.msra.mxu0 %v395
  %883 = vmatpush.msra.mxu0 %v394
  %884 = vmatpush.msra.mxu0 %v393
  %885 = vmatpush.msra.mxu0 %v392
  %886 = vmatpush.msra.mxu0 %v391
  %887 = vmatpush.msra.mxu0 %v390
  %888 = vmatpush.msra.mxu0 %v389
  %889 = vmatpush.msra.mxu0 %v388
  %890 = vmatpush.msra.mxu0 %v387
  %891 = vmatmul.f32.gmra.mxu0 %v47
  %v892 = vpop.f32.mrf.mxu0
  %v893 = vadd.f32 %v873, %v892
  %894 = vdwg.mxu0
  %895 = vmatpush.msra.mxu0 %v418
  %896 = vmatpush.msra.mxu0 %v417
  %897 = vmatpush.msra.mxu0 %v416
  %898 = vmatpush.msra.mxu0 %v415
  %899 = vmatpush.msra.mxu0 %v414
  %900 = vmatpush.msra.mxu0 %v413
  %901 = vmatpush.msra.mxu0 %v412
  %902 = vmatpush.msra.mxu0 %v411
  %903 = vmatpush.msra.mxu0 %v410
  %904 = vmatpush.msra.mxu0 %v409
  %905 = vmatpush.msra.mxu0 %v408
  %906 = vmatpush.msra.mxu0 %v407
  %907 = vmatpush.msra.mxu0 %v406
  %908 = vmatpush.msra.mxu0 %v405
  %909 = vmatpush.msra.mxu0 %v404
  %910 = vmatpush.msra.mxu0 %v403
  %911 = vmatmul.f32.gmra.mxu0 %v48
  %v912 = vpop.f32.mrf.mxu0
  %v913 = vadd.f32 %v893, %v912
  %914 = vdwg.mxu0
  %915 = vmatpush.msra.mxu0 %v434
  %916 = vmatpush.msra.mxu0 %v433
  %917 = vmatpush.msra.mxu0 %v432
  %918 = vmatpush.msra.mxu0 %v431
  %919 = vmatpush.msra.mxu0 %v430
  %920 = vmatpush.msra.mxu0 %v429
  %921 = vmatpush.msra.mxu0 %v428
  %922 = vmatpush.msra.mxu0 %v427
  %923 = vmatpush.msra.mxu0 %v426
  %924 = vmatpush.msra.mxu0 %v425
  %925 = vmatpush.msra.mxu0 %v424
  %926 = vmatpush.msra.mxu0 %v423
  %927 = vmatpush.msra.mxu0 %v422
  %928 = vmatpush.msra.mxu0 %v421
  %929 = vmatpush.msra.mxu0 %v420
  %930 = vmatpush.msra.mxu0 %v419
  %931 = vmatmul.f32.gmra.mxu0 %v49
  %v932 = vpop.f32.mrf.mxu0
  %v933 = vadd.f32 %v913, %v932
  %934 = vdwg.mxu0
  %935 = vmatpush.msra.mxu0 %v450
  %936 = vmatpush.msra.mxu0 %v449
  %937 = vmatpush.msra.mxu0 %v448
  %938 = vmatpush.msra.mxu0 %v447
  %939 = vmatpush.msra.mxu0 %v446
  %940 = vmatpush.msra.mxu0 %v445
  %941 = vmatpush.msra.mxu0 %v444
  %942 = vmatpush.msra.mxu0 %v443
  %943 = vmatpush.msra.mxu0 %v442
  %944 = vmatpush.msra.mxu0 %v441
  %945 = vmatpush.msra.mxu0 %v440
  %946 = vmatpush.msra.mxu0 %v439
  %947 = vmatpush.msra.mxu0 %v438
  %948 = vmatpush.msra.mxu0 %v437
  %949 = vmatpush.msra.mxu0 %v436
  %950 = vmatpush.msra.mxu0 %v435
  %951 = vmatmul.f32.gmra.mxu0 %v50
  %v952 = vpop.f32.mrf.mxu0
  %v953 = vadd.f32 %v933, %v952
  %954 = vdwg.mxu0
  %v955 = vmax.f32 %v953, 0.0
  %v956 = vld [vmem:[%s3] sm:$0xff]
  %v957 = vld [vmem:[%s3 + $0x8] sm:$0xff]
  %v958 = vld [vmem:[%s3 + $0x10] sm:$0xff]
  %v959 = vld [vmem:[%s3 + $0x18] sm:$0xff]
  %v960 = vld [vmem:[%s3 + $0x20] sm:$0xff]
  %v961 = vld [vmem:[%s3 + $0x28] sm:$0xff]
  %v962 = vld [vmem:[%s3 + $0x30] sm:$0xff]
  %v963 = vld [vmem:[%s3 + $0x38] sm:$0xff]
  %v964 = vld [vmem:[%s3 + $0x40] sm:$0xff]
  %v965 = vld [vmem:[%s3 + $0x48] sm:$0xff]
  %v966 = vld [vmem:[%s3 + $0x50] sm:$0xff]
  %v967 = vld [vmem:[%s3 + $0x58] sm:$0xff]
  %v968 = vld [vmem:[%s3 + $0x60] sm:$0xff]
  %v969 = vld [vmem:[%s3 + $0x68] sm:$0xff]
  %v970 = vld [vmem:[%s3 + $0x70] sm:$0xff]
  %v971 = vld [vmem:[%s3 + $0x78] sm:$0xff]
  %v972 = vld [vmem:[%s4] sm:$0x1]
  %v974 = vperm.slane %v972, 0
  %976 = vmatpush.msra.mxu0 %v971
  %977 = vmatpush.msra.mxu0 %v970
  %978 = vmatpush.msra.mxu0 %v969
  %979 = vmatpush.msra.mxu0 %v968
  %980 = vmatpush.msra.mxu0 %v967
  %981 = vmatpush.msra.mxu0 %v966
  %982 = vmatpush.msra.mxu0 %v965
  %983 = vmatpush.msra.mxu0 %v964
  %984 = vmatpush.msra.mxu0 %v963
  %985 = vmatpush.msra.mxu0 %v962
  %986 = vmatpush.msra.mxu0 %v961
  %987 = vmatpush.msra.mxu0 %v960
  %988 = vmatpush.msra.mxu0 %v959
  %989 = vmatpush.msra.mxu0 %v958
  %990 = vmatpush.msra.mxu0 %v957
  %991 = vmatpush.msra.mxu0 %v956
  %992 = vmatmul.f32.gmra.mxu0 %v955
  %v993 = vpop.f32.mrf.mxu0
  %v994 = vadd.f32 %v974, %v993
  %995 = vdwg.mxu0
  %v996 = vmax.f32 %v994, 0.0
  %v997 = vld [vmem:[%s5] sm:$0xff]
  %v998 = vld [vmem:[%s5 + $0x8] sm:$0xff]
  %v999 = vld [vmem:[%s5 + $0x10] sm:$0xff]
  %v1000 = vld [vmem:[%s5 + $0x18] sm:$0xff]
  %v1001 = vld [vmem:[%s5 + $0x20] sm:$0xff]
  %v1002 = vld [vmem:[%s5 + $0x28] sm:$0xff]
  %v1003 = vld [vmem:[%s5 + $0x30] sm:$0xff]
  %v1004 = vld [vmem:[%s5 + $0x38] sm:$0xff]
  %v1005 = vld [vmem:[%s5 + $0x40] sm:$0xff]
  %v1006 = vld [vmem:[%s5 + $0x48] sm:$0xff]
  %v1007 = vld [vmem:[%s5 + $0x50] sm:$0xff]
  %v1008 = vld [vmem:[%s5 + $0x58] sm:$0xff]
  %v1009 = vld [vmem:[%s5 + $0x60] sm:$0xff]
  %v1010 = vld [vmem:[%s5 + $0x68] sm:$0xff]
  %v1011 = vld [vmem:[%s5 + $0x70] sm:$0xff]
  %v1012 = vld [vmem:[%s5 + $0x78] sm:$0xff]
  %v1013 = vld [vmem:[%s6] sm:$0x1]
  %v1015 = vperm.slane %v1013, 0
  %1017 = vmatpush.msra.mxu0 %v1012
  %1018 = vmatpush.msra.mxu0 %v1011
  %1019 = vmatpush.msra.mxu0 %v1010
  %1020 = vmatpush.msra.mxu0 %v1009
  %1021 = vmatpush.msra.mxu0 %v1008
  %1022 = vmatpush.msra.mxu0 %v1007
  %1023 = vmatpush.msra.mxu0 %v1006
  %1024 = vmatpush.msra.mxu0 %v1005
  %1025 = vmatpush.msra.mxu0 %v1004
  %1026 = vmatpush.msra.mxu0 %v1003
  %1027 = vmatpush.msra.mxu0 %v1002
  %1028 = vmatpush.msra.mxu0 %v1001
  %1029 = vmatpush.msra.mxu0 %v1000
  %1030 = vmatpush.msra.mxu0 %v999
  %1031 = vmatpush.msra.mxu0 %v998
  %1032 = vmatpush.msra.mxu0 %v997
  %1033 = vmatmul.f32.gmra.mxu0 %v996
  %v1034 = vpop.f32.mrf.mxu0
  %v1035 = vadd.f32 %v1015, %v1034
  %1036 = vdwg.mxu0
  %1037 = vst [vmem:[%s7] sm:$0xff] %v1035
  // Predicated region
  $region30: #{lenet_forward.5} parent=0 // pred_check
    _
  $region31: #{lenet_forward.5} parent=0 // pred_check_branch
    %1039 = sbr.rel (0) target = $region33
  $region32: #{lenet_forward.5} parent=0 // pred_region
    _
  $region33: #{lenet_forward.5} parent=0 // pred_fallthru
    _
  // Predicated region
  $region34: #{lenet_forward.5} parent=0 // pred_check
    _
  $region35: #{lenet_forward.5} parent=0 // pred_check_branch
    %1041 = sbr.rel (0) target = $region37
  $region36: #{lenet_forward.5} parent=0 // pred_region
    _
  $region37: #{lenet_forward.5} parent=0 // pred_fallthru
    _

</llo_original>
